<compile_context>
chip_gen: v7x
topology: tpu7x:2x2x1
jax: 0.10.0
libtpu: 0.0.40
codegen_flags: <defaults>
</compile_context>

<pallas_src>
import functools

import jax
import jax.numpy as jnp
from jax.experimental import pallas as pl
from jax.experimental.pallas import tpu as pltpu

LANE = 128  # channel dims padded once to a multiple of the 128-wide lane axis


def _round_up(x, m):
    return ((x + m - 1) // m) * m


# --------------------------------------------------------------------------
# Direct conv kernel (no im2col).  Grid = (batch, cout_tiles, row_tiles).
# Emits the output row band (bf16) plus per-image per-channel (sum, sumsq)
# accumulated across the row axis, so BN never needs a separate stats pass.
# --------------------------------------------------------------------------
def _conv_kernel(x_ref, w_ref, y_ref, st_ref, acc_ref, *, KH, KW, stride, TR, OW):
    # x_ref  : (s*s, Hq, Wq, Cin_p)  bf16 phase-split padded image (VMEM-resident
    #                                across the cout/row grid axes)
    # w_ref  : (KH, KW*Cin_p, TCO)   bf16 packed weights
    # y_ref  : (TR, OW, TCO)         bf16 output row band
    # st_ref : (2, TCO)              f32  (sum, sumsq) accumulated over row tiles
    # acc_ref: (TR*OW, TCO)          f32  scratch accumulator
    r = pl.program_id(2)
    row0 = r * TR
    cin_p = x_ref.shape[-1]
    tco = y_ref.shape[-1]

    for dy in range(KH):
        parts = []
        for dx in range(KW):
            q = (dy % stride) * stride + (dx % stride)      # phase
            oy, ox = dy // stride, dx // stride             # contiguous offsets
            sl = x_ref[q, pl.ds(row0 + oy, TR), ox:ox + OW, :]   # (TR, OW, Cin_p)
            parts.append(sl.reshape(TR * OW, cin_p))
        a = parts[0] if KW == 1 else jnp.concatenate(parts, axis=-1)
        contrib = jnp.dot(a, w_ref[dy], preferred_element_type=jnp.float32)
        if dy == 0:
            acc_ref[...] = contrib
        else:
            acc_ref[...] += contrib

    acc = acc_ref[...]
    y_ref[...] = acc.reshape(TR, OW, tco).astype(y_ref.dtype)
    ps = jnp.concatenate([jnp.sum(acc, axis=0, keepdims=True),
                          jnp.sum(acc * acc, axis=0, keepdims=True)], axis=0)

    @pl.when(r == 0)
    def _():
        st_ref[...] = ps

    @pl.when(r != 0)
    def _():
        st_ref[...] += ps


def _phase_split(xp, stride):
    """(N, Hp, Wp, C) -> (N, s*s, Hq, Wq, C): every conv tap (dy, dx) becomes a
    contiguous (OH, OW) slice of phase (dy%s, dx%s).  Free reshape for s == 1."""
    n, hp, wp, c = xp.shape
    if stride == 1:
        return xp.reshape(n, 1, hp, wp, c)
    hq = -(-hp // stride)
    wq = -(-wp // stride)
    xp = jnp.pad(xp, ((0, 0), (0, hq * stride - hp), (0, wq * stride - wp), (0, 0)))
    xp = xp.reshape(n, hq, stride, wq, stride, c)
    xp = jnp.transpose(xp, (0, 2, 4, 1, 3, 5))
    return xp.reshape(n, stride * stride, hq, wq, c)


def _pick_row_tile(oh):
    for t in range(min(oh, 16), 0, -1):
        if oh % t == 0:
            return t
    return oh


def conv2d_pallas(x, w_packed, *, kh, kw, stride, padding):
    """x: (N, H, W, Cin_p) bf16 NHWC (channels pre-padded to a LANE multiple).
    w_packed: (KH, KW*Cin_p, Cout_p) bf16 packed weights (no bias).
    Returns (y (N,OH,OW,Cout_p) bf16, stats (N,2,Cout_p) f32)."""
    if kh == 1 and kw == 1 and stride > 1:
        # 1x1 strided conv == 1x1 conv on the subsampled input (cheap slice).
        x = x[:, ::stride, ::stride, :]
        stride = 1
    n, h, wd, cin_p = x.shape
    cout_p = w_packed.shape[-1]

    oh = (h + 2 * padding - kh) // stride + 1
    ow = (wd + 2 * padding - kw) // stride + 1

    xp = x
    if padding > 0:
        # TODO(synk): fuse this 1-px halo pad into the producing epilogue kernel
        # (pre-padded output buffer) to save one activation-sized HBM round trip.
        xp = jnp.pad(x, ((0, 0), (padding, padding), (padding, padding), (0, 0)))
    xph = _phase_split(xp, stride)                    # (N, s*s, Hq, Wq, Cin_p)
    _, s2, hq, wq, _ = xph.shape

    tco = 256 if cout_p % 256 == 0 else LANE          # fill the 256-wide MXU when possible
    tr = _pick_row_tile(oh)
    grid = (n, cout_p // tco, oh // tr)

    flops = 2 * n * oh * ow * kh * kw * cin_p * cout_p
    bytes_acc = (xph.size * 2 + w_packed.size * 2
                 + n * oh * ow * cout_p * 2 + n * 2 * cout_p * 4)

    y, st = pl.pallas_call(
        functools.partial(_conv_kernel, KH=kh, KW=kw, stride=stride, TR=tr, OW=ow),
        out_shape=(jax.ShapeDtypeStruct((n, oh, ow, cout_p), jnp.bfloat16),
                   jax.ShapeDtypeStruct((n, 2, cout_p), jnp.float32)),
        grid=grid,
        in_specs=[
            pl.BlockSpec((None, s2, hq, wq, cin_p), lambda b, co, r: (b, 0, 0, 0, 0)),
            pl.BlockSpec((kh, kw * cin_p, tco), lambda b, co, r: (0, 0, co)),
        ],
        out_specs=(
            pl.BlockSpec((None, tr, ow, tco), lambda b, co, r: (b, r, 0, co)),
            pl.BlockSpec((None, 2, tco), lambda b, co, r: (b, 0, co)),
        ),
        scratch_shapes=[pltpu.VMEM((tr * ow, tco), jnp.float32)],
        compiler_params=pltpu.CompilerParams(
            dimension_semantics=("parallel", "parallel", "arbitrary")),
        cost_estimate=pl.CostEstimate(flops=int(flops), transcendentals=0,
                                      bytes_accessed=int(bytes_acc)),
    )(xph, w_packed)
    return y, st


# --------------------------------------------------------------------------
# BN scale/shift are precomputed once per conv from the tiny (N, 2, Cp) stats
# (variance clamped >= 0); the fused epilogue kernels only do y*scale+shift
# (+ residual) + ReLU over lane-dense (tm, Cp) row tiles and store bf16.
# --------------------------------------------------------------------------
def bn_scale_shift(stats, gamma, beta, count, eps=1e-5):
    tot = jnp.sum(stats, axis=0)                          # (2, Cp)
    mean = tot[0:1, :] * (1.0 / count)
    var = jnp.maximum(tot[1:2, :] * (1.0 / count) - mean * mean, 0.0)
    scale = gamma * jax.lax.rsqrt(var + eps)
    shift = beta - mean * scale
    return scale, shift                                   # (1, Cp) each, f32


def _bn_act_kernel(y_ref, s_ref, t_ref, o_ref, *, relu):
    out = y_ref[...].astype(jnp.float32) * s_ref[...] + t_ref[...]
    if relu:
        out = jnp.maximum(out, 0.0)
    o_ref[...] = out.astype(o_ref.dtype)


def _bn_add_id_kernel(y_ref, skip_ref, s_ref, t_ref, o_ref):
    out = (y_ref[...].astype(jnp.float32) * s_ref[...] + t_ref[...]
           + skip_ref[...].astype(jnp.float32))
    o_ref[...] = jnp.maximum(out, 0.0).astype(o_ref.dtype)


def _bn_add_conv_kernel(y_ref, yr_ref, s_ref, t_ref, sr_ref, tr_ref, o_ref):
    out = (y_ref[...].astype(jnp.float32) * s_ref[...] + t_ref[...]
           + yr_ref[...].astype(jnp.float32) * sr_ref[...] + tr_ref[...])
    o_ref[...] = jnp.maximum(out, 0.0).astype(o_ref.dtype)


def _row_tile(m):
    return m if m <= 1024 else 1024


def _epilogue(kernel, rows, vecs, shape4, **kw):
    n, oh, ow, cp = shape4
    m = n * oh * ow
    tm = _row_tile(m)
    row_spec = pl.BlockSpec((tm, cp), lambda i: (i, 0))
    vec_spec = pl.BlockSpec((1, cp), lambda i: (0, 0))
    out = pl.pallas_call(
        functools.partial(kernel, **kw),
        out_shape=jax.ShapeDtypeStruct((m, cp), jnp.bfloat16),
        grid=(pl.cdiv(m, tm),),
        in_specs=[row_spec] * len(rows) + [vec_spec] * len(vecs),
        out_specs=row_spec,
        compiler_params=pltpu.CompilerParams(dimension_semantics=("parallel",)),
    )(*[a.reshape(m, cp) for a in rows], *vecs)
    return out.reshape(n, oh, ow, cp)


def bn_act_pallas(y, scale, shift, *, relu):
    return _epilogue(_bn_act_kernel, [y], [scale, shift], y.shape, relu=relu)


def bn_add_relu_identity_pallas(y, scale, shift, skip):
    return _epilogue(_bn_add_id_kernel, [y, skip], [scale, shift], y.shape)


def bn_add_relu_conv_pallas(y, scale, shift, yr, scale_r, shift_r):
    return _epilogue(_bn_add_conv_kernel, [y, yr],
                     [scale, shift, scale_r, shift_r], y.shape)


# ------------------------- module parameters / forward ----------------------
def _conv_init(key, cout, cin, kh, kw):
    fan_in = cin * kh * kw
    return jax.random.normal(key, (cout, cin, kh, kw), jnp.float32) * jnp.sqrt(2.0 / fan_in)


def init_residual_block(key, in_feats, out_feats, first_stride):
    k1, k2, k3 = jax.random.split(key, 3)
    p = {
        'stride': first_stride,
        'conv1_w': _conv_init(k1, out_feats, in_feats, 3, 3),
        'bn1_g': jnp.ones((out_feats,), jnp.float32),
        'bn1_b': jnp.zeros((out_feats,), jnp.float32),
        'conv2_w': _conv_init(k2, out_feats, out_feats, 3, 3),
        'bn2_g': jnp.ones((out_feats,), jnp.float32),
        'bn2_b': jnp.zeros((out_feats,), jnp.float32),
    }
    if first_stride > 1:
        p['convr_w'] = _conv_init(k3, out_feats, in_feats, 1, 1)
        p['bnr_g'] = jnp.ones((out_feats,), jnp.float32)
        p['bnr_b'] = jnp.zeros((out_feats,), jnp.float32)
    return p


def init_block_group(key, n_blocks, in_feats, out_feats, first_stride):
    keys = jax.random.split(key, n_blocks)
    params = []
    for i, k in enumerate(keys):
        if i == 0:
            params.append(init_residual_block(k, in_feats, out_feats, first_stride))
        else:
            params.append(init_residual_block(k, out_feats, out_feats, 1))
    return params


# ---- parameter packing hoisted out of the forward path (done once) ---------
def _pack_conv_weight(w_oihw, cin_p, cout_p):
    cout, cin, kh, kw = w_oihw.shape
    wt = jnp.transpose(w_oihw, (2, 3, 1, 0))              # (KH, KW, Cin, Cout)
    wt = jnp.pad(wt, ((0, 0), (0, 0), (0, cin_p - cin), (0, cout_p - cout)))
    return wt.reshape(kh, kw * cin_p, cout_p).astype(jnp.bfloat16)


def _pad_vec(v, cp):
    return jnp.pad(v, (0, cp - v.shape[0])).reshape(1, cp)


def pack_block_params(p):
    cout, cin = p['conv1_w'].shape[0], p['conv1_w'].shape[1]
    cin_p, cout_p = _round_up(cin, LANE), _round_up(cout, LANE)
    q = {
        'stride': p['stride'],
        'cout': cout,
        'conv1_w': _pack_conv_weight(p['conv1_w'], cin_p, cout_p),
        'bn1_g': _pad_vec(p['bn1_g'], cout_p),
        'bn1_b': _pad_vec(p['bn1_b'], cout_p),
        'conv2_w': _pack_conv_weight(p['conv2_w'], cout_p, cout_p),
        'bn2_g': _pad_vec(p['bn2_g'], cout_p),
        'bn2_b': _pad_vec(p['bn2_b'], cout_p),
    }
    if p['stride'] > 1:
        q['convr_w'] = _pack_conv_weight(p['convr_w'], cin_p, cout_p)
        q['bnr_g'] = _pad_vec(p['bnr_g'], cout_p)
        q['bnr_b'] = _pad_vec(p['bnr_b'], cout_p)
    return q


def pack_block_group_params(params):
    return [pack_block_params(p) for p in params]


def residual_block_forward(x, p):
    """x: (N, H, W, Cp) bf16, channels padded to a LANE multiple."""
    s = p['stride']
    y1, st1 = conv2d_pallas(x, p['conv1_w'], kh=3, kw=3, stride=s, padding=1)
    n, oh, ow, _ = y1.shape
    cnt = float(n * oh * ow)
    s1, t1 = bn_scale_shift(st1, p['bn1_g'], p['bn1_b'], cnt)
    a1 = bn_act_pallas(y1, s1, t1, relu=True)

    y2, st2 = conv2d_pallas(a1, p['conv2_w'], kh=3, kw=3, stride=1, padding=1)
    s2, t2 = bn_scale_shift(st2, p['bn2_g'], p['bn2_b'], cnt)
    if s == 1:
        return bn_add_relu_identity_pallas(y2, s2, t2, x)

    yr, str_ = conv2d_pallas(x, p['convr_w'], kh=1, kw=1, stride=s, padding=0)
    sr, tr = bn_scale_shift(str_, p['bnr_g'], p['bnr_b'], cnt)
    return bn_add_relu_conv_pallas(y2, s2, t2, yr, sr, tr)


def block_group_forward(x_nchw, packed_params):
    """BlockGroup.forward: (N, C_in, H, W) f32 -> (N, C_out, H/stride, W/stride) f32."""
    n, cin, h, w = x_nchw.shape
    cout = packed_params[0]['cout']
    cin_p = _round_up(cin, LANE)
    x = jnp.transpose(x_nchw, (0, 2, 3, 1))                        # NCHW -> NHWC
    x = jnp.pad(x, ((0, 0), (0, 0), (0, 0), (0, cin_p - cin))).astype(jnp.bfloat16)
    for p in packed_params:
        x = residual_block_forward(x, p)
    x = x[:, :, :, :cout].astype(jnp.float32)
    return jnp.transpose(x, (0, 3, 1, 2))                          # NHWC -> NCHW


# -------------------------- pure-JAX reference -------------------------------
# Precision-matched reference: convs take bf16 operands with f32 accumulation,
# conv outputs and block outputs are rounded through bf16, like the kernel path.
def _ref_conv(x_nchw, w, stride, padding):
    y = jax.lax.conv_general_dilated(
        x_nchw.astype(jnp.bfloat16), w.astype(jnp.bfloat16),
        window_strides=(stride, stride),
        padding=((padding, padding), (padding, padding)),
        dimension_numbers=('NCHW', 'OIHW', 'NCHW'),
        preferred_element_type=jnp.float32)
    return y.astype(jnp.bfloat16).astype(jnp.float32)     # kernel stores y as bf16


def _ref_bn(x, g, b, eps=1e-5, relu=False):
    mean = jnp.mean(x, axis=(0, 2, 3), keepdims=True)
    var = jnp.mean((x - mean) ** 2, axis=(0, 2, 3), keepdims=True)
    y = (x - mean) / jnp.sqrt(var + eps)
    y = y * g[None, :, None, None] + b[None, :, None, None]
    return jnp.maximum(y, 0.0) if relu else y


def _ref_block(x, p):
    s = p['stride']
    l = _ref_conv(x, p['conv1_w'], s, 1)
    l = _ref_bn(l, p['bn1_g'], p['bn1_b'], relu=True)
    l = l.astype(jnp.bfloat16).astype(jnp.float32)         # activations stored bf16
    l = _ref_conv(l, p['conv2_w'], 1, 1)
    l = _ref_bn(l, p['bn2_g'], p['bn2_b'])
    if s == 1:
        r = x
    else:
        r = _ref_conv(x, p['convr_w'], s, 0)
        r = _ref_bn(r, p['bnr_g'], p['bnr_b'])
    out = jnp.maximum(l + r, 0.0)
    return out.astype(jnp.bfloat16).astype(jnp.float32)    # match bf16 block output


def _ref_block_group(x, params):
    for p in params:
        x = _ref_block(x, p)
    return x


# --------------------------------- main --------------------------------------
if __name__ == "__main__":
    key = jax.random.PRNGKey(0)
    kx, kp = jax.random.split(key)

    # BlockGroup(n_blocks=2, in_feats=4, out_feats=8, first_stride=2)
    x = jax.random.normal(kx, (2, 4, 16, 16), jnp.float32)          # NCHW like PyTorch
    params = init_block_group(kp, n_blocks=2, in_feats=4, out_feats=8,
                              first_stride=2)
    packed = pack_block_group_params(params)                        # hoisted packing

    fwd = jax.jit(lambda inp: block_group_forward(inp, packed))
    out = jax.block_until_ready(fwd(x))
    assert out.shape == (2, 8, 8, 8), out.shape

    ref = _ref_block_group(x, params)
    max_err = float(jnp.max(jnp.abs(out - ref)))
    # bf16 MXU operands + bf16 activation/intermediate storage -> bf16-scale tol.
    assert max_err < 5e-2, f"mismatch vs reference: {max_err}"

    print("KERNEL_OK")
</pallas_src>

<mosaic_0001>
module attributes {stable_mosaic.version = 11 : i64} {
  func.func @_conv_kernel(%arg0: i32, %arg1: i32, %arg2: i32, %arg3: memref<1x1x8x8x128xbf16, #tpu.memory_space<vmem>>, %arg4: memref<1x128x128xbf16, #tpu.memory_space<vmem>>, %arg5: memref<1x8x8x128xbf16, #tpu.memory_space<vmem>>, %arg6: memref<1x2x128xf32, #tpu.memory_space<vmem>>, %arg7: memref<64x128xf32, #tpu.memory_space<vmem>>) attributes {dimension_semantics = [#tpu.dimension_semantics<parallel>, #tpu.dimension_semantics<parallel>, #tpu.dimension_semantics<arbitrary>], iteration_bounds = array<i64: 2, 1, 1>, scalar_prefetch = 0 : i64, scratch_operands = 1 : i64, tpu.core_type = #tpu.core_type<tc>, window_params = [{transform_indices = @transform_0, window_bounds = array<i64: 1, 1, 8, 8, 128>}, {transform_indices = @transform_1, window_bounds = array<i64: 1, 128, 128>}, {transform_indices = @transform_2, window_bounds = array<i64: 1, 8, 8, 128>}, {transform_indices = @transform_3, window_bounds = array<i64: 1, 2, 128>}]} {
    %c8_i32 = arith.constant 8 : i32
    %0 = arith.muli %arg2, %c8_i32 : i32
    %c0_i32 = arith.constant 0 : i32
    %1 = arith.addi %0, %c0_i32 : i32
    %c0 = arith.constant 0 : index
    %c0_0 = arith.constant 0 : index
    %2 = arith.index_cast %1 : i32 to index
    %c0_1 = arith.constant 0 : index
    %c0_2 = arith.constant 0 : index
    %3 = vector.load %arg3[%c0, %c0_0, %2, %c0_1, %c0_2] : memref<1x1x8x8x128xbf16, #tpu.memory_space<vmem>>, vector<1x1x8x8x128xbf16>
    %4 = vector.shape_cast %3 : vector<1x1x8x8x128xbf16> to vector<8x8x128xbf16>
    %5 = vector.shape_cast %4 : vector<8x8x128xbf16> to vector<64x128xbf16>
    %c0_3 = arith.constant 0 : index
    %c0_4 = arith.constant 0 : index
    %c0_5 = arith.constant 0 : index
    %6 = vector.load %arg4[%c0_3, %c0_4, %c0_5] : memref<1x128x128xbf16, #tpu.memory_space<vmem>>, vector<1x128x128xbf16>
    %7 = vector.shape_cast %6 : vector<1x128x128xbf16> to vector<128x128xbf16>
    %cst = arith.constant dense<0.000000e+00> : vector<64x128xf32>
    %8 = tpu.matmul %5, %7, %cst {dimension_numbers = #tpu.dot_dimension_numbers<[1], [0], [0], [1], [0, 0, 1, 1], [], []>} : vector<64x128xbf16>, vector<128x128xbf16>, vector<64x128xf32> -> vector<64x128xf32>
    %c0_6 = arith.constant 0 : index
    %c0_7 = arith.constant 0 : index
    %9 = vector.load %arg7[%c0_6, %c0_7] : memref<64x128xf32, #tpu.memory_space<vmem>>, vector<64x128xf32>
    tpu.vector_store %arg7[%c0_6, %c0_7], %8 {strides = array<i32>} : memref<64x128xf32, #tpu.memory_space<vmem>>, vector<64x128xf32>,
    %c0_8 = arith.constant 0 : index
    %c0_9 = arith.constant 0 : index
    %10 = vector.load %arg7[%c0_8, %c0_9] : memref<64x128xf32, #tpu.memory_space<vmem>>, vector<64x128xf32>
    %11 = vector.shape_cast %10 : vector<64x128xf32> to vector<8x8x128xf32>
    %12 = arith.truncf %11 : vector<8x8x128xf32> to vector<8x8x128xbf16>
    %c0_10 = arith.constant 0 : index
    %c0_11 = arith.constant 0 : index
    %c0_12 = arith.constant 0 : index
    %c0_13 = arith.constant 0 : index
    %13 = vector.load %arg5[%c0_10, %c0_11, %c0_12, %c0_13] : memref<1x8x8x128xbf16, #tpu.memory_space<vmem>>, vector<1x8x8x128xbf16>
    %14 = vector.shape_cast %13 : vector<1x8x8x128xbf16> to vector<8x8x128xbf16>
    %15 = vector.shape_cast %12 : vector<8x8x128xbf16> to vector<1x8x8x128xbf16>
    tpu.vector_store %arg5[%c0_10, %c0_11, %c0_12, %c0_13], %15 {strides = array<i32>} : memref<1x8x8x128xbf16, #tpu.memory_space<vmem>>, vector<1x8x8x128xbf16>,
    %cst_14 = arith.constant dense<0.000000e+00> : vector<128xf32>
    %16 = vector.multi_reduction <add>, %10, %cst_14 [0] : vector<64x128xf32> to vector<128xf32>
    %17 = vector.shape_cast %16 : vector<128xf32> to vector<1x128xf32>
    %18 = arith.mulf %10, %10 : vector<64x128xf32>
    %cst_15 = arith.constant dense<0.000000e+00> : vector<128xf32>
    %19 = vector.multi_reduction <add>, %18, %cst_15 [0] : vector<64x128xf32> to vector<128xf32>
    %20 = vector.shape_cast %19 : vector<128xf32> to vector<1x128xf32>
    %21 = tpu.concatenate %17, %20 in 0 : vector<1x128xf32>, vector<1x128xf32> -> vector<2x128xf32>
    %c0_i32_16 = arith.constant 0 : i32
    %22 = arith.cmpi eq, %arg2, %c0_i32_16 : i32
    %23 = arith.extui %22 : i1 to i32
    %c0_i32_17 = arith.constant 0 : i32
    %24 = arith.cmpi ne, %23, %c0_i32_17 : i32
    scf.if %24 {
      %c0_20 = arith.constant 0 : index
      %c0_21 = arith.constant 0 : index
      %c0_22 = arith.constant 0 : index
      %28 = vector.load %arg6[%c0_20, %c0_21, %c0_22] : memref<1x2x128xf32, #tpu.memory_space<vmem>>, vector<1x2x128xf32>
      %29 = vector.shape_cast %28 : vector<1x2x128xf32> to vector<2x128xf32>
      %30 = vector.shape_cast %21 : vector<2x128xf32> to vector<1x2x128xf32>
      tpu.vector_store %arg6[%c0_20, %c0_21, %c0_22], %30 {strides = array<i32>} : memref<1x2x128xf32, #tpu.memory_space<vmem>>, vector<1x2x128xf32>,
    } else {
    }
    %c0_i32_18 = arith.constant 0 : i32
    %25 = arith.cmpi ne, %arg2, %c0_i32_18 : i32
    %26 = arith.extui %25 : i1 to i32
    %c0_i32_19 = arith.constant 0 : i32
    %27 = arith.cmpi ne, %26, %c0_i32_19 : i32
    scf.if %27 {
      %c0_20 = arith.constant 0 : index
      %c0_21 = arith.constant 0 : index
      %c0_22 = arith.constant 0 : index
      %28 = vector.load %arg6[%c0_20, %c0_21, %c0_22] : memref<1x2x128xf32, #tpu.memory_space<vmem>>, vector<1x2x128xf32>
      %29 = vector.shape_cast %28 : vector<1x2x128xf32> to vector<2x128xf32>
      %30 = arith.addf %29, %21 : vector<2x128xf32>
      %c0_23 = arith.constant 0 : index
      %c0_24 = arith.constant 0 : index
      %c0_25 = arith.constant 0 : index
      %31 = vector.load %arg6[%c0_23, %c0_24, %c0_25] : memref<1x2x128xf32, #tpu.memory_space<vmem>>, vector<1x2x128xf32>
      %32 = vector.shape_cast %31 : vector<1x2x128xf32> to vector<2x128xf32>
      %33 = vector.shape_cast %30 : vector<2x128xf32> to vector<1x2x128xf32>
      tpu.vector_store %arg6[%c0_23, %c0_24, %c0_25], %33 {strides = array<i32>} : memref<1x2x128xf32, #tpu.memory_space<vmem>>, vector<1x2x128xf32>,
    } else {
    }
    return
  }
  func.func @transform_0(%arg0: i32, %arg1: i32, %arg2: i32) -> (i32, i32, i32, i32, i32) {
    %c0_i32 = arith.constant 0 : i32
    %c0_i32_0 = arith.constant 0 : i32
    %c0_i32_1 = arith.constant 0 : i32
    %c0_i32_2 = arith.constant 0 : i32
    %c0_i32_3 = arith.constant 0 : i32
    return %arg0, %c0_i32, %c0_i32_0, %c0_i32_1, %c0_i32_2 : i32, i32, i32, i32, i32
  }
  func.func @transform_1(%arg0: i32, %arg1: i32, %arg2: i32) -> (i32, i32, i32) {
    %c0_i32 = arith.constant 0 : i32
    %c0_i32_0 = arith.constant 0 : i32
    %c0_i32_1 = arith.constant 0 : i32
    return %c0_i32, %c0_i32_0, %arg1 : i32, i32, i32
  }
  func.func @transform_2(%arg0: i32, %arg1: i32, %arg2: i32) -> (i32, i32, i32, i32) {
    %c0_i32 = arith.constant 0 : i32
    %c0_i32_0 = arith.constant 0 : i32
    return %arg0, %arg2, %c0_i32, %arg1 : i32, i32, i32, i32
  }
  func.func @transform_3(%arg0: i32, %arg1: i32, %arg2: i32) -> (i32, i32, i32) {
    %c0_i32 = arith.constant 0 : i32
    %c0_i32_0 = arith.constant 0 : i32
    return %arg0, %c0_i32, %arg1 : i32, i32, i32
  }
}

module attributes {stable_mosaic.version = 11 : i64} {
  func.func @_conv_kernel(%arg0: i32, %arg1: i32, %arg2: i32, %arg3: memref<1x4x9x9x128xbf16, #tpu.memory_space<vmem>>, %arg4: memref<3x384x128xbf16, #tpu.memory_space<vmem>>, %arg5: memref<1x8x8x128xbf16, #tpu.memory_space<vmem>>, %arg6: memref<1x2x128xf32, #tpu.memory_space<vmem>>, %arg7: memref<64x128xf32, #tpu.memory_space<vmem>>) attributes {dimension_semantics = [#tpu.dimension_semantics<parallel>, #tpu.dimension_semantics<parallel>, #tpu.dimension_semantics<arbitrary>], iteration_bounds = array<i64: 2, 1, 1>, scalar_prefetch = 0 : i64, scratch_operands = 1 : i64, tpu.core_type = #tpu.core_type<tc>, window_params = [{transform_indices = @transform_0, window_bounds = array<i64: 1, 4, 9, 9, 128>}, {transform_indices = @transform_1, window_bounds = array<i64: 3, 384, 128>}, {transform_indices = @transform_2, window_bounds = array<i64: 1, 8, 8, 128>}, {transform_indices = @transform_3, window_bounds = array<i64: 1, 2, 128>}]} {
    %c8_i32 = arith.constant 8 : i32
    %0 = arith.muli %arg2, %c8_i32 : i32
    %c0_i32 = arith.constant 0 : i32
    %1 = arith.addi %0, %c0_i32 : i32
    %c0 = arith.constant 0 : index
    %c0_0 = arith.constant 0 : index
    %2 = arith.index_cast %1 : i32 to index
    %c0_1 = arith.constant 0 : index
    %c0_2 = arith.constant 0 : index
    %3 = vector.load %arg3[%c0, %c0_0, %2, %c0_1, %c0_2] : memref<1x4x9x9x128xbf16, #tpu.memory_space<vmem>>, vector<1x1x8x8x128xbf16>
    %4 = vector.shape_cast %3 : vector<1x1x8x8x128xbf16> to vector<8x8x128xbf16>
    %5 = vector.shape_cast %4 : vector<8x8x128xbf16> to vector<64x128xbf16>
    %c0_i32_3 = arith.constant 0 : i32
    %6 = arith.addi %0, %c0_i32_3 : i32
    %c0_4 = arith.constant 0 : index
    %c1 = arith.constant 1 : index
    %7 = arith.index_cast %6 : i32 to index
    %c0_5 = arith.constant 0 : index
    %c0_6 = arith.constant 0 : index
    %8 = vector.load %arg3[%c0_4, %c1, %7, %c0_5, %c0_6] : memref<1x4x9x9x128xbf16, #tpu.memory_space<vmem>>, vector<1x1x8x8x128xbf16>
    %9 = vector.shape_cast %8 : vector<1x1x8x8x128xbf16> to vector<8x8x128xbf16>
    %10 = vector.shape_cast %9 : vector<8x8x128xbf16> to vector<64x128xbf16>
    %c0_i32_7 = arith.constant 0 : i32
    %11 = arith.addi %0, %c0_i32_7 : i32
    %c0_8 = arith.constant 0 : index
    %c0_9 = arith.constant 0 : index
    %12 = arith.index_cast %11 : i32 to index
    %c1_10 = arith.constant 1 : index
    %c0_11 = arith.constant 0 : index
    %13 = vector.load %arg3[%c0_8, %c0_9, %12, %c1_10, %c0_11] : memref<1x4x9x9x128xbf16, #tpu.memory_space<vmem>>, vector<1x1x8x8x128xbf16>
    %14 = vector.shape_cast %13 : vector<1x1x8x8x128xbf16> to vector<8x8x128xbf16>
    %15 = vector.shape_cast %14 : vector<8x8x128xbf16> to vector<64x128xbf16>
    %16 = tpu.concatenate %5, %10, %15 in 1 : vector<64x128xbf16>, vector<64x128xbf16>, vector<64x128xbf16> -> vector<64x384xbf16>
    %c0_12 = arith.constant 0 : index
    %c0_13 = arith.constant 0 : index
    %c0_14 = arith.constant 0 : index
    %17 = vector.load %arg4[%c0_12, %c0_13, %c0_14] : memref<3x384x128xbf16, #tpu.memory_space<vmem>>, vector<1x384x128xbf16>
    %18 = vector.shape_cast %17 : vector<1x384x128xbf16> to vector<384x128xbf16>
    %cst = arith.constant dense<0.000000e+00> : vector<64x128xf32>
    %19 = tpu.matmul %16, %18, %cst {dimension_numbers = #tpu.dot_dimension_numbers<[1], [0], [0], [1], [0, 0, 1, 1], [], []>} : vector<64x384xbf16>, vector<384x128xbf16>, vector<64x128xf32> -> vector<64x128xf32>
    %c0_15 = arith.constant 0 : index
    %c0_16 = arith.constant 0 : index
    %20 = vector.load %arg7[%c0_15, %c0_16] : memref<64x128xf32, #tpu.memory_space<vmem>>, vector<64x128xf32>
    tpu.vector_store %arg7[%c0_15, %c0_16], %19 {strides = array<i32>} : memref<64x128xf32, #tpu.memory_space<vmem>>, vector<64x128xf32>,
    %c0_i32_17 = arith.constant 0 : i32
    %21 = arith.addi %0, %c0_i32_17 : i32
    %c0_18 = arith.constant 0 : index
    %c2 = arith.constant 2 : index
    %22 = arith.index_cast %21 : i32 to index
    %c0_19 = arith.constant 0 : index
    %c0_20 = arith.constant 0 : index
    %23 = vector.load %arg3[%c0_18, %c2, %22, %c0_19, %c0_20] : memref<1x4x9x9x128xbf16, #tpu.memory_space<vmem>>, vector<1x1x8x8x128xbf16>
    %24 = vector.shape_cast %23 : vector<1x1x8x8x128xbf16> to vector<8x8x128xbf16>
    %25 = vector.shape_cast %24 : vector<8x8x128xbf16> to vector<64x128xbf16>
    %c0_i32_21 = arith.constant 0 : i32
    %26 = arith.addi %0, %c0_i32_21 : i32
    %c0_22 = arith.constant 0 : index
    %c3 = arith.constant 3 : index
    %27 = arith.index_cast %26 : i32 to index
    %c0_23 = arith.constant 0 : index
    %c0_24 = arith.constant 0 : index
    %28 = vector.load %arg3[%c0_22, %c3, %27, %c0_23, %c0_24] : memref<1x4x9x9x128xbf16, #tpu.memory_space<vmem>>, vector<1x1x8x8x128xbf16>
    %29 = vector.shape_cast %28 : vector<1x1x8x8x128xbf16> to vector<8x8x128xbf16>
    %30 = vector.shape_cast %29 : vector<8x8x128xbf16> to vector<64x128xbf16>
    %c0_i32_25 = arith.constant 0 : i32
    %31 = arith.addi %0, %c0_i32_25 : i32
    %c0_26 = arith.constant 0 : index
    %c2_27 = arith.constant 2 : index
    %32 = arith.index_cast %31 : i32 to index
    %c1_28 = arith.constant 1 : index
    %c0_29 = arith.constant 0 : index
    %33 = vector.load %arg3[%c0_26, %c2_27, %32, %c1_28, %c0_29] : memref<1x4x9x9x128xbf16, #tpu.memory_space<vmem>>, vector<1x1x8x8x128xbf16>
    %34 = vector.shape_cast %33 : vector<1x1x8x8x128xbf16> to vector<8x8x128xbf16>
    %35 = vector.shape_cast %34 : vector<8x8x128xbf16> to vector<64x128xbf16>
    %36 = tpu.concatenate %25, %30, %35 in 1 : vector<64x128xbf16>, vector<64x128xbf16>, vector<64x128xbf16> -> vector<64x384xbf16>
    %c1_30 = arith.constant 1 : index
    %c0_31 = arith.constant 0 : index
    %c0_32 = arith.constant 0 : index
    %37 = vector.load %arg4[%c1_30, %c0_31, %c0_32] : memref<3x384x128xbf16, #tpu.memory_space<vmem>>, vector<1x384x128xbf16>
    %38 = vector.shape_cast %37 : vector<1x384x128xbf16> to vector<384x128xbf16>
    %cst_33 = arith.constant dense<0.000000e+00> : vector<64x128xf32>
    %39 = tpu.matmul %36, %38, %cst_33 {dimension_numbers = #tpu.dot_dimension_numbers<[1], [0], [0], [1], [0, 0, 1, 1], [], []>} : vector<64x384xbf16>, vector<384x128xbf16>, vector<64x128xf32> -> vector<64x128xf32>
    %c0_34 = arith.constant 0 : index
    %c0_35 = arith.constant 0 : index
    %40 = vector.load %arg7[%c0_34, %c0_35] : memref<64x128xf32, #tpu.memory_space<vmem>>, vector<64x128xf32>
    %41 = arith.addf %40, %39 : vector<64x128xf32>
    %c0_36 = arith.constant 0 : index
    %c0_37 = arith.constant 0 : index
    %42 = vector.load %arg7[%c0_36, %c0_37] : memref<64x128xf32, #tpu.memory_space<vmem>>, vector<64x128xf32>
    tpu.vector_store %arg7[%c0_36, %c0_37], %41 {strides = array<i32>} : memref<64x128xf32, #tpu.memory_space<vmem>>, vector<64x128xf32>,
    %c1_i32 = arith.constant 1 : i32
    %43 = arith.addi %0, %c1_i32 : i32
    %c0_38 = arith.constant 0 : index
    %c0_39 = arith.constant 0 : index
    %44 = arith.index_cast %43 : i32 to index
    %c0_40 = arith.constant 0 : index
    %c0_41 = arith.constant 0 : index
    %45 = vector.load %arg3[%c0_38, %c0_39, %44, %c0_40, %c0_41] : memref<1x4x9x9x128xbf16, #tpu.memory_space<vmem>>, vector<1x1x8x8x128xbf16>
    %46 = vector.shape_cast %45 : vector<1x1x8x8x128xbf16> to vector<8x8x128xbf16>
    %47 = vector.shape_cast %46 : vector<8x8x128xbf16> to vector<64x128xbf16>
    %c1_i32_42 = arith.constant 1 : i32
    %48 = arith.addi %0, %c1_i32_42 : i32
    %c0_43 = arith.constant 0 : index
    %c1_44 = arith.constant 1 : index
    %49 = arith.index_cast %48 : i32 to index
    %c0_45 = arith.constant 0 : index
    %c0_46 = arith.constant 0 : index
    %50 = vector.load %arg3[%c0_43, %c1_44, %49, %c0_45, %c0_46] : memref<1x4x9x9x128xbf16, #tpu.memory_space<vmem>>, vector<1x1x8x8x128xbf16>
    %51 = vector.shape_cast %50 : vector<1x1x8x8x128xbf16> to vector<8x8x128xbf16>
    %52 = vector.shape_cast %51 : vector<8x8x128xbf16> to vector<64x128xbf16>
    %c1_i32_47 = arith.constant 1 : i32
    %53 = arith.addi %0, %c1_i32_47 : i32
    %c0_48 = arith.constant 0 : index
    %c0_49 = arith.constant 0 : index
    %54 = arith.index_cast %53 : i32 to index
    %c1_50 = arith.constant 1 : index
    %c0_51 = arith.constant 0 : index
    %55 = vector.load %arg3[%c0_48, %c0_49, %54, %c1_50, %c0_51] : memref<1x4x9x9x128xbf16, #tpu.memory_space<vmem>>, vector<1x1x8x8x128xbf16>
    %56 = vector.shape_cast %55 : vector<1x1x8x8x128xbf16> to vector<8x8x128xbf16>
    %57 = vector.shape_cast %56 : vector<8x8x128xbf16> to vector<64x128xbf16>
    %58 = tpu.concatenate %47, %52, %57 in 1 : vector<64x128xbf16>, vector<64x128xbf16>, vector<64x128xbf16> -> vector<64x384xbf16>
    %c2_52 = arith.constant 2 : index
    %c0_53 = arith.constant 0 : index
    %c0_54 = arith.constant 0 : index
    %59 = vector.load %arg4[%c2_52, %c0_53, %c0_54] : memref<3x384x128xbf16, #tpu.memory_space<vmem>>, vector<1x384x128xbf16>
    %60 = vector.shape_cast %59 : vector<1x384x128xbf16> to vector<384x128xbf16>
    %cst_55 = arith.constant dense<0.000000e+00> : vector<64x128xf32>
    %61 = tpu.matmul %58, %60, %cst_55 {dimension_numbers = #tpu.dot_dimension_numbers<[1], [0], [0], [1], [0, 0, 1, 1], [], []>} : vector<64x384xbf16>, vector<384x128xbf16>, vector<64x128xf32> -> vector<64x128xf32>
    %c0_56 = arith.constant 0 : index
    %c0_57 = arith.constant 0 : index
    %62 = vector.load %arg7[%c0_56, %c0_57] : memref<64x128xf32, #tpu.memory_space<vmem>>, vector<64x128xf32>
    %63 = arith.addf %62, %61 : vector<64x128xf32>
    %c0_58 = arith.constant 0 : index
    %c0_59 = arith.constant 0 : index
    %64 = vector.load %arg7[%c0_58, %c0_59] : memref<64x128xf32, #tpu.memory_space<vmem>>, vector<64x128xf32>
    tpu.vector_store %arg7[%c0_58, %c0_59], %63 {strides = array<i32>} : memref<64x128xf32, #tpu.memory_space<vmem>>, vector<64x128xf32>,
    %c0_60 = arith.constant 0 : index
    %c0_61 = arith.constant 0 : index
    %65 = vector.load %arg7[%c0_60, %c0_61] : memref<64x128xf32, #tpu.memory_space<vmem>>, vector<64x128xf32>
    %66 = vector.shape_cast %65 : vector<64x128xf32> to vector<8x8x128xf32>
    %67 = arith.truncf %66 : vector<8x8x128xf32> to vector<8x8x128xbf16>
    %c0_62 = arith.constant 0 : index
    %c0_63 = arith.constant 0 : index
    %c0_64 = arith.constant 0 : index
    %c0_65 = arith.constant 0 : index
    %68 = vector.load %arg5[%c0_62, %c0_63, %c0_64, %c0_65] : memref<1x8x8x128xbf16, #tpu.memory_space<vmem>>, vector<1x8x8x128xbf16>
    %69 = vector.shape_cast %68 : vector<1x8x8x128xbf16> to vector<8x8x128xbf16>
    %70 = vector.shape_cast %67 : vector<8x8x128xbf16> to vector<1x8x8x128xbf16>
    tpu.vector_store %arg5[%c0_62, %c0_63, %c0_64, %c0_65], %70 {strides = array<i32>} : memref<1x8x8x128xbf16, #tpu.memory_space<vmem>>, vector<1x8x8x128xbf16>,
    %cst_66 = arith.constant dense<0.000000e+00> : vector<128xf32>
    %71 = vector.multi_reduction <add>, %65, %cst_66 [0] : vector<64x128xf32> to vector<128xf32>
    %72 = vector.shape_cast %71 : vector<128xf32> to vector<1x128xf32>
    %73 = arith.mulf %65, %65 : vector<64x128xf32>
    %cst_67 = arith.constant dense<0.000000e+00> : vector<128xf32>
    %74 = vector.multi_reduction <add>, %73, %cst_67 [0] : vector<64x128xf32> to vector<128xf32>
    %75 = vector.shape_cast %74 : vector<128xf32> to vector<1x128xf32>
    %76 = tpu.concatenate %72, %75 in 0 : vector<1x128xf32>, vector<1x128xf32> -> vector<2x128xf32>
    %c0_i32_68 = arith.constant 0 : i32
    %77 = arith.cmpi eq, %arg2, %c0_i32_68 : i32
    %78 = arith.extui %77 : i1 to i32
    %c0_i32_69 = arith.constant 0 : i32
    %79 = arith.cmpi ne, %78, %c0_i32_69 : i32
    scf.if %79 {
      %c0_72 = arith.constant 0 : index
      %c0_73 = arith.constant 0 : index
      %c0_74 = arith.constant 0 : index
      %83 = vector.load %arg6[%c0_72, %c0_73, %c0_74] : memref<1x2x128xf32, #tpu.memory_space<vmem>>, vector<1x2x128xf32>
      %84 = vector.shape_cast %83 : vector<1x2x128xf32> to vector<2x128xf32>
      %85 = vector.shape_cast %76 : vector<2x128xf32> to vector<1x2x128xf32>
      tpu.vector_store %arg6[%c0_72, %c0_73, %c0_74], %85 {strides = array<i32>} : memref<1x2x128xf32, #tpu.memory_space<vmem>>, vector<1x2x128xf32>,
    } else {
    }
    %c0_i32_70 = arith.constant 0 : i32
    %80 = arith.cmpi ne, %arg2, %c0_i32_70 : i32
    %81 = arith.extui %80 : i1 to i32
    %c0_i32_71 = arith.constant 0 : i32
    %82 = arith.cmpi ne, %81, %c0_i32_71 : i32
    scf.if %82 {
      %c0_72 = arith.constant 0 : index
      %c0_73 = arith.constant 0 : index
      %c0_74 = arith.constant 0 : index
      %83 = vector.load %arg6[%c0_72, %c0_73, %c0_74] : memref<1x2x128xf32, #tpu.memory_space<vmem>>, vector<1x2x128xf32>
      %84 = vector.shape_cast %83 : vector<1x2x128xf32> to vector<2x128xf32>
      %85 = arith.addf %84, %76 : vector<2x128xf32>
      %c0_75 = arith.constant 0 : index
      %c0_76 = arith.constant 0 : index
      %c0_77 = arith.constant 0 : index
      %86 = vector.load %arg6[%c0_75, %c0_76, %c0_77] : memref<1x2x128xf32, #tpu.memory_space<vmem>>, vector<1x2x128xf32>
      %87 = vector.shape_cast %86 : vector<1x2x128xf32> to vector<2x128xf32>
      %88 = vector.shape_cast %85 : vector<2x128xf32> to vector<1x2x128xf32>
      tpu.vector_store %arg6[%c0_75, %c0_76, %c0_77], %88 {strides = array<i32>} : memref<1x2x128xf32, #tpu.memory_space<vmem>>, vector<1x2x128xf32>,
    } else {
    }
    return
  }
  func.func @transform_0(%arg0: i32, %arg1: i32, %arg2: i32) -> (i32, i32, i32, i32, i32) {
    %c0_i32 = arith.constant 0 : i32
    %c0_i32_0 = arith.constant 0 : i32
    %c0_i32_1 = arith.constant 0 : i32
    %c0_i32_2 = arith.constant 0 : i32
    %c0_i32_3 = arith.constant 0 : i32
    return %arg0, %c0_i32, %c0_i32_0, %c0_i32_1, %c0_i32_2 : i32, i32, i32, i32, i32
  }
  func.func @transform_1(%arg0: i32, %arg1: i32, %arg2: i32) -> (i32, i32, i32) {
    %c0_i32 = arith.constant 0 : i32
    %c0_i32_0 = arith.constant 0 : i32
    %c0_i32_1 = arith.constant 0 : i32
    return %c0_i32, %c0_i32_0, %arg1 : i32, i32, i32
  }
  func.func @transform_2(%arg0: i32, %arg1: i32, %arg2: i32) -> (i32, i32, i32, i32) {
    %c0_i32 = arith.constant 0 : i32
    %c0_i32_0 = arith.constant 0 : i32
    return %arg0, %arg2, %c0_i32, %arg1 : i32, i32, i32, i32
  }
  func.func @transform_3(%arg0: i32, %arg1: i32, %arg2: i32) -> (i32, i32, i32) {
    %c0_i32 = arith.constant 0 : i32
    %c0_i32_0 = arith.constant 0 : i32
    return %arg0, %c0_i32, %arg1 : i32, i32, i32
  }
}

module attributes {stable_mosaic.version = 11 : i64} {
  func.func @_bn_act_kernel(%arg0: i32, %arg1: memref<128x128xbf16, #tpu.memory_space<vmem>>, %arg2: memref<1x128xf32, #tpu.memory_space<vmem>>, %arg3: memref<1x128xf32, #tpu.memory_space<vmem>>, %arg4: memref<128x128xbf16, #tpu.memory_space<vmem>>) attributes {dimension_semantics = [#tpu.dimension_semantics<parallel>], iteration_bounds = array<i64: 1>, scalar_prefetch = 0 : i64, scratch_operands = 0 : i64, tpu.core_type = #tpu.core_type<tc>, window_params = [{transform_indices = @transform_0, window_bounds = array<i64: 128, 128>}, {pipeline_mode = #tpu.pipeline_mode<synchronous>, transform_indices = @transform_1, window_bounds = array<i64: 1, 128>}, {pipeline_mode = #tpu.pipeline_mode<synchronous>, transform_indices = @transform_2, window_bounds = array<i64: 1, 128>}, {transform_indices = @transform_3, window_bounds = array<i64: 128, 128>}]} {
    %c0 = arith.constant 0 : index
    %c0_0 = arith.constant 0 : index
    %0 = vector.load %arg1[%c0, %c0_0] : memref<128x128xbf16, #tpu.memory_space<vmem>>, vector<128x128xbf16>
    %1 = arith.extf %0 : vector<128x128xbf16> to vector<128x128xf32>
    %c0_1 = arith.constant 0 : index
    %c0_2 = arith.constant 0 : index
    %2 = vector.load %arg2[%c0_1, %c0_2] : memref<1x128xf32, #tpu.memory_space<vmem>>, vector<1x128xf32>
    %3 = vector.broadcast %2 : vector<1x128xf32> to vector<128x128xf32>
    %4 = arith.mulf %1, %3 : vector<128x128xf32>
    %c0_3 = arith.constant 0 : index
    %c0_4 = arith.constant 0 : index
    %5 = vector.load %arg3[%c0_3, %c0_4] : memref<1x128xf32, #tpu.memory_space<vmem>>, vector<1x128xf32>
    %6 = vector.broadcast %5 : vector<1x128xf32> to vector<128x128xf32>
    %7 = arith.addf %4, %6 : vector<128x128xf32>
    %cst = arith.constant 0.000000e+00 : f32
    %8 = vector.broadcast %cst : f32 to vector<128x128xf32>
    %9 = arith.maximumf %7, %8 : vector<128x128xf32>
    %10 = arith.truncf %9 : vector<128x128xf32> to vector<128x128xbf16>
    %c0_5 = arith.constant 0 : index
    %c0_6 = arith.constant 0 : index
    %11 = vector.load %arg4[%c0_5, %c0_6] : memref<128x128xbf16, #tpu.memory_space<vmem>>, vector<128x128xbf16>
    tpu.vector_store %arg4[%c0_5, %c0_6], %10 {strides = array<i32>} : memref<128x128xbf16, #tpu.memory_space<vmem>>, vector<128x128xbf16>,
    return
  }
  func.func @transform_0(%arg0: i32) -> (i32, i32) {
    %c0_i32 = arith.constant 0 : i32
    %c0_i32_0 = arith.constant 0 : i32
    return %arg0, %c0_i32 : i32, i32
  }
  func.func @transform_1(%arg0: i32) -> (i32, i32) {
    %c0_i32 = arith.constant 0 : i32
    %c0_i32_0 = arith.constant 0 : i32
    %c0_i32_1 = arith.constant 0 : i32
    return %c0_i32, %c0_i32_0 : i32, i32
  }
  func.func @transform_2(%arg0: i32) -> (i32, i32) {
    %c0_i32 = arith.constant 0 : i32
    %c0_i32_0 = arith.constant 0 : i32
    %c0_i32_1 = arith.constant 0 : i32
    return %c0_i32, %c0_i32_0 : i32, i32
  }
  func.func @transform_3(%arg0: i32) -> (i32, i32) {
    %c0_i32 = arith.constant 0 : i32
    %c0_i32_0 = arith.constant 0 : i32
    return %arg0, %c0_i32 : i32, i32
  }
}

module attributes {stable_mosaic.version = 11 : i64} {
  func.func @_conv_kernel(%arg0: i32, %arg1: i32, %arg2: i32, %arg3: memref<1x1x10x10x128xbf16, #tpu.memory_space<vmem>>, %arg4: memref<3x384x128xbf16, #tpu.memory_space<vmem>>, %arg5: memref<1x8x8x128xbf16, #tpu.memory_space<vmem>>, %arg6: memref<1x2x128xf32, #tpu.memory_space<vmem>>, %arg7: memref<64x128xf32, #tpu.memory_space<vmem>>) attributes {dimension_semantics = [#tpu.dimension_semantics<parallel>, #tpu.dimension_semantics<parallel>, #tpu.dimension_semantics<arbitrary>], iteration_bounds = array<i64: 2, 1, 1>, scalar_prefetch = 0 : i64, scratch_operands = 1 : i64, tpu.core_type = #tpu.core_type<tc>, window_params = [{transform_indices = @transform_0, window_bounds = array<i64: 1, 1, 10, 10, 128>}, {transform_indices = @transform_1, window_bounds = array<i64: 3, 384, 128>}, {transform_indices = @transform_2, window_bounds = array<i64: 1, 8, 8, 128>}, {transform_indices = @transform_3, window_bounds = array<i64: 1, 2, 128>}]} {
    %c8_i32 = arith.constant 8 : i32
    %0 = arith.muli %arg2, %c8_i32 : i32
    %c0_i32 = arith.constant 0 : i32
    %1 = arith.addi %0, %c0_i32 : i32
    %c0 = arith.constant 0 : index
    %c0_0 = arith.constant 0 : index
    %2 = arith.index_cast %1 : i32 to index
    %c0_1 = arith.constant 0 : index
    %c0_2 = arith.constant 0 : index
    %3 = vector.load %arg3[%c0, %c0_0, %2, %c0_1, %c0_2] : memref<1x1x10x10x128xbf16, #tpu.memory_space<vmem>>, vector<1x1x8x8x128xbf16>
    %4 = vector.shape_cast %3 : vector<1x1x8x8x128xbf16> to vector<8x8x128xbf16>
    %5 = vector.shape_cast %4 : vector<8x8x128xbf16> to vector<64x128xbf16>
    %c0_i32_3 = arith.constant 0 : i32
    %6 = arith.addi %0, %c0_i32_3 : i32
    %c0_4 = arith.constant 0 : index
    %c0_5 = arith.constant 0 : index
    %7 = arith.index_cast %6 : i32 to index
    %c1 = arith.constant 1 : index
    %c0_6 = arith.constant 0 : index
    %8 = vector.load %arg3[%c0_4, %c0_5, %7, %c1, %c0_6] : memref<1x1x10x10x128xbf16, #tpu.memory_space<vmem>>, vector<1x1x8x8x128xbf16>
    %9 = vector.shape_cast %8 : vector<1x1x8x8x128xbf16> to vector<8x8x128xbf16>
    %10 = vector.shape_cast %9 : vector<8x8x128xbf16> to vector<64x128xbf16>
    %c0_i32_7 = arith.constant 0 : i32
    %11 = arith.addi %0, %c0_i32_7 : i32
    %c0_8 = arith.constant 0 : index
    %c0_9 = arith.constant 0 : index
    %12 = arith.index_cast %11 : i32 to index
    %c2 = arith.constant 2 : index
    %c0_10 = arith.constant 0 : index
    %13 = vector.load %arg3[%c0_8, %c0_9, %12, %c2, %c0_10] : memref<1x1x10x10x128xbf16, #tpu.memory_space<vmem>>, vector<1x1x8x8x128xbf16>
    %14 = vector.shape_cast %13 : vector<1x1x8x8x128xbf16> to vector<8x8x128xbf16>
    %15 = vector.shape_cast %14 : vector<8x8x128xbf16> to vector<64x128xbf16>
    %16 = tpu.concatenate %5, %10, %15 in 1 : vector<64x128xbf16>, vector<64x128xbf16>, vector<64x128xbf16> -> vector<64x384xbf16>
    %c0_11 = arith.constant 0 : index
    %c0_12 = arith.constant 0 : index
    %c0_13 = arith.constant 0 : index
    %17 = vector.load %arg4[%c0_11, %c0_12, %c0_13] : memref<3x384x128xbf16, #tpu.memory_space<vmem>>, vector<1x384x128xbf16>
    %18 = vector.shape_cast %17 : vector<1x384x128xbf16> to vector<384x128xbf16>
    %cst = arith.constant dense<0.000000e+00> : vector<64x128xf32>
    %19 = tpu.matmul %16, %18, %cst {dimension_numbers = #tpu.dot_dimension_numbers<[1], [0], [0], [1], [0, 0, 1, 1], [], []>} : vector<64x384xbf16>, vector<384x128xbf16>, vector<64x128xf32> -> vector<64x128xf32>
    %c0_14 = arith.constant 0 : index
    %c0_15 = arith.constant 0 : index
    %20 = vector.load %arg7[%c0_14, %c0_15] : memref<64x128xf32, #tpu.memory_space<vmem>>, vector<64x128xf32>
    tpu.vector_store %arg7[%c0_14, %c0_15], %19 {strides = array<i32>} : memref<64x128xf32, #tpu.memory_space<vmem>>, vector<64x128xf32>,
    %c1_i32 = arith.constant 1 : i32
    %21 = arith.addi %0, %c1_i32 : i32
    %c0_16 = arith.constant 0 : index
    %c0_17 = arith.constant 0 : index
    %22 = arith.index_cast %21 : i32 to index
    %c0_18 = arith.constant 0 : index
    %c0_19 = arith.constant 0 : index
    %23 = vector.load %arg3[%c0_16, %c0_17, %22, %c0_18, %c0_19] : memref<1x1x10x10x128xbf16, #tpu.memory_space<vmem>>, vector<1x1x8x8x128xbf16>
    %24 = vector.shape_cast %23 : vector<1x1x8x8x128xbf16> to vector<8x8x128xbf16>
    %25 = vector.shape_cast %24 : vector<8x8x128xbf16> to vector<64x128xbf16>
    %c1_i32_20 = arith.constant 1 : i32
    %26 = arith.addi %0, %c1_i32_20 : i32
    %c0_21 = arith.constant 0 : index
    %c0_22 = arith.constant 0 : index
    %27 = arith.index_cast %26 : i32 to index
    %c1_23 = arith.constant 1 : index
    %c0_24 = arith.constant 0 : index
    %28 = vector.load %arg3[%c0_21, %c0_22, %27, %c1_23, %c0_24] : memref<1x1x10x10x128xbf16, #tpu.memory_space<vmem>>, vector<1x1x8x8x128xbf16>
    %29 = vector.shape_cast %28 : vector<1x1x8x8x128xbf16> to vector<8x8x128xbf16>
    %30 = vector.shape_cast %29 : vector<8x8x128xbf16> to vector<64x128xbf16>
    %c1_i32_25 = arith.constant 1 : i32
    %31 = arith.addi %0, %c1_i32_25 : i32
    %c0_26 = arith.constant 0 : index
    %c0_27 = arith.constant 0 : index
    %32 = arith.index_cast %31 : i32 to index
    %c2_28 = arith.constant 2 : index
    %c0_29 = arith.constant 0 : index
    %33 = vector.load %arg3[%c0_26, %c0_27, %32, %c2_28, %c0_29] : memref<1x1x10x10x128xbf16, #tpu.memory_space<vmem>>, vector<1x1x8x8x128xbf16>
    %34 = vector.shape_cast %33 : vector<1x1x8x8x128xbf16> to vector<8x8x128xbf16>
    %35 = vector.shape_cast %34 : vector<8x8x128xbf16> to vector<64x128xbf16>
    %36 = tpu.concatenate %25, %30, %35 in 1 : vector<64x128xbf16>, vector<64x128xbf16>, vector<64x128xbf16> -> vector<64x384xbf16>
    %c1_30 = arith.constant 1 : index
    %c0_31 = arith.constant 0 : index
    %c0_32 = arith.constant 0 : index
    %37 = vector.load %arg4[%c1_30, %c0_31, %c0_32] : memref<3x384x128xbf16, #tpu.memory_space<vmem>>, vector<1x384x128xbf16>
    %38 = vector.shape_cast %37 : vector<1x384x128xbf16> to vector<384x128xbf16>
    %cst_33 = arith.constant dense<0.000000e+00> : vector<64x128xf32>
    %39 = tpu.matmul %36, %38, %cst_33 {dimension_numbers = #tpu.dot_dimension_numbers<[1], [0], [0], [1], [0, 0, 1, 1], [], []>} : vector<64x384xbf16>, vector<384x128xbf16>, vector<64x128xf32> -> vector<64x128xf32>
    %c0_34 = arith.constant 0 : index
    %c0_35 = arith.constant 0 : index
    %40 = vector.load %arg7[%c0_34, %c0_35] : memref<64x128xf32, #tpu.memory_space<vmem>>, vector<64x128xf32>
    %41 = arith.addf %40, %39 : vector<64x128xf32>
    %c0_36 = arith.constant 0 : index
    %c0_37 = arith.constant 0 : index
    %42 = vector.load %arg7[%c0_36, %c0_37] : memref<64x128xf32, #tpu.memory_space<vmem>>, vector<64x128xf32>
    tpu.vector_store %arg7[%c0_36, %c0_37], %41 {strides = array<i32>} : memref<64x128xf32, #tpu.memory_space<vmem>>, vector<64x128xf32>,
    %c2_i32 = arith.constant 2 : i32
    %43 = arith.addi %0, %c2_i32 : i32
    %c0_38 = arith.constant 0 : index
    %c0_39 = arith.constant 0 : index
    %44 = arith.index_cast %43 : i32 to index
    %c0_40 = arith.constant 0 : index
    %c0_41 = arith.constant 0 : index
    %45 = vector.load %arg3[%c0_38, %c0_39, %44, %c0_40, %c0_41] : memref<1x1x10x10x128xbf16, #tpu.memory_space<vmem>>, vector<1x1x8x8x128xbf16>
    %46 = vector.shape_cast %45 : vector<1x1x8x8x128xbf16> to vector<8x8x128xbf16>
    %47 = vector.shape_cast %46 : vector<8x8x128xbf16> to vector<64x128xbf16>
    %c2_i32_42 = arith.constant 2 : i32
    %48 = arith.addi %0, %c2_i32_42 : i32
    %c0_43 = arith.constant 0 : index
    %c0_44 = arith.constant 0 : index
    %49 = arith.index_cast %48 : i32 to index
    %c1_45 = arith.constant 1 : index
    %c0_46 = arith.constant 0 : index
    %50 = vector.load %arg3[%c0_43, %c0_44, %49, %c1_45, %c0_46] : memref<1x1x10x10x128xbf16, #tpu.memory_space<vmem>>, vector<1x1x8x8x128xbf16>
    %51 = vector.shape_cast %50 : vector<1x1x8x8x128xbf16> to vector<8x8x128xbf16>
    %52 = vector.shape_cast %51 : vector<8x8x128xbf16> to vector<64x128xbf16>
    %c2_i32_47 = arith.constant 2 : i32
    %53 = arith.addi %0, %c2_i32_47 : i32
    %c0_48 = arith.constant 0 : index
    %c0_49 = arith.constant 0 : index
    %54 = arith.index_cast %53 : i32 to index
    %c2_50 = arith.constant 2 : index
    %c0_51 = arith.constant 0 : index
    %55 = vector.load %arg3[%c0_48, %c0_49, %54, %c2_50, %c0_51] : memref<1x1x10x10x128xbf16, #tpu.memory_space<vmem>>, vector<1x1x8x8x128xbf16>
    %56 = vector.shape_cast %55 : vector<1x1x8x8x128xbf16> to vector<8x8x128xbf16>
    %57 = vector.shape_cast %56 : vector<8x8x128xbf16> to vector<64x128xbf16>
    %58 = tpu.concatenate %47, %52, %57 in 1 : vector<64x128xbf16>, vector<64x128xbf16>, vector<64x128xbf16> -> vector<64x384xbf16>
    %c2_52 = arith.constant 2 : index
    %c0_53 = arith.constant 0 : index
    %c0_54 = arith.constant 0 : index
    %59 = vector.load %arg4[%c2_52, %c0_53, %c0_54] : memref<3x384x128xbf16, #tpu.memory_space<vmem>>, vector<1x384x128xbf16>
    %60 = vector.shape_cast %59 : vector<1x384x128xbf16> to vector<384x128xbf16>
    %cst_55 = arith.constant dense<0.000000e+00> : vector<64x128xf32>
    %61 = tpu.matmul %58, %60, %cst_55 {dimension_numbers = #tpu.dot_dimension_numbers<[1], [0], [0], [1], [0, 0, 1, 1], [], []>} : vector<64x384xbf16>, vector<384x128xbf16>, vector<64x128xf32> -> vector<64x128xf32>
    %c0_56 = arith.constant 0 : index
    %c0_57 = arith.constant 0 : index
    %62 = vector.load %arg7[%c0_56, %c0_57] : memref<64x128xf32, #tpu.memory_space<vmem>>, vector<64x128xf32>
    %63 = arith.addf %62, %61 : vector<64x128xf32>
    %c0_58 = arith.constant 0 : index
    %c0_59 = arith.constant 0 : index
    %64 = vector.load %arg7[%c0_58, %c0_59] : memref<64x128xf32, #tpu.memory_space<vmem>>, vector<64x128xf32>
    tpu.vector_store %arg7[%c0_58, %c0_59], %63 {strides = array<i32>} : memref<64x128xf32, #tpu.memory_space<vmem>>, vector<64x128xf32>,
    %c0_60 = arith.constant 0 : index
    %c0_61 = arith.constant 0 : index
    %65 = vector.load %arg7[%c0_60, %c0_61] : memref<64x128xf32, #tpu.memory_space<vmem>>, vector<64x128xf32>
    %66 = vector.shape_cast %65 : vector<64x128xf32> to vector<8x8x128xf32>
    %67 = arith.truncf %66 : vector<8x8x128xf32> to vector<8x8x128xbf16>
    %c0_62 = arith.constant 0 : index
    %c0_63 = arith.constant 0 : index
    %c0_64 = arith.constant 0 : index
    %c0_65 = arith.constant 0 : index
    %68 = vector.load %arg5[%c0_62, %c0_63, %c0_64, %c0_65] : memref<1x8x8x128xbf16, #tpu.memory_space<vmem>>, vector<1x8x8x128xbf16>
    %69 = vector.shape_cast %68 : vector<1x8x8x128xbf16> to vector<8x8x128xbf16>
    %70 = vector.shape_cast %67 : vector<8x8x128xbf16> to vector<1x8x8x128xbf16>
    tpu.vector_store %arg5[%c0_62, %c0_63, %c0_64, %c0_65], %70 {strides = array<i32>} : memref<1x8x8x128xbf16, #tpu.memory_space<vmem>>, vector<1x8x8x128xbf16>,
    %cst_66 = arith.constant dense<0.000000e+00> : vector<128xf32>
    %71 = vector.multi_reduction <add>, %65, %cst_66 [0] : vector<64x128xf32> to vector<128xf32>
    %72 = vector.shape_cast %71 : vector<128xf32> to vector<1x128xf32>
    %73 = arith.mulf %65, %65 : vector<64x128xf32>
    %cst_67 = arith.constant dense<0.000000e+00> : vector<128xf32>
    %74 = vector.multi_reduction <add>, %73, %cst_67 [0] : vector<64x128xf32> to vector<128xf32>
    %75 = vector.shape_cast %74 : vector<128xf32> to vector<1x128xf32>
    %76 = tpu.concatenate %72, %75 in 0 : vector<1x128xf32>, vector<1x128xf32> -> vector<2x128xf32>
    %c0_i32_68 = arith.constant 0 : i32
    %77 = arith.cmpi eq, %arg2, %c0_i32_68 : i32
    %78 = arith.extui %77 : i1 to i32
    %c0_i32_69 = arith.constant 0 : i32
    %79 = arith.cmpi ne, %78, %c0_i32_69 : i32
    scf.if %79 {
      %c0_72 = arith.constant 0 : index
      %c0_73 = arith.constant 0 : index
      %c0_74 = arith.constant 0 : index
      %83 = vector.load %arg6[%c0_72, %c0_73, %c0_74] : memref<1x2x128xf32, #tpu.memory_space<vmem>>, vector<1x2x128xf32>
      %84 = vector.shape_cast %83 : vector<1x2x128xf32> to vector<2x128xf32>
      %85 = vector.shape_cast %76 : vector<2x128xf32> to vector<1x2x128xf32>
      tpu.vector_store %arg6[%c0_72, %c0_73, %c0_74], %85 {strides = array<i32>} : memref<1x2x128xf32, #tpu.memory_space<vmem>>, vector<1x2x128xf32>,
    } else {
    }
    %c0_i32_70 = arith.constant 0 : i32
    %80 = arith.cmpi ne, %arg2, %c0_i32_70 : i32
    %81 = arith.extui %80 : i1 to i32
    %c0_i32_71 = arith.constant 0 : i32
    %82 = arith.cmpi ne, %81, %c0_i32_71 : i32
    scf.if %82 {
      %c0_72 = arith.constant 0 : index
      %c0_73 = arith.constant 0 : index
      %c0_74 = arith.constant 0 : index
      %83 = vector.load %arg6[%c0_72, %c0_73, %c0_74] : memref<1x2x128xf32, #tpu.memory_space<vmem>>, vector<1x2x128xf32>
      %84 = vector.shape_cast %83 : vector<1x2x128xf32> to vector<2x128xf32>
      %85 = arith.addf %84, %76 : vector<2x128xf32>
      %c0_75 = arith.constant 0 : index
      %c0_76 = arith.constant 0 : index
      %c0_77 = arith.constant 0 : index
      %86 = vector.load %arg6[%c0_75, %c0_76, %c0_77] : memref<1x2x128xf32, #tpu.memory_space<vmem>>, vector<1x2x128xf32>
      %87 = vector.shape_cast %86 : vector<1x2x128xf32> to vector<2x128xf32>
      %88 = vector.shape_cast %85 : vector<2x128xf32> to vector<1x2x128xf32>
      tpu.vector_store %arg6[%c0_75, %c0_76, %c0_77], %88 {strides = array<i32>} : memref<1x2x128xf32, #tpu.memory_space<vmem>>, vector<1x2x128xf32>,
    } else {
    }
    return
  }
  func.func @transform_0(%arg0: i32, %arg1: i32, %arg2: i32) -> (i32, i32, i32, i32, i32) {
    %c0_i32 = arith.constant 0 : i32
    %c0_i32_0 = arith.constant 0 : i32
    %c0_i32_1 = arith.constant 0 : i32
    %c0_i32_2 = arith.constant 0 : i32
    %c0_i32_3 = arith.constant 0 : i32
    return %arg0, %c0_i32, %c0_i32_0, %c0_i32_1, %c0_i32_2 : i32, i32, i32, i32, i32
  }
  func.func @transform_1(%arg0: i32, %arg1: i32, %arg2: i32) -> (i32, i32, i32) {
    %c0_i32 = arith.constant 0 : i32
    %c0_i32_0 = arith.constant 0 : i32
    %c0_i32_1 = arith.constant 0 : i32
    return %c0_i32, %c0_i32_0, %arg1 : i32, i32, i32
  }
  func.func @transform_2(%arg0: i32, %arg1: i32, %arg2: i32) -> (i32, i32, i32, i32) {
    %c0_i32 = arith.constant 0 : i32
    %c0_i32_0 = arith.constant 0 : i32
    return %arg0, %arg2, %c0_i32, %arg1 : i32, i32, i32, i32
  }
  func.func @transform_3(%arg0: i32, %arg1: i32, %arg2: i32) -> (i32, i32, i32) {
    %c0_i32 = arith.constant 0 : i32
    %c0_i32_0 = arith.constant 0 : i32
    return %arg0, %c0_i32, %arg1 : i32, i32, i32
  }
}

module attributes {stable_mosaic.version = 11 : i64} {
  func.func @_bn_add_conv_kernel(%arg0: i32, %arg1: memref<128x128xbf16, #tpu.memory_space<vmem>>, %arg2: memref<128x128xbf16, #tpu.memory_space<vmem>>, %arg3: memref<1x128xf32, #tpu.memory_space<vmem>>, %arg4: memref<1x128xf32, #tpu.memory_space<vmem>>, %arg5: memref<1x128xf32, #tpu.memory_space<vmem>>, %arg6: memref<1x128xf32, #tpu.memory_space<vmem>>, %arg7: memref<128x128xbf16, #tpu.memory_space<vmem>>) attributes {dimension_semantics = [#tpu.dimension_semantics<parallel>], iteration_bounds = array<i64: 1>, scalar_prefetch = 0 : i64, scratch_operands = 0 : i64, tpu.core_type = #tpu.core_type<tc>, window_params = [{transform_indices = @transform_0, window_bounds = array<i64: 128, 128>}, {transform_indices = @transform_1, window_bounds = array<i64: 128, 128>}, {pipeline_mode = #tpu.pipeline_mode<synchronous>, transform_indices = @transform_2, window_bounds = array<i64: 1, 128>}, {pipeline_mode = #tpu.pipeline_mode<synchronous>, transform_indices = @transform_3, window_bounds = array<i64: 1, 128>}, {pipeline_mode = #tpu.pipeline_mode<synchronous>, transform_indices = @transform_4, window_bounds = array<i64: 1, 128>}, {pipeline_mode = #tpu.pipeline_mode<synchronous>, transform_indices = @transform_5, window_bounds = array<i64: 1, 128>}, {transform_indices = @transform_6, window_bounds = array<i64: 128, 128>}]} {
    %c0 = arith.constant 0 : index
    %c0_0 = arith.constant 0 : index
    %0 = vector.load %arg1[%c0, %c0_0] : memref<128x128xbf16, #tpu.memory_space<vmem>>, vector<128x128xbf16>
    %1 = arith.extf %0 : vector<128x128xbf16> to vector<128x128xf32>
    %c0_1 = arith.constant 0 : index
    %c0_2 = arith.constant 0 : index
    %2 = vector.load %arg3[%c0_1, %c0_2] : memref<1x128xf32, #tpu.memory_space<vmem>>, vector<1x128xf32>
    %3 = vector.broadcast %2 : vector<1x128xf32> to vector<128x128xf32>
    %4 = arith.mulf %1, %3 : vector<128x128xf32>
    %c0_3 = arith.constant 0 : index
    %c0_4 = arith.constant 0 : index
    %5 = vector.load %arg4[%c0_3, %c0_4] : memref<1x128xf32, #tpu.memory_space<vmem>>, vector<1x128xf32>
    %6 = vector.broadcast %5 : vector<1x128xf32> to vector<128x128xf32>
    %7 = arith.addf %4, %6 : vector<128x128xf32>
    %c0_5 = arith.constant 0 : index
    %c0_6 = arith.constant 0 : index
    %8 = vector.load %arg2[%c0_5, %c0_6] : memref<128x128xbf16, #tpu.memory_space<vmem>>, vector<128x128xbf16>
    %9 = arith.extf %8 : vector<128x128xbf16> to vector<128x128xf32>
    %c0_7 = arith.constant 0 : index
    %c0_8 = arith.constant 0 : index
    %10 = vector.load %arg5[%c0_7, %c0_8] : memref<1x128xf32, #tpu.memory_space<vmem>>, vector<1x128xf32>
    %11 = vector.broadcast %10 : vector<1x128xf32> to vector<128x128xf32>
    %12 = arith.mulf %9, %11 : vector<128x128xf32>
    %13 = arith.addf %7, %12 : vector<128x128xf32>
    %c0_9 = arith.constant 0 : index
    %c0_10 = arith.constant 0 : index
    %14 = vector.load %arg6[%c0_9, %c0_10] : memref<1x128xf32, #tpu.memory_space<vmem>>, vector<1x128xf32>
    %15 = vector.broadcast %14 : vector<1x128xf32> to vector<128x128xf32>
    %16 = arith.addf %13, %15 : vector<128x128xf32>
    %cst = arith.constant 0.000000e+00 : f32
    %17 = vector.broadcast %cst : f32 to vector<128x128xf32>
    %18 = arith.maximumf %16, %17 : vector<128x128xf32>
    %19 = arith.truncf %18 : vector<128x128xf32> to vector<128x128xbf16>
    %c0_11 = arith.constant 0 : index
    %c0_12 = arith.constant 0 : index
    %20 = vector.load %arg7[%c0_11, %c0_12] : memref<128x128xbf16, #tpu.memory_space<vmem>>, vector<128x128xbf16>
    tpu.vector_store %arg7[%c0_11, %c0_12], %19 {strides = array<i32>} : memref<128x128xbf16, #tpu.memory_space<vmem>>, vector<128x128xbf16>,
    return
  }
  func.func @transform_0(%arg0: i32) -> (i32, i32) {
    %c0_i32 = arith.constant 0 : i32
    %c0_i32_0 = arith.constant 0 : i32
    return %arg0, %c0_i32 : i32, i32
  }
  func.func @transform_1(%arg0: i32) -> (i32, i32) {
    %c0_i32 = arith.constant 0 : i32
    %c0_i32_0 = arith.constant 0 : i32
    return %arg0, %c0_i32 : i32, i32
  }
  func.func @transform_2(%arg0: i32) -> (i32, i32) {
    %c0_i32 = arith.constant 0 : i32
    %c0_i32_0 = arith.constant 0 : i32
    %c0_i32_1 = arith.constant 0 : i32
    return %c0_i32, %c0_i32_0 : i32, i32
  }
  func.func @transform_3(%arg0: i32) -> (i32, i32) {
    %c0_i32 = arith.constant 0 : i32
    %c0_i32_0 = arith.constant 0 : i32
    %c0_i32_1 = arith.constant 0 : i32
    return %c0_i32, %c0_i32_0 : i32, i32
  }
  func.func @transform_4(%arg0: i32) -> (i32, i32) {
    %c0_i32 = arith.constant 0 : i32
    %c0_i32_0 = arith.constant 0 : i32
    %c0_i32_1 = arith.constant 0 : i32
    return %c0_i32, %c0_i32_0 : i32, i32
  }
  func.func @transform_5(%arg0: i32) -> (i32, i32) {
    %c0_i32 = arith.constant 0 : i32
    %c0_i32_0 = arith.constant 0 : i32
    %c0_i32_1 = arith.constant 0 : i32
    return %c0_i32, %c0_i32_0 : i32, i32
  }
  func.func @transform_6(%arg0: i32) -> (i32, i32) {
    %c0_i32 = arith.constant 0 : i32
    %c0_i32_0 = arith.constant 0 : i32
    return %arg0, %c0_i32 : i32, i32
  }
}

module attributes {stable_mosaic.version = 11 : i64} {
  func.func @_bn_add_id_kernel(%arg0: i32, %arg1: memref<128x128xbf16, #tpu.memory_space<vmem>>, %arg2: memref<128x128xbf16, #tpu.memory_space<vmem>>, %arg3: memref<1x128xf32, #tpu.memory_space<vmem>>, %arg4: memref<1x128xf32, #tpu.memory_space<vmem>>, %arg5: memref<128x128xbf16, #tpu.memory_space<vmem>>) attributes {dimension_semantics = [#tpu.dimension_semantics<parallel>], iteration_bounds = array<i64: 1>, scalar_prefetch = 0 : i64, scratch_operands = 0 : i64, tpu.core_type = #tpu.core_type<tc>, window_params = [{transform_indices = @transform_0, window_bounds = array<i64: 128, 128>}, {transform_indices = @transform_1, window_bounds = array<i64: 128, 128>}, {pipeline_mode = #tpu.pipeline_mode<synchronous>, transform_indices = @transform_2, window_bounds = array<i64: 1, 128>}, {pipeline_mode = #tpu.pipeline_mode<synchronous>, transform_indices = @transform_3, window_bounds = array<i64: 1, 128>}, {transform_indices = @transform_4, window_bounds = array<i64: 128, 128>}]} {
    %c0 = arith.constant 0 : index
    %c0_0 = arith.constant 0 : index
    %0 = vector.load %arg1[%c0, %c0_0] : memref<128x128xbf16, #tpu.memory_space<vmem>>, vector<128x128xbf16>
    %1 = arith.extf %0 : vector<128x128xbf16> to vector<128x128xf32>
    %c0_1 = arith.constant 0 : index
    %c0_2 = arith.constant 0 : index
    %2 = vector.load %arg3[%c0_1, %c0_2] : memref<1x128xf32, #tpu.memory_space<vmem>>, vector<1x128xf32>
    %3 = vector.broadcast %2 : vector<1x128xf32> to vector<128x128xf32>
    %4 = arith.mulf %1, %3 : vector<128x128xf32>
    %c0_3 = arith.constant 0 : index
    %c0_4 = arith.constant 0 : index
    %5 = vector.load %arg4[%c0_3, %c0_4] : memref<1x128xf32, #tpu.memory_space<vmem>>, vector<1x128xf32>
    %6 = vector.broadcast %5 : vector<1x128xf32> to vector<128x128xf32>
    %7 = arith.addf %4, %6 : vector<128x128xf32>
    %c0_5 = arith.constant 0 : index
    %c0_6 = arith.constant 0 : index
    %8 = vector.load %arg2[%c0_5, %c0_6] : memref<128x128xbf16, #tpu.memory_space<vmem>>, vector<128x128xbf16>
    %9 = arith.extf %8 : vector<128x128xbf16> to vector<128x128xf32>
    %10 = arith.addf %7, %9 : vector<128x128xf32>
    %cst = arith.constant 0.000000e+00 : f32
    %11 = vector.broadcast %cst : f32 to vector<128x128xf32>
    %12 = arith.maximumf %10, %11 : vector<128x128xf32>
    %13 = arith.truncf %12 : vector<128x128xf32> to vector<128x128xbf16>
    %c0_7 = arith.constant 0 : index
    %c0_8 = arith.constant 0 : index
    %14 = vector.load %arg5[%c0_7, %c0_8] : memref<128x128xbf16, #tpu.memory_space<vmem>>, vector<128x128xbf16>
    tpu.vector_store %arg5[%c0_7, %c0_8], %13 {strides = array<i32>} : memref<128x128xbf16, #tpu.memory_space<vmem>>, vector<128x128xbf16>,
    return
  }
  func.func @transform_0(%arg0: i32) -> (i32, i32) {
    %c0_i32 = arith.constant 0 : i32
    %c0_i32_0 = arith.constant 0 : i32
    return %arg0, %c0_i32 : i32, i32
  }
  func.func @transform_1(%arg0: i32) -> (i32, i32) {
    %c0_i32 = arith.constant 0 : i32
    %c0_i32_0 = arith.constant 0 : i32
    return %arg0, %c0_i32 : i32, i32
  }
  func.func @transform_2(%arg0: i32) -> (i32, i32) {
    %c0_i32 = arith.constant 0 : i32
    %c0_i32_0 = arith.constant 0 : i32
    %c0_i32_1 = arith.constant 0 : i32
    return %c0_i32, %c0_i32_0 : i32, i32
  }
  func.func @transform_3(%arg0: i32) -> (i32, i32) {
    %c0_i32 = arith.constant 0 : i32
    %c0_i32_0 = arith.constant 0 : i32
    %c0_i32_1 = arith.constant 0 : i32
    return %c0_i32, %c0_i32_0 : i32, i32
  }
  func.func @transform_4(%arg0: i32) -> (i32, i32) {
    %c0_i32 = arith.constant 0 : i32
    %c0_i32_0 = arith.constant 0 : i32
    return %arg0, %c0_i32 : i32, i32
  }
}

</mosaic_0001>

<llo_original>
// kernel: _lambda_.12
$region0: #{_lambda_.12}
  #allocation0 [shape = 'u32[]', space=smem, size = 0x4, offset = 0x4, fixed_abs, tag = 'smem constant byte address 0x4 - core index']
  #allocation1 [shape = 'u32[144,128]{1,0:T(1,128)}', space=vmem, size = 0x12000, scoped, tag = 'internal scratch']
  #allocation2 [shape = 'f32[64,128]{1,0:T(8,128)}', space=vmem, size = 0x8000, scoped, tag = 'scratch operand']
  %s0 = inlined_call_operand.vmem [shape: bf16[2,1,8,8,128], index: 0, kind: input, shape index: {}]
  %s1 = inlined_call_operand.vmem [shape: bf16[1,128,128], index: 1, kind: input, shape index: {}]
  %s2 = inlined_call_operand.vmem [shape: bf16[2,8,8,128], index: 2, kind: output, shape index: {0}]
  %s3 = inlined_call_operand.vmem [shape: f32[2,2,128], index: 3, kind: output, shape index: {1}]
  %4 = xla_tuple %s2, %s3
  %s5 = sld [smem:[#allocation0]]
  $region57: #{_lambda_.12} parent=0
    _
  %s7 = ssub.s32 1, %s5
  %s8 = scalar_select 0, %s7, %s5
  loop: start=0, step=1, limit=4
  $region2: #{_lambda_.12} parent=0 // loop_pre_header
    _
  $region3: #{_lambda_.12} parent=0 // loop_header
    %s10 = sphi 0, %s14
    %p11 = scmp.ge.s32.totalorder %s10, 4
    %s17 = sphi 0, %s36
    %s18 = sphi 0, %s32
    %s19 = sphi 0, %s28
    %s20 = sphi 0, %s17
    %s21 = sphi 0, %s18
    %s22 = sphi 0, %s19
    %s23 = sphi 0, %s20
    %s24 = sphi 0, %s21
    %s25 = sphi 0, %s22
    %s39 = sphi 0, %s41
    %s42 = sphi 0, %s39
    %s43 = sphi 0, %s42
    %s59 = sphi 0, %s43
    %s65 = sphi 0, %s67
    %s68 = sphi 0, %s65
    %s69 = sphi 0, %s68
    %s85 = sphi 0, %s69
    %s95 = sphi 0, %s97
    %s98 = sphi 0, %s95
    %s99 = sphi 0, %s98
    %s115 = sphi 0, %s99
    %s123 = sphi 0, %s125
    %s126 = sphi 0, %s123
    %s127 = sphi 0, %s126
    %s143 = sphi 0, %s127
  $region4: #{_lambda_.12} parent=0 // loop_header_branch
    %13 = sbr.rel (%p11) target = $region8
  $region5: #{_lambda_.12} parent=0 // loop_body
    %s15 = ssub.s32 %s10, 1
    %s16 = ssub.s32 %s10, 2
    %s26 = sadd.s32 1, %s19
    %p27 = scmp.ge.s32.totalorder %s26, 1
    %s28 = scalar_select %p27, 0, %s26
    %s29 = sadd.s32 1, %s18
    %s30 = scalar_select %p27, %s29, %s18
    %p31 = scmp.ge.s32.totalorder %s30, 1
    %s32 = scalar_select %p31, 0, %s30
    %s33 = sadd.s32 1, %s17
    %s34 = scalar_select %p31, %s33, %s17
    %p35 = scmp.ge.s32.totalorder %s34, 2
    %s36 = scalar_select %p35, 0, %s34
    %s37 = ssub.s32 %s17, %s36
    %p38 = scmp.eq.s32.totalorder %s37, 0
    %s40 = sadd.s32 %s39, 1
    %s41 = scalar_select %p38, %s39, %s40
    %p44 = pneg %p38
    %p45 = scmp.eq.s32.totalorder %s10, 1
    %p46 = por %p44, %p45
    %p47 = scmp.ne.s32.totalorder %s39, %s42
    %p48 = scmp.eq.s32.totalorder %s10, 0
    %p49 = por %p47, %p48
    %p50 = scmp.ne.s32.totalorder %s39, %s42
    %p51 = scmp.eq.s32.totalorder %s15, 1
    %p52 = por %p50, %p51
    %p53 = scmp.ne.s32.totalorder %s42, %s43
    %p54 = scmp.eq.s32.totalorder %s15, 0
    %p55 = por %p53, %p54
    %p56 = scmp.ne.s32.totalorder %s42, %s43
    %p57 = scmp.eq.s32.totalorder %s16, 1
    %p58 = por %p56, %p57
    %p60 = scmp.ne.s32.totalorder %s43, %s59
    %p61 = scmp.eq.s32.totalorder %s16, 0
    %p62 = por %p60, %p61
    %s63 = ssub.s32 %s18, %s32
    %p64 = scmp.eq.s32.totalorder %s63, 0
    %s66 = sadd.s32 %s65, 1
    %s67 = scalar_select %p64, %s65, %s66
    %p70 = pneg %p64
    %p71 = scmp.eq.s32.totalorder %s10, 1
    %p72 = por %p70, %p71
    %p73 = scmp.ne.s32.totalorder %s65, %s68
    %p74 = scmp.eq.s32.totalorder %s10, 0
    %p75 = por %p73, %p74
    %p76 = scmp.ne.s32.totalorder %s65, %s68
    %p77 = scmp.eq.s32.totalorder %s15, 1
    %p78 = por %p76, %p77
    %p79 = scmp.ne.s32.totalorder %s68, %s69
    %p80 = scmp.eq.s32.totalorder %s15, 0
    %p81 = por %p79, %p80
    %p82 = scmp.ne.s32.totalorder %s68, %s69
    %p83 = scmp.eq.s32.totalorder %s16, 1
    %p84 = por %p82, %p83
    %p86 = scmp.ne.s32.totalorder %s69, %s85
    %p87 = scmp.eq.s32.totalorder %s16, 0
    %p88 = por %p86, %p87
    %s89 = ssub.s32 %s17, %s36
    %s90 = ssub.s32 %s19, %s28
    %s91 = sor.u32 %s89, %s90
    %s92 = ssub.s32 %s18, %s32
    %s93 = sor.u32 %s91, %s92
    %p94 = scmp.eq.s32.totalorder %s93, 0
    %s96 = sadd.s32 %s95, 1
    %s97 = scalar_select %p94, %s95, %s96
    %p100 = pneg %p94
    %p101 = scmp.eq.s32.totalorder %s10, 1
    %p102 = por %p100, %p101
    %p103 = scmp.ne.s32.totalorder %s95, %s98
    %p104 = scmp.eq.s32.totalorder %s10, 0
    %p105 = por %p103, %p104
    %p106 = scmp.ne.s32.totalorder %s95, %s98
    %p107 = scmp.eq.s32.totalorder %s15, 1
    %p108 = por %p106, %p107
    %p109 = scmp.ne.s32.totalorder %s98, %s99
    %p110 = scmp.eq.s32.totalorder %s15, 0
    %p111 = por %p109, %p110
    %p112 = scmp.ne.s32.totalorder %s98, %s99
    %p113 = scmp.eq.s32.totalorder %s16, 1
    %p114 = por %p112, %p113
    %p116 = scmp.ne.s32.totalorder %s99, %s115
    %p117 = scmp.eq.s32.totalorder %s16, 0
    %p118 = por %p116, %p117
    %s119 = ssub.s32 %s17, %s36
    %s120 = ssub.s32 %s18, %s32
    %s121 = sor.u32 %s119, %s120
    %p122 = scmp.eq.s32.totalorder %s121, 0
    %s124 = sadd.s32 %s123, 1
    %s125 = scalar_select %p122, %s123, %s124
    %p128 = pneg %p122
    %p129 = scmp.eq.s32.totalorder %s10, 1
    %p130 = por %p128, %p129
    %p131 = scmp.ne.s32.totalorder %s123, %s126
    %p132 = scmp.eq.s32.totalorder %s10, 0
    %p133 = por %p131, %p132
    %p134 = scmp.ne.s32.totalorder %s123, %s126
    %p135 = scmp.eq.s32.totalorder %s15, 1
    %p136 = por %p134, %p135
    %p137 = scmp.ne.s32.totalorder %s126, %s127
    %p138 = scmp.eq.s32.totalorder %s15, 0
    %p139 = por %p137, %p138
    %p140 = scmp.ne.s32.totalorder %s126, %s127
    %p141 = scmp.eq.s32.totalorder %s16, 1
    %p142 = por %p140, %p141
    %p144 = scmp.ne.s32.totalorder %s127, %s143
    %p145 = scmp.eq.s32.totalorder %s16, 0
    %p146 = por %p144, %p145
    %p147 = scmp.le.s32.totalorder 1, %s10
    %p148 = scmp.lt.s32.totalorder %s10, 3
    %p149 = pnand %p147, %p148
    %p150 = pneg %p149
    // Predicated region
    $region9: #{_lambda_.12} parent=5 // pred_check
      _
    $region10: #{_lambda_.12} parent=5 // pred_check_branch
      %152 = sbr.rel (%p149) target = $region12
    $region11: #{_lambda_.12} parent=5 // pred_region
      %s153 = ssub.s32 %s10, 1
      // Predicated region
      $region13: #{_lambda_.12} parent=11 // pred_check
        %p154 = pneg %p81
      $region14: #{_lambda_.12} parent=11 // pred_check_branch
        %156 = sbr.rel (%p154) target = $region16
      $region15: #{_lambda_.12} parent=11 // pred_region
        %p157 = scmp.lt.s32.totalorder %s21, 0
        %s158 = scalar_select %p157, %s21, 0
        %s159 = smul.addr %s158, 4
        %s160 = scalar_lea.vmem %s1, %s159
      $region16: #{_lambda_.12} parent=11 // pred_fallthru
        _
    $region12: #{_lambda_.12} parent=5 // pred_fallthru
      _
    %p161 = scmp.lt.s32.totalorder %s10, 2
    // Predicated region
    $region17: #{_lambda_.12} parent=5 // pred_check
      %p162 = pneg %p161
    $region18: #{_lambda_.12} parent=5 // pred_check_branch
      %164 = sbr.rel (%p162) target = $region20
    $region19: #{_lambda_.12} parent=5 // pred_region
      // Predicated region
      $region21: #{_lambda_.12} parent=19 // pred_check
        %p165 = pneg %p49
      $region22: #{_lambda_.12} parent=19 // pred_check_branch
        %167 = sbr.rel (%p165) target = $region24
      $region23: #{_lambda_.12} parent=19 // pred_region
        %p168 = scmp.lt.s32.totalorder %s17, 1
        %s169 = scalar_select %p168, %s17, 1
        %s170 = smul.addr %s169, 8
        %s171 = smul.addr %s170, 4
        %s172 = scalar_lea.vmem %s0, %s171
      $region24: #{_lambda_.12} parent=19 // pred_fallthru
        _
    $region20: #{_lambda_.12} parent=5 // pred_fallthru
      _
    %p173 = scmp.le.s32.totalorder 1, %s10
    %p174 = scmp.lt.s32.totalorder %s10, 3
    %p175 = pnand %p173, %p174
    %p176 = pneg %p175
    // Predicated region
    $region25: #{_lambda_.12} parent=5 // pred_check
      _
    $region26: #{_lambda_.12} parent=5 // pred_check_branch
      %178 = sbr.rel (%p175) target = $region28
    $region27: #{_lambda_.12} parent=5 // pred_region
      %s179 = ssub.s32 %s10, 1
      %p180 = scmp.lt.s32.totalorder %s20, 1
      %s181 = scalar_select %p180, %s20, 1
      %s182 = smul.addr %s181, 8
      %s183 = smul.addr %s182, 4
      %s184 = scalar_lea.vmem %s0, %s183
      %p185 = pneg %p55
      %p186 = pneg %p52
      %p187 = scmp.lt.s32.totalorder %s21, 0
      %s188 = scalar_select %p187, %s21, 0
      %s189 = smul.addr %s188, 4
      %s190 = scalar_lea.vmem %s1, %s189
      %p191 = pneg %p81
      %p192 = pneg %p78
      %p193 = pneg %p111
      %p194 = pneg %p108
      %s195 = smul.u32 8, %s22
      %p196 = scmp.lt.s32.totalorder %s20, 1
      %s197 = scalar_select %p196, %s20, 1
      %p198 = scmp.lt.s32.totalorder %s195, 7
      %s199 = scalar_select %p198, %s195, 7
      %p200 = scmp.lt.s32.totalorder %s21, 0
      %s201 = scalar_select %p200, %s21, 0
      %s202 = sadd.s32 %s201, %s199
      %s203 = smul.addr %s197, 8
      %s204 = sadd.s32 %s202, %s203
      %s205 = smul.addr %s204, 4
      %s206 = scalar_lea.vmem %s2, %s205
      %p207 = pneg %p139
      %p208 = pneg %p136
      %p209 = scmp.lt.s32.totalorder %s20, 1
      %s210 = scalar_select %p209, %s20, 1
      %p211 = scmp.lt.s32.totalorder %s21, 0
      %s212 = scalar_select %p211, %s21, 0
      %s213 = sadd.s32 %s212, %s210
      %s214 = smul.addr %s213, 2
      %s215 = scalar_lea.vmem %s3, %s214
      %p216 = scmp.lt.s32.totalorder %s20, 1
      %s217 = scalar_select %p216, %s20, 1
      %s218 = smul.addr %s217, 8
      %s219 = smul.addr %s218, 4
      %s220 = scalar_lea.vmem %s0, %s219
      %p221 = scmp.lt.s32.totalorder %s21, 0
      %s222 = scalar_select %p221, %s21, 0
      %s223 = smul.addr %s222, 4
      %s224 = scalar_lea.vmem %s1, %s223
      %s225 = smul.u32 8, %s22
      %p226 = scmp.lt.s32.totalorder %s20, 1
      %s227 = scalar_select %p226, %s20, 1
      %p228 = scmp.lt.s32.totalorder %s225, 7
      %s229 = scalar_select %p228, %s225, 7
      %p230 = scmp.lt.s32.totalorder %s21, 0
      %s231 = scalar_select %p230, %s21, 0
      %s232 = sadd.s32 %s231, %s229
      %s233 = smul.addr %s227, 8
      %s234 = sadd.s32 %s232, %s233
      %s235 = smul.addr %s234, 4
      %s236 = scalar_lea.vmem %s2, %s235
      %s237 = smul.u32 8, %s22
      %p238 = scmp.lt.s32.totalorder %s20, 1
      %s239 = scalar_select %p238, %s20, 1
      %p240 = scmp.lt.s32.totalorder %s21, 0
      %s241 = scalar_select %p240, %s21, 0
      %s242 = sadd.s32 %s241, %s239
      %s243 = smul.addr %s242, 2
      %s244 = scalar_lea.vmem %s3, %s243
      %s246 = smul.u32 %s22, 8
      %s247 = smul.addr %s246, 4
      %s248 = scalar_lea.vmem %s220, %s247
      %v249 = vld [vmem:[%s248] sm:$0xf]
      %v250 = vld [vmem:[%s248 + $0x4] sm:$0xf]
      %v251 = vld [vmem:[%s248 + $0x8] sm:$0xf]
      %v252 = vld [vmem:[%s248 + $0xc] sm:$0xf]
      %v253 = vld [vmem:[%s248 + $0x10] sm:$0xf]
      %v254 = vld [vmem:[%s248 + $0x14] sm:$0xf]
      %v255 = vld [vmem:[%s248 + $0x18] sm:$0xf]
      %v256 = vld [vmem:[%s248 + $0x1c] sm:$0xf]
      %v257 = vld [vmem:[%s224] sm:$0xf]
      %v258 = vld [vmem:[%s224 + $0x4] sm:$0xf]
      %v259 = vld [vmem:[%s224 + $0x8] sm:$0xf]
      %v260 = vld [vmem:[%s224 + $0xc] sm:$0xf]
      %v261 = vld [vmem:[%s224 + $0x10] sm:$0xf]
      %v262 = vld [vmem:[%s224 + $0x14] sm:$0xf]
      %v263 = vld [vmem:[%s224 + $0x18] sm:$0xf]
      %v264 = vld [vmem:[%s224 + $0x1c] sm:$0xf]
      %v265 = vld [vmem:[%s224 + $0x20] sm:$0xf]
      %v266 = vld [vmem:[%s224 + $0x24] sm:$0xf]
      %v267 = vld [vmem:[%s224 + $0x28] sm:$0xf]
      %v268 = vld [vmem:[%s224 + $0x2c] sm:$0xf]
      %v269 = vld [vmem:[%s224 + $0x30] sm:$0xf]
      %v270 = vld [vmem:[%s224 + $0x34] sm:$0xf]
      %v271 = vld [vmem:[%s224 + $0x38] sm:$0xf]
      %v272 = vld [vmem:[%s224 + $0x3c] sm:$0xf]
      %v281 = vunpack.c.l.b16 %v249
      %v282 = vunpack.c.l.b16 %v250
      %v283 = vunpack.c.l.b16 %v251
      %v284 = vunpack.c.l.b16 %v252
      %v285 = vunpack.c.l.b16 %v253
      %v286 = vunpack.c.l.b16 %v254
      %v287 = vunpack.c.l.b16 %v255
      %v288 = vunpack.c.l.b16 %v256
      %v289 = vpack.c.b16 %v282, %v281
      %v290 = vpack.c.b16 %v284, %v283
      %v291 = vpack.c.b16 %v286, %v285
      %v292 = vpack.c.b16 %v288, %v287
      %v313 = vunpack.c.l.b16 %v257
      %v314 = vunpack.c.l.b16 %v258
      %v315 = vunpack.c.l.b16 %v259
      %v316 = vunpack.c.l.b16 %v260
      %v317 = vunpack.c.l.b16 %v261
      %v318 = vunpack.c.l.b16 %v262
      %v319 = vunpack.c.l.b16 %v263
      %v320 = vunpack.c.l.b16 %v264
      %v321 = vunpack.c.l.b16 %v265
      %v322 = vunpack.c.l.b16 %v266
      %v323 = vunpack.c.l.b16 %v267
      %v324 = vunpack.c.l.b16 %v268
      %v325 = vunpack.c.l.b16 %v269
      %v326 = vunpack.c.l.b16 %v270
      %v327 = vunpack.c.l.b16 %v271
      %v328 = vunpack.c.l.b16 %v272
      %v329 = vpack.c.b16 %v314, %v313
      %v330 = vpack.c.b16 %v316, %v315
      %v331 = vpack.c.b16 %v318, %v317
      %v332 = vpack.c.b16 %v320, %v319
      %v333 = vpack.c.b16 %v322, %v321
      %v334 = vpack.c.b16 %v324, %v323
      %v335 = vpack.c.b16 %v326, %v325
      %v336 = vpack.c.b16 %v328, %v327
      %345 = vmatprep.subr.bf16.mxu0 0
      %346 = vmatpush1.bf16.msra.mxu0 %v329
      %347 = vmatprep.subr.bf16.mxu0 0
      %348 = vmatpush1.bf16.msra.mxu0 %v330
      %349 = vmatprep.subr.bf16.mxu0 0
      %350 = vmatpush1.bf16.msra.mxu0 %v331
      %351 = vmatprep.subr.bf16.mxu0 0
      %352 = vmatpush1.bf16.msra.mxu0 %v332
      %353 = vmatprep.subr.bf16.mxu0 0
      %354 = vmatpush1.bf16.msra.mxu0 %v333
      %355 = vmatprep.subr.bf16.mxu0 0
      %356 = vmatpush1.bf16.msra.mxu0 %v334
      %357 = vmatprep.subr.bf16.mxu0 0
      %358 = vmatpush1.bf16.msra.mxu0 %v335
      %359 = vmatprep.subr.bf16.mxu0 0
      %360 = vmatpush1.bf16.msra.mxu0 %v336
      %361 = vmatprep.subr.bf16.mxu0 0
      %362 = vmatpush1.bf16.msra.mxu0 0
      %363 = vmatprep.subr.bf16.mxu0 0
      %364 = vmatpush1.bf16.msra.mxu0 0
      %365 = vmatprep.subr.bf16.mxu0 0
      %366 = vmatpush1.bf16.msra.mxu0 0
      %367 = vmatprep.subr.bf16.mxu0 0
      %368 = vmatpush1.bf16.msra.mxu0 0
      %369 = vmatprep.subr.bf16.mxu0 0
      %370 = vmatpush1.bf16.msra.mxu0 0
      %371 = vmatprep.subr.bf16.mxu0 0
      %372 = vmatpush1.bf16.msra.mxu0 0
      %373 = vmatprep.subr.bf16.mxu0 0
      %374 = vmatpush1.bf16.msra.mxu0 0
      %375 = vmatprep.subr.bf16.mxu0 0
      %376 = vmatpush1.bf16.msra.mxu0 0
      %377 = vmatprep.mubr.bf16.mxu0 0
      %378 = vmatmul.mubr.bf16.gmra.mrb[0].mxu0 %v289
      %v379 = vpop.f32.mrb[0].mxu0
      %v380 = vadd.f32 0.0, %v379
      %v381 = vpop.f32.mrb[0].mxu0
      %v382 = vpop.f32.mrb[0].mxu0
      %v383 = vadd.f32 0.0, %v382
      %v384 = vpop.f32.mrb[0].mxu0
      %385 = vmatprep.mubr.bf16.mxu0 0
      %386 = vmatmul.mubr.bf16.gmra.mrb[0].mxu0 %v290
      %v387 = vpop.f32.mrb[0].mxu0
      %v388 = vadd.f32 0.0, %v387
      %v389 = vpop.f32.mrb[0].mxu0
      %v390 = vpop.f32.mrb[0].mxu0
      %v391 = vadd.f32 0.0, %v390
      %v392 = vpop.f32.mrb[0].mxu0
      %393 = vmatprep.mubr.bf16.mxu0 0
      %394 = vmatmul.mubr.bf16.gmra.mrb[0].mxu0 %v291
      %v395 = vpop.f32.mrb[0].mxu0
      %v396 = vadd.f32 0.0, %v395
      %v397 = vpop.f32.mrb[0].mxu0
      %v398 = vpop.f32.mrb[0].mxu0
      %v399 = vadd.f32 0.0, %v398
      %v400 = vpop.f32.mrb[0].mxu0
      %401 = vmatprep.mubr.bf16.mxu0 0
      %402 = vmatmul.mubr.bf16.gmra.mrb[0].mxu0 %v292
      %v403 = vpop.f32.mrb[0].mxu0
      %v404 = vadd.f32 0.0, %v403
      %v405 = vpop.f32.mrb[0].mxu0
      %v406 = vpop.f32.mrb[0].mxu0
      %v407 = vadd.f32 0.0, %v406
      %v408 = vpop.f32.mrb[0].mxu0
      %409 = vdwg.mxu0
      %410 = vst [vmem:[#allocation2] sm:$0xff] %v380
      %411 = vst [vmem:[#allocation2 + $0x8] sm:$0xff] %v383
      %412 = vst [vmem:[#allocation2 + $0x10] sm:$0xff] %v388
      %413 = vst [vmem:[#allocation2 + $0x18] sm:$0xff] %v391
      %414 = vst [vmem:[#allocation2 + $0x20] sm:$0xff] %v396
      %415 = vst [vmem:[#allocation2 + $0x28] sm:$0xff] %v399
      %416 = vst [vmem:[#allocation2 + $0x30] sm:$0xff] %v404
      %417 = vst [vmem:[#allocation2 + $0x38] sm:$0xff] %v407
      %v418 = vld [vmem:[#allocation2] sm:$0xff]
      %v419 = vld [vmem:[#allocation2 + $0x8] sm:$0xff]
      %v420 = vld [vmem:[#allocation2 + $0x10] sm:$0xff]
      %v421 = vld [vmem:[#allocation2 + $0x18] sm:$0xff]
      %v422 = vld [vmem:[#allocation2 + $0x20] sm:$0xff]
      %v423 = vld [vmem:[#allocation2 + $0x28] sm:$0xff]
      %v424 = vld [vmem:[#allocation2 + $0x30] sm:$0xff]
      %v425 = vld [vmem:[#allocation2 + $0x38] sm:$0xff]
      %v426 = vpack.c.bf16 %v418, %v418
      %v427 = vpack.c.bf16 %v419, %v419
      %v428 = vpack.c.bf16 %v420, %v420
      %v429 = vpack.c.bf16 %v421, %v421
      %v430 = vpack.c.bf16 %v422, %v422
      %v431 = vpack.c.bf16 %v423, %v423
      %v432 = vpack.c.bf16 %v424, %v424
      %v433 = vpack.c.bf16 %v425, %v425
      %434 = vst [vmem:[%s236] sm:$0xf] %v426
      %435 = vst [vmem:[%s236 + $0x4] sm:$0xf] %v427
      %436 = vst [vmem:[%s236 + $0x8] sm:$0xf] %v428
      %437 = vst [vmem:[%s236 + $0xc] sm:$0xf] %v429
      %438 = vst [vmem:[%s236 + $0x10] sm:$0xf] %v430
      %439 = vst [vmem:[%s236 + $0x14] sm:$0xf] %v431
      %440 = vst [vmem:[%s236 + $0x18] sm:$0xf] %v432
      %441 = vst [vmem:[%s236 + $0x1c] sm:$0xf] %v433
      %v442 = vadd.f32 %v418, %v419
      %v443 = vadd.f32 %v442, %v420
      %v444 = vadd.f32 %v443, %v421
      %v445 = vadd.f32 %v444, %v422
      %v446 = vadd.f32 %v445, %v423
      %v447 = vadd.f32 %v446, %v424
      %v448 = vadd.f32 %v447, %v425
      %v449 = vrot.slane %v448, 4
      %v450 = vadd.f32 %v448, %v449
      %v451 = vrot.slane %v450, 2
      %v452 = vadd.f32 %v450, %v451
      %v453 = vrot.slane %v452, 1
      %v454 = vadd.f32 %v452, %v453
      %v455 = vmul.f32 %v418, %v418
      %v456 = vmul.f32 %v419, %v419
      %v457 = vmul.f32 %v420, %v420
      %v458 = vmul.f32 %v421, %v421
      %v459 = vmul.f32 %v422, %v422
      %v460 = vmul.f32 %v423, %v423
      %v461 = vmul.f32 %v424, %v424
      %v462 = vmul.f32 %v425, %v425
      %v463 = vadd.f32 %v455, %v456
      %v464 = vadd.f32 %v463, %v457
      %v465 = vadd.f32 %v464, %v458
      %v466 = vadd.f32 %v465, %v459
      %v467 = vadd.f32 %v466, %v460
      %v468 = vadd.f32 %v467, %v461
      %v469 = vadd.f32 %v468, %v462
      %v470 = vrot.slane %v469, 4
      %v471 = vadd.f32 %v469, %v470
      %v472 = vrot.slane %v471, 2
      %v473 = vadd.f32 %v471, %v472
      %v474 = vrot.slane %v473, 1
      %v475 = vadd.f32 %v473, %v474
      %vm476 = vcmask 1040384
      %v477 = vsel %vm476, %v454, %v475
      %p478 = scmp.eq.s32.totalorder %s22, 0
      // Predicated region
      $region29: #{_lambda_.12} parent=27 // pred_check
        %p479 = pneg %p478
      $region30: #{_lambda_.12} parent=27 // pred_check_branch
        %481 = sbr.rel (%p479) target = $region32
      $region31: #{_lambda_.12} parent=27 // pred_region
        %482 = vst [vmem:[%s244] sm:$0x3] %v477
      $region32: #{_lambda_.12} parent=27 // pred_fallthru
        _
      %p483 = scmp.ne.s32.totalorder %s22, 0
      // Predicated region
      $region33: #{_lambda_.12} parent=27 // pred_check
        %p484 = pneg %p483
      $region34: #{_lambda_.12} parent=27 // pred_check_branch
        %486 = sbr.rel (%p484) target = $region36
      $region35: #{_lambda_.12} parent=27 // pred_region
        %v487 = vld [vmem:[%s244] sm:$0x3]
        %v488 = vadd.f32 %v487, %v477
        %489 = vst [vmem:[%s244] sm:$0x3] %v488
      $region36: #{_lambda_.12} parent=27 // pred_fallthru
        _
      %s490 = smul.u32 8, %s22
      %p491 = scmp.lt.s32.totalorder %s20, 1
      %s492 = scalar_select %p491, %s20, 1
      %p493 = scmp.lt.s32.totalorder %s490, 7
      %s494 = scalar_select %p493, %s490, 7
      %p495 = scmp.lt.s32.totalorder %s21, 0
      %s496 = scalar_select %p495, %s21, 0
      %s497 = sadd.s32 %s496, %s494
      %s498 = smul.addr %s492, 8
      %s499 = sadd.s32 %s497, %s498
      %s500 = smul.addr %s499, 4
      %s501 = scalar_lea.vmem %s2, %s500
      %p502 = scmp.lt.s32.totalorder %s20, 1
      %s503 = scalar_select %p502, %s20, 1
      %p504 = scmp.lt.s32.totalorder %s21, 0
      %s505 = scalar_select %p504, %s21, 0
      %s506 = sadd.s32 %s505, %s503
      %s507 = smul.addr %s506, 2
      %s508 = scalar_lea.vmem %s3, %s507
      // Predicated region
      $region37: #{_lambda_.12} parent=27 // pred_check
        %p509 = pneg %p108
      $region38: #{_lambda_.12} parent=27 // pred_check_branch
        %511 = sbr.rel (%p509) target = $region40
      $region39: #{_lambda_.12} parent=27 // pred_region
        %s512 = smul.u32 8, %s22
      $region40: #{_lambda_.12} parent=27 // pred_fallthru
        _
      // Predicated region
      $region41: #{_lambda_.12} parent=27 // pred_check
        %p513 = pneg %p136
      $region42: #{_lambda_.12} parent=27 // pred_check_branch
        %515 = sbr.rel (%p513) target = $region44
      $region43: #{_lambda_.12} parent=27 // pred_region
        _
      $region44: #{_lambda_.12} parent=27 // pred_fallthru
        _
    $region28: #{_lambda_.12} parent=5 // pred_fallthru
      _
    %p516 = scmp.le.s32.totalorder 2, %s10
    // Predicated region
    $region45: #{_lambda_.12} parent=5 // pred_check
      %p517 = pneg %p516
    $region46: #{_lambda_.12} parent=5 // pred_check_branch
      %519 = sbr.rel (%p517) target = $region48
    $region47: #{_lambda_.12} parent=5 // pred_region
      %s520 = ssub.s32 %s10, 2
      // Predicated region
      $region49: #{_lambda_.12} parent=47 // pred_check
        %p521 = pneg %p114
      $region50: #{_lambda_.12} parent=47 // pred_check_branch
        %523 = sbr.rel (%p521) target = $region52
      $region51: #{_lambda_.12} parent=47 // pred_region
        %s524 = smul.u32 8, %s25
        %p525 = scmp.lt.s32.totalorder %s23, 1
        %s526 = scalar_select %p525, %s23, 1
        %p527 = scmp.lt.s32.totalorder %s524, 7
        %s528 = scalar_select %p527, %s524, 7
        %p529 = scmp.lt.s32.totalorder %s24, 0
        %s530 = scalar_select %p529, %s24, 0
        %s531 = sadd.s32 %s530, %s528
        %s532 = smul.addr %s526, 8
        %s533 = sadd.s32 %s531, %s532
        %s534 = smul.addr %s533, 4
        %s535 = scalar_lea.vmem %s2, %s534
      $region52: #{_lambda_.12} parent=47 // pred_fallthru
        _
      // Predicated region
      $region53: #{_lambda_.12} parent=47 // pred_check
        %p536 = pneg %p142
      $region54: #{_lambda_.12} parent=47 // pred_check_branch
        %538 = sbr.rel (%p536) target = $region56
      $region55: #{_lambda_.12} parent=47 // pred_region
        %p539 = scmp.lt.s32.totalorder %s23, 1
        %s540 = scalar_select %p539, %s23, 1
        %p541 = scmp.lt.s32.totalorder %s24, 0
        %s542 = scalar_select %p541, %s24, 0
        %s543 = sadd.s32 %s542, %s540
        %s544 = smul.addr %s543, 2
        %s545 = scalar_lea.vmem %s3, %s544
      $region56: #{_lambda_.12} parent=47 // pred_fallthru
        _
    $region48: #{_lambda_.12} parent=5 // pred_fallthru
      _
  $region6: #{_lambda_.12} parent=0 // loop_footer
    %s14 = sadd.s32 1, %s10
  $region7: #{_lambda_.12} parent=0 // loop_footer_branch
    %9 = sbr.rel target = $region3
  $region8: #{_lambda_.12} parent=0 // loop_exit
    _

// kernel: _lambda_.10
$region0: #{_lambda_.10}
  #allocation0 [shape = 'u32[]', space=smem, size = 0x4, offset = 0x4, fixed_abs, tag = 'smem constant byte address 0x4 - core index']
  #allocation1 [shape = 'u32[144,128]{1,0:T(1,128)}', space=vmem, size = 0x12000, scoped, tag = 'internal scratch']
  %s0 = inlined_call_operand.vmem [shape: bf16[128,128], index: 0, kind: input, shape index: {}]
  %s1 = inlined_call_operand.vmem [shape: f32[1,128], index: 1, kind: input, shape index: {}]
  %s2 = inlined_call_operand.vmem [shape: f32[1,128], index: 2, kind: input, shape index: {}]
  %s3 = inlined_call_operand.vmem [shape: bf16[128,128], index: 3, kind: output, shape index: {}]
  %s4 = sld [smem:[#allocation0]]
  $region22: #{_lambda_.10} parent=0
    _
  %s6 = ssub.s32 1, %s4
  %s7 = scalar_select 0, %s6, %s4
  // Predicated region
  $region2: #{_lambda_.10} parent=0 // pred_check
    _
  $region3: #{_lambda_.10} parent=0 // pred_check_branch
    %9 = sbr.rel (0) target = $region5
  $region4: #{_lambda_.10} parent=0 // pred_region
    _
  $region5: #{_lambda_.10} parent=0 // pred_fallthru
    _
  // Predicated region
  $region6: #{_lambda_.10} parent=0 // pred_check
    _
  $region7: #{_lambda_.10} parent=0 // pred_check_branch
    %11 = sbr.rel (0) target = $region9
  $region8: #{_lambda_.10} parent=0 // pred_region
    _
  $region9: #{_lambda_.10} parent=0 // pred_fallthru
    _
  // Predicated region
  $region10: #{_lambda_.10} parent=0 // pred_check
    _
  $region11: #{_lambda_.10} parent=0 // pred_check_branch
    %13 = sbr.rel (0) target = $region13
  $region12: #{_lambda_.10} parent=0 // pred_region
    _
  $region13: #{_lambda_.10} parent=0 // pred_fallthru
    _
  %v14 = vld [vmem:[%s0] sm:$0xf]
  %v15 = vld [vmem:[%s0 + $0x4] sm:$0xf]
  %v16 = vld [vmem:[%s0 + $0x8] sm:$0xf]
  %v17 = vld [vmem:[%s0 + $0xc] sm:$0xf]
  %v18 = vld [vmem:[%s0 + $0x10] sm:$0xf]
  %v19 = vld [vmem:[%s0 + $0x14] sm:$0xf]
  %v20 = vld [vmem:[%s0 + $0x18] sm:$0xf]
  %v21 = vld [vmem:[%s0 + $0x1c] sm:$0xf]
  %v22 = vld [vmem:[%s0 + $0x20] sm:$0xf]
  %v23 = vld [vmem:[%s0 + $0x24] sm:$0xf]
  %v24 = vld [vmem:[%s0 + $0x28] sm:$0xf]
  %v25 = vld [vmem:[%s0 + $0x2c] sm:$0xf]
  %v26 = vld [vmem:[%s0 + $0x30] sm:$0xf]
  %v27 = vld [vmem:[%s0 + $0x34] sm:$0xf]
  %v28 = vld [vmem:[%s0 + $0x38] sm:$0xf]
  %v29 = vld [vmem:[%s0 + $0x3c] sm:$0xf]
  %v30 = vunpack.c.l.bf16 %v14
  %v31 = vunpack.c.l.bf16 %v15
  %v32 = vunpack.c.l.bf16 %v16
  %v33 = vunpack.c.l.bf16 %v17
  %v34 = vunpack.c.l.bf16 %v18
  %v35 = vunpack.c.l.bf16 %v19
  %v36 = vunpack.c.l.bf16 %v20
  %v37 = vunpack.c.l.bf16 %v21
  %v38 = vunpack.c.l.bf16 %v22
  %v39 = vunpack.c.l.bf16 %v23
  %v40 = vunpack.c.l.bf16 %v24
  %v41 = vunpack.c.l.bf16 %v25
  %v42 = vunpack.c.l.bf16 %v26
  %v43 = vunpack.c.l.bf16 %v27
  %v44 = vunpack.c.l.bf16 %v28
  %v45 = vunpack.c.l.bf16 %v29
  %v46 = vld [vmem:[%s1] sm:$0x1]
  %v48 = vlaneseq
  %v49 = vshrl.u32 %v48, 7
  %v50 = vsub.s32 0, %v49
  %v51 = vrot.slane %v46, %v50
  %v53 = vmul.f32 %v30, %v51
  %v54 = vmul.f32 %v31, %v51
  %v55 = vmul.f32 %v32, %v51
  %v56 = vmul.f32 %v33, %v51
  %v57 = vmul.f32 %v34, %v51
  %v58 = vmul.f32 %v35, %v51
  %v59 = vmul.f32 %v36, %v51
  %v60 = vmul.f32 %v37, %v51
  %v61 = vmul.f32 %v38, %v51
  %v62 = vmul.f32 %v39, %v51
  %v63 = vmul.f32 %v40, %v51
  %v64 = vmul.f32 %v41, %v51
  %v65 = vmul.f32 %v42, %v51
  %v66 = vmul.f32 %v43, %v51
  %v67 = vmul.f32 %v44, %v51
  %v68 = vmul.f32 %v45, %v51
  %v69 = vld [vmem:[%s2] sm:$0x1]
  %v71 = vlaneseq
  %v72 = vshrl.u32 %v71, 7
  %v73 = vsub.s32 0, %v72
  %v74 = vrot.slane %v69, %v73
  %v76 = vadd.f32 %v53, %v74
  %v77 = vadd.f32 %v54, %v74
  %v78 = vadd.f32 %v55, %v74
  %v79 = vadd.f32 %v56, %v74
  %v80 = vadd.f32 %v57, %v74
  %v81 = vadd.f32 %v58, %v74
  %v82 = vadd.f32 %v59, %v74
  %v83 = vadd.f32 %v60, %v74
  %v84 = vadd.f32 %v61, %v74
  %v85 = vadd.f32 %v62, %v74
  %v86 = vadd.f32 %v63, %v74
  %v87 = vadd.f32 %v64, %v74
  %v88 = vadd.f32 %v65, %v74
  %v89 = vadd.f32 %v66, %v74
  %v90 = vadd.f32 %v67, %v74
  %v91 = vadd.f32 %v68, %v74
  %v92 = vmax.f32 %v76, 0.0
  %v93 = vmax.f32 %v77, 0.0
  %v94 = vmax.f32 %v78, 0.0
  %v95 = vmax.f32 %v79, 0.0
  %v96 = vmax.f32 %v80, 0.0
  %v97 = vmax.f32 %v81, 0.0
  %v98 = vmax.f32 %v82, 0.0
  %v99 = vmax.f32 %v83, 0.0
  %v100 = vmax.f32 %v84, 0.0
  %v101 = vmax.f32 %v85, 0.0
  %v102 = vmax.f32 %v86, 0.0
  %v103 = vmax.f32 %v87, 0.0
  %v104 = vmax.f32 %v88, 0.0
  %v105 = vmax.f32 %v89, 0.0
  %v106 = vmax.f32 %v90, 0.0
  %v107 = vmax.f32 %v91, 0.0
  %v108 = vpack.c.bf16 %v93, %v92
  %v109 = vpack.c.bf16 %v95, %v94
  %v110 = vpack.c.bf16 %v97, %v96
  %v111 = vpack.c.bf16 %v99, %v98
  %v112 = vpack.c.bf16 %v101, %v100
  %v113 = vpack.c.bf16 %v103, %v102
  %v114 = vpack.c.bf16 %v105, %v104
  %v115 = vpack.c.bf16 %v107, %v106
  %v124 = vunpack.c.l.b16 %v108
  %v125 = vunpack.c.h.b16 %v108
  %v126 = vunpack.c.l.b16 %v109
  %v127 = vunpack.c.h.b16 %v109
  %v128 = vunpack.c.l.b16 %v110
  %v129 = vunpack.c.h.b16 %v110
  %v130 = vunpack.c.l.b16 %v111
  %v131 = vunpack.c.h.b16 %v111
  %v132 = vunpack.c.l.b16 %v112
  %v133 = vunpack.c.h.b16 %v112
  %v134 = vunpack.c.l.b16 %v113
  %v135 = vunpack.c.h.b16 %v113
  %v136 = vunpack.c.l.b16 %v114
  %v137 = vunpack.c.h.b16 %v114
  %v138 = vunpack.c.l.b16 %v115
  %v139 = vunpack.c.h.b16 %v115
  %v140 = vpack.c.b16 %v124, %v124
  %v141 = vpack.c.b16 %v125, %v125
  %v142 = vpack.c.b16 %v126, %v126
  %v143 = vpack.c.b16 %v127, %v127
  %v144 = vpack.c.b16 %v128, %v128
  %v145 = vpack.c.b16 %v129, %v129
  %v146 = vpack.c.b16 %v130, %v130
  %v147 = vpack.c.b16 %v131, %v131
  %v148 = vpack.c.b16 %v132, %v132
  %v149 = vpack.c.b16 %v133, %v133
  %v150 = vpack.c.b16 %v134, %v134
  %v151 = vpack.c.b16 %v135, %v135
  %v152 = vpack.c.b16 %v136, %v136
  %v153 = vpack.c.b16 %v137, %v137
  %v154 = vpack.c.b16 %v138, %v138
  %v155 = vpack.c.b16 %v139, %v139
  %172 = vst [vmem:[%s3] sm:$0xf] %v140
  %173 = vst [vmem:[%s3 + $0x4] sm:$0xf] %v141
  %174 = vst [vmem:[%s3 + $0x8] sm:$0xf] %v142
  %175 = vst [vmem:[%s3 + $0xc] sm:$0xf] %v143
  %176 = vst [vmem:[%s3 + $0x10] sm:$0xf] %v144
  %177 = vst [vmem:[%s3 + $0x14] sm:$0xf] %v145
  %178 = vst [vmem:[%s3 + $0x18] sm:$0xf] %v146
  %179 = vst [vmem:[%s3 + $0x1c] sm:$0xf] %v147
  %180 = vst [vmem:[%s3 + $0x20] sm:$0xf] %v148
  %181 = vst [vmem:[%s3 + $0x24] sm:$0xf] %v149
  %182 = vst [vmem:[%s3 + $0x28] sm:$0xf] %v150
  %183 = vst [vmem:[%s3 + $0x2c] sm:$0xf] %v151
  %184 = vst [vmem:[%s3 + $0x30] sm:$0xf] %v152
  %185 = vst [vmem:[%s3 + $0x34] sm:$0xf] %v153
  %186 = vst [vmem:[%s3 + $0x38] sm:$0xf] %v154
  %187 = vst [vmem:[%s3 + $0x3c] sm:$0xf] %v155
  // Predicated region
  $region14: #{_lambda_.10} parent=0 // pred_check
    _
  $region15: #{_lambda_.10} parent=0 // pred_check_branch
    %189 = sbr.rel (0) target = $region17
  $region16: #{_lambda_.10} parent=0 // pred_region
    _
  $region17: #{_lambda_.10} parent=0 // pred_fallthru
    _
  // Predicated region
  $region18: #{_lambda_.10} parent=0 // pred_check
    _
  $region19: #{_lambda_.10} parent=0 // pred_check_branch
    %191 = sbr.rel (0) target = $region21
  $region20: #{_lambda_.10} parent=0 // pred_region
    _
  $region21: #{_lambda_.10} parent=0 // pred_fallthru
    _

// kernel: _lambda_.13
$region0: #{_lambda_.13}
  #allocation0 [shape = 'u32[]', space=smem, size = 0x4, offset = 0x4, fixed_abs, tag = 'smem constant byte address 0x4 - core index']
  #allocation1 [shape = 'u32[144,128]{1,0:T(1,128)}', space=vmem, size = 0x12000, scoped, tag = 'internal scratch']
  %s0 = inlined_call_operand.vmem [shape: bf16[128,128], index: 0, kind: input, shape index: {}]
  %s1 = inlined_call_operand.vmem [shape: bf16[128,128], index: 1, kind: input, shape index: {}]
  %s2 = inlined_call_operand.vmem [shape: f32[1,128], index: 2, kind: input, shape index: {}]
  %s3 = inlined_call_operand.vmem [shape: f32[1,128], index: 3, kind: input, shape index: {}]
  %s4 = inlined_call_operand.vmem [shape: f32[1,128], index: 4, kind: input, shape index: {}]
  %s5 = inlined_call_operand.vmem [shape: f32[1,128], index: 5, kind: input, shape index: {}]
  %s6 = inlined_call_operand.vmem [shape: bf16[128,128], index: 6, kind: output, shape index: {}]
  %s7 = sld [smem:[#allocation0]]
  $region34: #{_lambda_.13} parent=0
    _
  %s9 = ssub.s32 1, %s7
  %s10 = scalar_select 0, %s9, %s7
  // Predicated region
  $region2: #{_lambda_.13} parent=0 // pred_check
    _
  $region3: #{_lambda_.13} parent=0 // pred_check_branch
    %12 = sbr.rel (0) target = $region5
  $region4: #{_lambda_.13} parent=0 // pred_region
    _
  $region5: #{_lambda_.13} parent=0 // pred_fallthru
    _
  // Predicated region
  $region6: #{_lambda_.13} parent=0 // pred_check
    _
  $region7: #{_lambda_.13} parent=0 // pred_check_branch
    %14 = sbr.rel (0) target = $region9
  $region8: #{_lambda_.13} parent=0 // pred_region
    _
  $region9: #{_lambda_.13} parent=0 // pred_fallthru
    _
  // Predicated region
  $region10: #{_lambda_.13} parent=0 // pred_check
    _
  $region11: #{_lambda_.13} parent=0 // pred_check_branch
    %16 = sbr.rel (0) target = $region13
  $region12: #{_lambda_.13} parent=0 // pred_region
    _
  $region13: #{_lambda_.13} parent=0 // pred_fallthru
    _
  // Predicated region
  $region14: #{_lambda_.13} parent=0 // pred_check
    _
  $region15: #{_lambda_.13} parent=0 // pred_check_branch
    %18 = sbr.rel (0) target = $region17
  $region16: #{_lambda_.13} parent=0 // pred_region
    _
  $region17: #{_lambda_.13} parent=0 // pred_fallthru
    _
  // Predicated region
  $region18: #{_lambda_.13} parent=0 // pred_check
    _
  $region19: #{_lambda_.13} parent=0 // pred_check_branch
    %20 = sbr.rel (0) target = $region21
  $region20: #{_lambda_.13} parent=0 // pred_region
    _
  $region21: #{_lambda_.13} parent=0 // pred_fallthru
    _
  // Predicated region
  $region22: #{_lambda_.13} parent=0 // pred_check
    _
  $region23: #{_lambda_.13} parent=0 // pred_check_branch
    %22 = sbr.rel (0) target = $region25
  $region24: #{_lambda_.13} parent=0 // pred_region
    _
  $region25: #{_lambda_.13} parent=0 // pred_fallthru
    _
  %v23 = vld [vmem:[%s0] sm:$0xf]
  %v24 = vld [vmem:[%s0 + $0x4] sm:$0xf]
  %v25 = vld [vmem:[%s0 + $0x8] sm:$0xf]
  %v26 = vld [vmem:[%s0 + $0xc] sm:$0xf]
  %v27 = vld [vmem:[%s0 + $0x10] sm:$0xf]
  %v28 = vld [vmem:[%s0 + $0x14] sm:$0xf]
  %v29 = vld [vmem:[%s0 + $0x18] sm:$0xf]
  %v30 = vld [vmem:[%s0 + $0x1c] sm:$0xf]
  %v31 = vld [vmem:[%s0 + $0x20] sm:$0xf]
  %v32 = vld [vmem:[%s0 + $0x24] sm:$0xf]
  %v33 = vld [vmem:[%s0 + $0x28] sm:$0xf]
  %v34 = vld [vmem:[%s0 + $0x2c] sm:$0xf]
  %v35 = vld [vmem:[%s0 + $0x30] sm:$0xf]
  %v36 = vld [vmem:[%s0 + $0x34] sm:$0xf]
  %v37 = vld [vmem:[%s0 + $0x38] sm:$0xf]
  %v38 = vld [vmem:[%s0 + $0x3c] sm:$0xf]
  %v39 = vunpack.c.l.bf16 %v23
  %v40 = vunpack.c.l.bf16 %v24
  %v41 = vunpack.c.l.bf16 %v25
  %v42 = vunpack.c.l.bf16 %v26
  %v43 = vunpack.c.l.bf16 %v27
  %v44 = vunpack.c.l.bf16 %v28
  %v45 = vunpack.c.l.bf16 %v29
  %v46 = vunpack.c.l.bf16 %v30
  %v47 = vunpack.c.l.bf16 %v31
  %v48 = vunpack.c.l.bf16 %v32
  %v49 = vunpack.c.l.bf16 %v33
  %v50 = vunpack.c.l.bf16 %v34
  %v51 = vunpack.c.l.bf16 %v35
  %v52 = vunpack.c.l.bf16 %v36
  %v53 = vunpack.c.l.bf16 %v37
  %v54 = vunpack.c.l.bf16 %v38
  %v55 = vld [vmem:[%s2] sm:$0x1]
  %v57 = vlaneseq
  %v58 = vshrl.u32 %v57, 7
  %v59 = vsub.s32 0, %v58
  %v60 = vrot.slane %v55, %v59
  %v62 = vmul.f32 %v39, %v60
  %v63 = vmul.f32 %v40, %v60
  %v64 = vmul.f32 %v41, %v60
  %v65 = vmul.f32 %v42, %v60
  %v66 = vmul.f32 %v43, %v60
  %v67 = vmul.f32 %v44, %v60
  %v68 = vmul.f32 %v45, %v60
  %v69 = vmul.f32 %v46, %v60
  %v70 = vmul.f32 %v47, %v60
  %v71 = vmul.f32 %v48, %v60
  %v72 = vmul.f32 %v49, %v60
  %v73 = vmul.f32 %v50, %v60
  %v74 = vmul.f32 %v51, %v60
  %v75 = vmul.f32 %v52, %v60
  %v76 = vmul.f32 %v53, %v60
  %v77 = vmul.f32 %v54, %v60
  %v78 = vld [vmem:[%s3] sm:$0x1]
  %v80 = vlaneseq
  %v81 = vshrl.u32 %v80, 7
  %v82 = vsub.s32 0, %v81
  %v83 = vrot.slane %v78, %v82
  %v85 = vadd.f32 %v62, %v83
  %v86 = vadd.f32 %v63, %v83
  %v87 = vadd.f32 %v64, %v83
  %v88 = vadd.f32 %v65, %v83
  %v89 = vadd.f32 %v66, %v83
  %v90 = vadd.f32 %v67, %v83
  %v91 = vadd.f32 %v68, %v83
  %v92 = vadd.f32 %v69, %v83
  %v93 = vadd.f32 %v70, %v83
  %v94 = vadd.f32 %v71, %v83
  %v95 = vadd.f32 %v72, %v83
  %v96 = vadd.f32 %v73, %v83
  %v97 = vadd.f32 %v74, %v83
  %v98 = vadd.f32 %v75, %v83
  %v99 = vadd.f32 %v76, %v83
  %v100 = vadd.f32 %v77, %v83
  %v101 = vld [vmem:[%s1] sm:$0xf]
  %v102 = vld [vmem:[%s1 + $0x4] sm:$0xf]
  %v103 = vld [vmem:[%s1 + $0x8] sm:$0xf]
  %v104 = vld [vmem:[%s1 + $0xc] sm:$0xf]
  %v105 = vld [vmem:[%s1 + $0x10] sm:$0xf]
  %v106 = vld [vmem:[%s1 + $0x14] sm:$0xf]
  %v107 = vld [vmem:[%s1 + $0x18] sm:$0xf]
  %v108 = vld [vmem:[%s1 + $0x1c] sm:$0xf]
  %v109 = vld [vmem:[%s1 + $0x20] sm:$0xf]
  %v110 = vld [vmem:[%s1 + $0x24] sm:$0xf]
  %v111 = vld [vmem:[%s1 + $0x28] sm:$0xf]
  %v112 = vld [vmem:[%s1 + $0x2c] sm:$0xf]
  %v113 = vld [vmem:[%s1 + $0x30] sm:$0xf]
  %v114 = vld [vmem:[%s1 + $0x34] sm:$0xf]
  %v115 = vld [vmem:[%s1 + $0x38] sm:$0xf]
  %v116 = vld [vmem:[%s1 + $0x3c] sm:$0xf]
  %v117 = vunpack.c.l.bf16 %v101
  %v118 = vunpack.c.l.bf16 %v102
  %v119 = vunpack.c.l.bf16 %v103
  %v120 = vunpack.c.l.bf16 %v104
  %v121 = vunpack.c.l.bf16 %v105
  %v122 = vunpack.c.l.bf16 %v106
  %v123 = vunpack.c.l.bf16 %v107
  %v124 = vunpack.c.l.bf16 %v108
  %v125 = vunpack.c.l.bf16 %v109
  %v126 = vunpack.c.l.bf16 %v110
  %v127 = vunpack.c.l.bf16 %v111
  %v128 = vunpack.c.l.bf16 %v112
  %v129 = vunpack.c.l.bf16 %v113
  %v130 = vunpack.c.l.bf16 %v114
  %v131 = vunpack.c.l.bf16 %v115
  %v132 = vunpack.c.l.bf16 %v116
  %v133 = vld [vmem:[%s4] sm:$0x1]
  %v135 = vlaneseq
  %v136 = vshrl.u32 %v135, 7
  %v137 = vsub.s32 0, %v136
  %v138 = vrot.slane %v133, %v137
  %v140 = vmul.f32 %v117, %v138
  %v141 = vmul.f32 %v118, %v138
  %v142 = vmul.f32 %v119, %v138
  %v143 = vmul.f32 %v120, %v138
  %v144 = vmul.f32 %v121, %v138
  %v145 = vmul.f32 %v122, %v138
  %v146 = vmul.f32 %v123, %v138
  %v147 = vmul.f32 %v124, %v138
  %v148 = vmul.f32 %v125, %v138
  %v149 = vmul.f32 %v126, %v138
  %v150 = vmul.f32 %v127, %v138
  %v151 = vmul.f32 %v128, %v138
  %v152 = vmul.f32 %v129, %v138
  %v153 = vmul.f32 %v130, %v138
  %v154 = vmul.f32 %v131, %v138
  %v155 = vmul.f32 %v132, %v138
  %v156 = vadd.f32 %v85, %v140
  %v157 = vadd.f32 %v86, %v141
  %v158 = vadd.f32 %v87, %v142
  %v159 = vadd.f32 %v88, %v143
  %v160 = vadd.f32 %v89, %v144
  %v161 = vadd.f32 %v90, %v145
  %v162 = vadd.f32 %v91, %v146
  %v163 = vadd.f32 %v92, %v147
  %v164 = vadd.f32 %v93, %v148
  %v165 = vadd.f32 %v94, %v149
  %v166 = vadd.f32 %v95, %v150
  %v167 = vadd.f32 %v96, %v151
  %v168 = vadd.f32 %v97, %v152
  %v169 = vadd.f32 %v98, %v153
  %v170 = vadd.f32 %v99, %v154
  %v171 = vadd.f32 %v100, %v155
  %v172 = vld [vmem:[%s5] sm:$0x1]
  %v174 = vlaneseq
  %v175 = vshrl.u32 %v174, 7
  %v176 = vsub.s32 0, %v175
  %v177 = vrot.slane %v172, %v176
  %v179 = vadd.f32 %v156, %v177
  %v180 = vadd.f32 %v157, %v177
  %v181 = vadd.f32 %v158, %v177
  %v182 = vadd.f32 %v159, %v177
  %v183 = vadd.f32 %v160, %v177
  %v184 = vadd.f32 %v161, %v177
  %v185 = vadd.f32 %v162, %v177
  %v186 = vadd.f32 %v163, %v177
  %v187 = vadd.f32 %v164, %v177
  %v188 = vadd.f32 %v165, %v177
  %v189 = vadd.f32 %v166, %v177
  %v190 = vadd.f32 %v167, %v177
  %v191 = vadd.f32 %v168, %v177
  %v192 = vadd.f32 %v169, %v177
  %v193 = vadd.f32 %v170, %v177
  %v194 = vadd.f32 %v171, %v177
  %v195 = vmax.f32 %v179, 0.0
  %v196 = vmax.f32 %v180, 0.0
  %v197 = vmax.f32 %v181, 0.0
  %v198 = vmax.f32 %v182, 0.0
  %v199 = vmax.f32 %v183, 0.0
  %v200 = vmax.f32 %v184, 0.0
  %v201 = vmax.f32 %v185, 0.0
  %v202 = vmax.f32 %v186, 0.0
  %v203 = vmax.f32 %v187, 0.0
  %v204 = vmax.f32 %v188, 0.0
  %v205 = vmax.f32 %v189, 0.0
  %v206 = vmax.f32 %v190, 0.0
  %v207 = vmax.f32 %v191, 0.0
  %v208 = vmax.f32 %v192, 0.0
  %v209 = vmax.f32 %v193, 0.0
  %v210 = vmax.f32 %v194, 0.0
  %v211 = vpack.c.bf16 %v196, %v195
  %v212 = vpack.c.bf16 %v198, %v197
  %v213 = vpack.c.bf16 %v200, %v199
  %v214 = vpack.c.bf16 %v202, %v201
  %v215 = vpack.c.bf16 %v204, %v203
  %v216 = vpack.c.bf16 %v206, %v205
  %v217 = vpack.c.bf16 %v208, %v207
  %v218 = vpack.c.bf16 %v210, %v209
  %v227 = vunpack.c.l.b16 %v211
  %v228 = vunpack.c.h.b16 %v211
  %v229 = vunpack.c.l.b16 %v212
  %v230 = vunpack.c.h.b16 %v212
  %v231 = vunpack.c.l.b16 %v213
  %v232 = vunpack.c.h.b16 %v213
  %v233 = vunpack.c.l.b16 %v214
  %v234 = vunpack.c.h.b16 %v214
  %v235 = vunpack.c.l.b16 %v215
  %v236 = vunpack.c.h.b16 %v215
  %v237 = vunpack.c.l.b16 %v216
  %v238 = vunpack.c.h.b16 %v216
  %v239 = vunpack.c.l.b16 %v217
  %v240 = vunpack.c.h.b16 %v217
  %v241 = vunpack.c.l.b16 %v218
  %v242 = vunpack.c.h.b16 %v218
  %v243 = vpack.c.b16 %v227, %v227
  %v244 = vpack.c.b16 %v228, %v228
  %v245 = vpack.c.b16 %v229, %v229
  %v246 = vpack.c.b16 %v230, %v230
  %v247 = vpack.c.b16 %v231, %v231
  %v248 = vpack.c.b16 %v232, %v232
  %v249 = vpack.c.b16 %v233, %v233
  %v250 = vpack.c.b16 %v234, %v234
  %v251 = vpack.c.b16 %v235, %v235
  %v252 = vpack.c.b16 %v236, %v236
  %v253 = vpack.c.b16 %v237, %v237
  %v254 = vpack.c.b16 %v238, %v238
  %v255 = vpack.c.b16 %v239, %v239
  %v256 = vpack.c.b16 %v240, %v240
  %v257 = vpack.c.b16 %v241, %v241
  %v258 = vpack.c.b16 %v242, %v242
  %275 = vst [vmem:[%s6] sm:$0xf] %v243
  %276 = vst [vmem:[%s6 + $0x4] sm:$0xf] %v244
  %277 = vst [vmem:[%s6 + $0x8] sm:$0xf] %v245
  %278 = vst [vmem:[%s6 + $0xc] sm:$0xf] %v246
  %279 = vst [vmem:[%s6 + $0x10] sm:$0xf] %v247
  %280 = vst [vmem:[%s6 + $0x14] sm:$0xf] %v248
  %281 = vst [vmem:[%s6 + $0x18] sm:$0xf] %v249
  %282 = vst [vmem:[%s6 + $0x1c] sm:$0xf] %v250
  %283 = vst [vmem:[%s6 + $0x20] sm:$0xf] %v251
  %284 = vst [vmem:[%s6 + $0x24] sm:$0xf] %v252
  %285 = vst [vmem:[%s6 + $0x28] sm:$0xf] %v253
  %286 = vst [vmem:[%s6 + $0x2c] sm:$0xf] %v254
  %287 = vst [vmem:[%s6 + $0x30] sm:$0xf] %v255
  %288 = vst [vmem:[%s6 + $0x34] sm:$0xf] %v256
  %289 = vst [vmem:[%s6 + $0x38] sm:$0xf] %v257
  %290 = vst [vmem:[%s6 + $0x3c] sm:$0xf] %v258
  // Predicated region
  $region26: #{_lambda_.13} parent=0 // pred_check
    _
  $region27: #{_lambda_.13} parent=0 // pred_check_branch
    %292 = sbr.rel (0) target = $region29
  $region28: #{_lambda_.13} parent=0 // pred_region
    _
  $region29: #{_lambda_.13} parent=0 // pred_fallthru
    _
  // Predicated region
  $region30: #{_lambda_.13} parent=0 // pred_check
    _
  $region31: #{_lambda_.13} parent=0 // pred_check_branch
    %294 = sbr.rel (0) target = $region33
  $region32: #{_lambda_.13} parent=0 // pred_region
    _
  $region33: #{_lambda_.13} parent=0 // pred_fallthru
    _

// kernel: _lambda_.9
$region0: #{_lambda_.9}
  #allocation0 [shape = 'u32[]', space=smem, size = 0x4, offset = 0x4, fixed_abs, tag = 'smem constant byte address 0x4 - core index']
  #allocation1 [shape = 'u32[144,128]{1,0:T(1,128)}', space=vmem, size = 0x12000, scoped, tag = 'internal scratch']
  #allocation2 [shape = 'f32[64,128]{1,0:T(8,128)}', space=vmem, size = 0x8000, scoped, tag = 'scratch operand']
  %s0 = inlined_call_operand.vmem [shape: bf16[2,4,9,9,128], index: 0, kind: input, shape index: {}]
  %s1 = inlined_call_operand.vmem [shape: bf16[3,384,128], index: 1, kind: input, shape index: {}]
  %s2 = inlined_call_operand.vmem [shape: bf16[2,8,8,128], index: 2, kind: output, shape index: {0}]
  %s3 = inlined_call_operand.vmem [shape: f32[2,2,128], index: 3, kind: output, shape index: {1}]
  %4 = xla_tuple %s2, %s3
  %s5 = sld [smem:[#allocation0]]
  $region57: #{_lambda_.9} parent=0
    _
  %s7 = ssub.s32 1, %s5
  %s8 = scalar_select 0, %s7, %s5
  loop: start=0, step=1, limit=4
  $region2: #{_lambda_.9} parent=0 // loop_pre_header
    _
  $region3: #{_lambda_.9} parent=0 // loop_header
    %s10 = sphi 0, %s14
    %p11 = scmp.ge.s32.totalorder %s10, 4
    %s17 = sphi 0, %s36
    %s18 = sphi 0, %s32
    %s19 = sphi 0, %s28
    %s20 = sphi 0, %s17
    %s21 = sphi 0, %s18
    %s22 = sphi 0, %s19
    %s23 = sphi 0, %s20
    %s24 = sphi 0, %s21
    %s25 = sphi 0, %s22
    %s39 = sphi 0, %s41
    %s42 = sphi 0, %s39
    %s43 = sphi 0, %s42
    %s59 = sphi 0, %s43
    %s65 = sphi 0, %s67
    %s68 = sphi 0, %s65
    %s69 = sphi 0, %s68
    %s85 = sphi 0, %s69
    %s95 = sphi 0, %s97
    %s98 = sphi 0, %s95
    %s99 = sphi 0, %s98
    %s115 = sphi 0, %s99
    %s123 = sphi 0, %s125
    %s126 = sphi 0, %s123
    %s127 = sphi 0, %s126
    %s143 = sphi 0, %s127
  $region4: #{_lambda_.9} parent=0 // loop_header_branch
    %13 = sbr.rel (%p11) target = $region8
  $region5: #{_lambda_.9} parent=0 // loop_body
    %s15 = ssub.s32 %s10, 1
    %s16 = ssub.s32 %s10, 2
    %s26 = sadd.s32 1, %s19
    %p27 = scmp.ge.s32.totalorder %s26, 1
    %s28 = scalar_select %p27, 0, %s26
    %s29 = sadd.s32 1, %s18
    %s30 = scalar_select %p27, %s29, %s18
    %p31 = scmp.ge.s32.totalorder %s30, 1
    %s32 = scalar_select %p31, 0, %s30
    %s33 = sadd.s32 1, %s17
    %s34 = scalar_select %p31, %s33, %s17
    %p35 = scmp.ge.s32.totalorder %s34, 2
    %s36 = scalar_select %p35, 0, %s34
    %s37 = ssub.s32 %s17, %s36
    %p38 = scmp.eq.s32.totalorder %s37, 0
    %s40 = sadd.s32 %s39, 1
    %s41 = scalar_select %p38, %s39, %s40
    %p44 = pneg %p38
    %p45 = scmp.eq.s32.totalorder %s10, 1
    %p46 = por %p44, %p45
    %p47 = scmp.ne.s32.totalorder %s39, %s42
    %p48 = scmp.eq.s32.totalorder %s10, 0
    %p49 = por %p47, %p48
    %p50 = scmp.ne.s32.totalorder %s39, %s42
    %p51 = scmp.eq.s32.totalorder %s15, 1
    %p52 = por %p50, %p51
    %p53 = scmp.ne.s32.totalorder %s42, %s43
    %p54 = scmp.eq.s32.totalorder %s15, 0
    %p55 = por %p53, %p54
    %p56 = scmp.ne.s32.totalorder %s42, %s43
    %p57 = scmp.eq.s32.totalorder %s16, 1
    %p58 = por %p56, %p57
    %p60 = scmp.ne.s32.totalorder %s43, %s59
    %p61 = scmp.eq.s32.totalorder %s16, 0
    %p62 = por %p60, %p61
    %s63 = ssub.s32 %s18, %s32
    %p64 = scmp.eq.s32.totalorder %s63, 0
    %s66 = sadd.s32 %s65, 1
    %s67 = scalar_select %p64, %s65, %s66
    %p70 = pneg %p64
    %p71 = scmp.eq.s32.totalorder %s10, 1
    %p72 = por %p70, %p71
    %p73 = scmp.ne.s32.totalorder %s65, %s68
    %p74 = scmp.eq.s32.totalorder %s10, 0
    %p75 = por %p73, %p74
    %p76 = scmp.ne.s32.totalorder %s65, %s68
    %p77 = scmp.eq.s32.totalorder %s15, 1
    %p78 = por %p76, %p77
    %p79 = scmp.ne.s32.totalorder %s68, %s69
    %p80 = scmp.eq.s32.totalorder %s15, 0
    %p81 = por %p79, %p80
    %p82 = scmp.ne.s32.totalorder %s68, %s69
    %p83 = scmp.eq.s32.totalorder %s16, 1
    %p84 = por %p82, %p83
    %p86 = scmp.ne.s32.totalorder %s69, %s85
    %p87 = scmp.eq.s32.totalorder %s16, 0
    %p88 = por %p86, %p87
    %s89 = ssub.s32 %s17, %s36
    %s90 = ssub.s32 %s19, %s28
    %s91 = sor.u32 %s89, %s90
    %s92 = ssub.s32 %s18, %s32
    %s93 = sor.u32 %s91, %s92
    %p94 = scmp.eq.s32.totalorder %s93, 0
    %s96 = sadd.s32 %s95, 1
    %s97 = scalar_select %p94, %s95, %s96
    %p100 = pneg %p94
    %p101 = scmp.eq.s32.totalorder %s10, 1
    %p102 = por %p100, %p101
    %p103 = scmp.ne.s32.totalorder %s95, %s98
    %p104 = scmp.eq.s32.totalorder %s10, 0
    %p105 = por %p103, %p104
    %p106 = scmp.ne.s32.totalorder %s95, %s98
    %p107 = scmp.eq.s32.totalorder %s15, 1
    %p108 = por %p106, %p107
    %p109 = scmp.ne.s32.totalorder %s98, %s99
    %p110 = scmp.eq.s32.totalorder %s15, 0
    %p111 = por %p109, %p110
    %p112 = scmp.ne.s32.totalorder %s98, %s99
    %p113 = scmp.eq.s32.totalorder %s16, 1
    %p114 = por %p112, %p113
    %p116 = scmp.ne.s32.totalorder %s99, %s115
    %p117 = scmp.eq.s32.totalorder %s16, 0
    %p118 = por %p116, %p117
    %s119 = ssub.s32 %s17, %s36
    %s120 = ssub.s32 %s18, %s32
    %s121 = sor.u32 %s119, %s120
    %p122 = scmp.eq.s32.totalorder %s121, 0
    %s124 = sadd.s32 %s123, 1
    %s125 = scalar_select %p122, %s123, %s124
    %p128 = pneg %p122
    %p129 = scmp.eq.s32.totalorder %s10, 1
    %p130 = por %p128, %p129
    %p131 = scmp.ne.s32.totalorder %s123, %s126
    %p132 = scmp.eq.s32.totalorder %s10, 0
    %p133 = por %p131, %p132
    %p134 = scmp.ne.s32.totalorder %s123, %s126
    %p135 = scmp.eq.s32.totalorder %s15, 1
    %p136 = por %p134, %p135
    %p137 = scmp.ne.s32.totalorder %s126, %s127
    %p138 = scmp.eq.s32.totalorder %s15, 0
    %p139 = por %p137, %p138
    %p140 = scmp.ne.s32.totalorder %s126, %s127
    %p141 = scmp.eq.s32.totalorder %s16, 1
    %p142 = por %p140, %p141
    %p144 = scmp.ne.s32.totalorder %s127, %s143
    %p145 = scmp.eq.s32.totalorder %s16, 0
    %p146 = por %p144, %p145
    %p147 = scmp.le.s32.totalorder 1, %s10
    %p148 = scmp.lt.s32.totalorder %s10, 3
    %p149 = pnand %p147, %p148
    %p150 = pneg %p149
    // Predicated region
    $region9: #{_lambda_.9} parent=5 // pred_check
      _
    $region10: #{_lambda_.9} parent=5 // pred_check_branch
      %152 = sbr.rel (%p149) target = $region12
    $region11: #{_lambda_.9} parent=5 // pred_region
      %s153 = ssub.s32 %s10, 1
      // Predicated region
      $region13: #{_lambda_.9} parent=11 // pred_check
        %p154 = pneg %p81
      $region14: #{_lambda_.9} parent=11 // pred_check_branch
        %156 = sbr.rel (%p154) target = $region16
      $region15: #{_lambda_.9} parent=11 // pred_region
        %p157 = scmp.lt.s32.totalorder %s21, 0
        %s158 = scalar_select %p157, %s21, 0
        %s159 = smul.addr %s158, 4
        %s160 = scalar_lea.vmem %s1, %s159
      $region16: #{_lambda_.9} parent=11 // pred_fallthru
        _
    $region12: #{_lambda_.9} parent=5 // pred_fallthru
      _
    %p161 = scmp.lt.s32.totalorder %s10, 2
    // Predicated region
    $region17: #{_lambda_.9} parent=5 // pred_check
      %p162 = pneg %p161
    $region18: #{_lambda_.9} parent=5 // pred_check_branch
      %164 = sbr.rel (%p162) target = $region20
    $region19: #{_lambda_.9} parent=5 // pred_region
      // Predicated region
      $region21: #{_lambda_.9} parent=19 // pred_check
        %p165 = pneg %p49
      $region22: #{_lambda_.9} parent=19 // pred_check_branch
        %167 = sbr.rel (%p165) target = $region24
      $region23: #{_lambda_.9} parent=19 // pred_region
        %p168 = scmp.lt.s32.totalorder %s17, 1
        %s169 = scalar_select %p168, %s17, 1
        %s170 = smul.addr %s169, 72
        %s171 = smul.addr %s170, 4
        %s172 = scalar_lea.vmem %s0, %s171
      $region24: #{_lambda_.9} parent=19 // pred_fallthru
        _
    $region20: #{_lambda_.9} parent=5 // pred_fallthru
      _
    %p173 = scmp.le.s32.totalorder 1, %s10
    %p174 = scmp.lt.s32.totalorder %s10, 3
    %p175 = pnand %p173, %p174
    %p176 = pneg %p175
    // Predicated region
    $region25: #{_lambda_.9} parent=5 // pred_check
      _
    $region26: #{_lambda_.9} parent=5 // pred_check_branch
      %178 = sbr.rel (%p175) target = $region28
    $region27: #{_lambda_.9} parent=5 // pred_region
      %s179 = ssub.s32 %s10, 1
      %p180 = scmp.lt.s32.totalorder %s20, 1
      %s181 = scalar_select %p180, %s20, 1
      %s182 = smul.addr %s181, 72
      %s183 = smul.addr %s182, 4
      %s184 = scalar_lea.vmem %s0, %s183
      %p185 = pneg %p55
      %p186 = pneg %p52
      %p187 = scmp.lt.s32.totalorder %s21, 0
      %s188 = scalar_select %p187, %s21, 0
      %s189 = smul.addr %s188, 4
      %s190 = scalar_lea.vmem %s1, %s189
      %p191 = pneg %p81
      %p192 = pneg %p78
      %p193 = pneg %p111
      %p194 = pneg %p108
      %s195 = smul.u32 8, %s22
      %p196 = scmp.lt.s32.totalorder %s20, 1
      %s197 = scalar_select %p196, %s20, 1
      %p198 = scmp.lt.s32.totalorder %s195, 7
      %s199 = scalar_select %p198, %s195, 7
      %p200 = scmp.lt.s32.totalorder %s21, 0
      %s201 = scalar_select %p200, %s21, 0
      %s202 = sadd.s32 %s201, %s199
      %s203 = smul.addr %s197, 8
      %s204 = sadd.s32 %s202, %s203
      %s205 = smul.addr %s204, 4
      %s206 = scalar_lea.vmem %s2, %s205
      %p207 = pneg %p139
      %p208 = pneg %p136
      %p209 = scmp.lt.s32.totalorder %s20, 1
      %s210 = scalar_select %p209, %s20, 1
      %p211 = scmp.lt.s32.totalorder %s21, 0
      %s212 = scalar_select %p211, %s21, 0
      %s213 = sadd.s32 %s212, %s210
      %s214 = smul.addr %s213, 2
      %s215 = scalar_lea.vmem %s3, %s214
      %p216 = scmp.lt.s32.totalorder %s20, 1
      %s217 = scalar_select %p216, %s20, 1
      %s218 = smul.addr %s217, 72
      %s219 = smul.addr %s218, 4
      %s220 = scalar_lea.vmem %s0, %s219
      %p221 = scmp.lt.s32.totalorder %s21, 0
      %s222 = scalar_select %p221, %s21, 0
      %s223 = smul.addr %s222, 4
      %s224 = scalar_lea.vmem %s1, %s223
      %s225 = smul.u32 8, %s22
      %p226 = scmp.lt.s32.totalorder %s20, 1
      %s227 = scalar_select %p226, %s20, 1
      %p228 = scmp.lt.s32.totalorder %s225, 7
      %s229 = scalar_select %p228, %s225, 7
      %p230 = scmp.lt.s32.totalorder %s21, 0
      %s231 = scalar_select %p230, %s21, 0
      %s232 = sadd.s32 %s231, %s229
      %s233 = smul.addr %s227, 8
      %s234 = sadd.s32 %s232, %s233
      %s235 = smul.addr %s234, 4
      %s236 = scalar_lea.vmem %s2, %s235
      %s237 = smul.u32 8, %s22
      %p238 = scmp.lt.s32.totalorder %s20, 1
      %s239 = scalar_select %p238, %s20, 1
      %p240 = scmp.lt.s32.totalorder %s21, 0
      %s241 = scalar_select %p240, %s21, 0
      %s242 = sadd.s32 %s241, %s239
      %s243 = smul.addr %s242, 2
      %s244 = scalar_lea.vmem %s3, %s243
      %s246 = smul.u32 %s22, 8
      %s247 = smul.u32 %s246, 2
      %s248 = smul.addr %s247, 4
      %s249 = scalar_lea.vmem %s220, %s248
      %v250 = vld [vmem:[%s249] sm:$0xf]
      %v251 = vld [vmem:[%s249 + $0x8] sm:$0xf]
      %v252 = vld [vmem:[%s249 + $0x10] sm:$0xf]
      %v253 = vld [vmem:[%s249 + $0x18] sm:$0xf]
      %v254 = vld [vmem:[%s249 + $0x20] sm:$0xf]
      %v255 = vld [vmem:[%s249 + $0x28] sm:$0xf]
      %v256 = vld [vmem:[%s249 + $0x30] sm:$0xf]
      %v257 = vld [vmem:[%s249 + $0x38] sm:$0xf]
      %s258 = sadd.s32 %s247, 18
      %s259 = smul.addr %s258, 4
      %s260 = scalar_lea.vmem %s220, %s259
      %v261 = vld [vmem:[%s260] sm:$0xf]
      %v262 = vld [vmem:[%s260 + $0x8] sm:$0xf]
      %v263 = vld [vmem:[%s260 + $0x10] sm:$0xf]
      %v264 = vld [vmem:[%s260 + $0x18] sm:$0xf]
      %v265 = vld [vmem:[%s260 + $0x20] sm:$0xf]
      %v266 = vld [vmem:[%s260 + $0x28] sm:$0xf]
      %v267 = vld [vmem:[%s260 + $0x30] sm:$0xf]
      %v268 = vld [vmem:[%s260 + $0x38] sm:$0xf]
      %v269 = vld [vmem:[%s249 + $0x4] sm:$0x1]
      %v270 = vld [vmem:[%s249 + $0xc] sm:$0x1]
      %v271 = vld [vmem:[%s249 + $0x14] sm:$0x1]
      %v272 = vld [vmem:[%s249 + $0x1c] sm:$0x1]
      %v273 = vld [vmem:[%s249 + $0x24] sm:$0x1]
      %v274 = vld [vmem:[%s249 + $0x2c] sm:$0x1]
      %v275 = vld [vmem:[%s249 + $0x34] sm:$0x1]
      %v276 = vld [vmem:[%s249 + $0x3c] sm:$0x1]
      %vm277 = vsmask.f32 3328
      %vm278 = vsmask.f32 7440
      %vm279 = vmor %vm277, %vm278
      %v281 = vshrl.u32 %v250, 16
      %v283 = vrot.slane %v281, 4
      %v284 = vshll.u32 %v250, 16
      %v286 = vrot.slane %v284, 5
      %v287 = vor.u32 %v283, %v286
      %v288 = vrot.slane %v287, 4
      %v290 = vshll.u32 %v269, 16
      %v292 = vrot.slane %v290, 5
      %v293 = vsel %vm279, %v288, %v292
      %v295 = vshrl.u32 %v251, 16
      %v297 = vrot.slane %v295, 4
      %v298 = vshll.u32 %v251, 16
      %v300 = vrot.slane %v298, 5
      %v301 = vor.u32 %v297, %v300
      %v302 = vrot.slane %v301, 4
      %v304 = vshll.u32 %v270, 16
      %v306 = vrot.slane %v304, 5
      %v307 = vsel %vm279, %v302, %v306
      %v309 = vshrl.u32 %v252, 16
      %v311 = vrot.slane %v309, 4
      %v312 = vshll.u32 %v252, 16
      %v314 = vrot.slane %v312, 5
      %v315 = vor.u32 %v311, %v314
      %v316 = vrot.slane %v315, 4
      %v318 = vshll.u32 %v271, 16
      %v320 = vrot.slane %v318, 5
      %v321 = vsel %vm279, %v316, %v320
      %v323 = vshrl.u32 %v253, 16
      %v325 = vrot.slane %v323, 4
      %v326 = vshll.u32 %v253, 16
      %v328 = vrot.slane %v326, 5
      %v329 = vor.u32 %v325, %v328
      %v330 = vrot.slane %v329, 4
      %v332 = vshll.u32 %v272, 16
      %v334 = vrot.slane %v332, 5
      %v335 = vsel %vm279, %v330, %v334
      %v337 = vshrl.u32 %v254, 16
      %v339 = vrot.slane %v337, 4
      %v340 = vshll.u32 %v254, 16
      %v342 = vrot.slane %v340, 5
      %v343 = vor.u32 %v339, %v342
      %v344 = vrot.slane %v343, 4
      %v346 = vshll.u32 %v273, 16
      %v348 = vrot.slane %v346, 5
      %v349 = vsel %vm279, %v344, %v348
      %v351 = vshrl.u32 %v255, 16
      %v353 = vrot.slane %v351, 4
      %v354 = vshll.u32 %v255, 16
      %v356 = vrot.slane %v354, 5
      %v357 = vor.u32 %v353, %v356
      %v358 = vrot.slane %v357, 4
      %v360 = vshll.u32 %v274, 16
      %v362 = vrot.slane %v360, 5
      %v363 = vsel %vm279, %v358, %v362
      %v365 = vshrl.u32 %v256, 16
      %v367 = vrot.slane %v365, 4
      %v368 = vshll.u32 %v256, 16
      %v370 = vrot.slane %v368, 5
      %v371 = vor.u32 %v367, %v370
      %v372 = vrot.slane %v371, 4
      %v374 = vshll.u32 %v275, 16
      %v376 = vrot.slane %v374, 5
      %v377 = vsel %vm279, %v372, %v376
      %v379 = vshrl.u32 %v257, 16
      %v381 = vrot.slane %v379, 4
      %v382 = vshll.u32 %v257, 16
      %v384 = vrot.slane %v382, 5
      %v385 = vor.u32 %v381, %v384
      %v386 = vrot.slane %v385, 4
      %v388 = vshll.u32 %v276, 16
      %v390 = vrot.slane %v388, 5
      %v391 = vsel %vm279, %v386, %v390
      %v400 = vunpack.c.l.b16 %v250
      %v401 = vunpack.c.l.b16 %v251
      %v402 = vunpack.c.l.b16 %v252
      %v403 = vunpack.c.l.b16 %v253
      %v404 = vunpack.c.l.b16 %v254
      %v405 = vunpack.c.l.b16 %v255
      %v406 = vunpack.c.l.b16 %v256
      %v407 = vunpack.c.l.b16 %v257
      %v408 = vpack.c.b16 %v401, %v400
      %v409 = vpack.c.b16 %v403, %v402
      %v410 = vpack.c.b16 %v405, %v404
      %v411 = vpack.c.b16 %v407, %v406
      %v424 = vunpack.c.l.b16 %v261
      %v425 = vunpack.c.l.b16 %v262
      %v426 = vunpack.c.l.b16 %v263
      %v427 = vunpack.c.l.b16 %v264
      %v428 = vunpack.c.l.b16 %v265
      %v429 = vunpack.c.l.b16 %v266
      %v430 = vunpack.c.l.b16 %v267
      %v431 = vunpack.c.l.b16 %v268
      %v432 = vpack.c.b16 %v425, %v424
      %v433 = vpack.c.b16 %v427, %v426
      %v434 = vpack.c.b16 %v429, %v428
      %v435 = vpack.c.b16 %v431, %v430
      %v440 = vunpack.c.l.b16 %v293
      %v441 = vunpack.c.l.b16 %v307
      %v442 = vunpack.c.l.b16 %v321
      %v443 = vunpack.c.l.b16 %v335
      %v444 = vunpack.c.l.b16 %v349
      %v445 = vunpack.c.l.b16 %v363
      %v446 = vunpack.c.l.b16 %v377
      %v447 = vunpack.c.l.b16 %v391
      %v448 = vpack.c.b16 %v441, %v440
      %v449 = vpack.c.b16 %v443, %v442
      %v450 = vpack.c.b16 %v445, %v444
      %v451 = vpack.c.b16 %v447, %v446
      %v456 = vld [vmem:[%s224] sm:$0xf]
      %v457 = vld [vmem:[%s224 + $0x4] sm:$0xf]
      %v458 = vld [vmem:[%s224 + $0x8] sm:$0xf]
      %v459 = vld [vmem:[%s224 + $0xc] sm:$0xf]
      %v460 = vld [vmem:[%s224 + $0x10] sm:$0xf]
      %v461 = vld [vmem:[%s224 + $0x14] sm:$0xf]
      %v462 = vld [vmem:[%s224 + $0x18] sm:$0xf]
      %v463 = vld [vmem:[%s224 + $0x1c] sm:$0xf]
      %v464 = vld [vmem:[%s224 + $0x20] sm:$0xf]
      %v465 = vld [vmem:[%s224 + $0x24] sm:$0xf]
      %v466 = vld [vmem:[%s224 + $0x28] sm:$0xf]
      %v467 = vld [vmem:[%s224 + $0x2c] sm:$0xf]
      %v468 = vld [vmem:[%s224 + $0x30] sm:$0xf]
      %v469 = vld [vmem:[%s224 + $0x34] sm:$0xf]
      %v470 = vld [vmem:[%s224 + $0x38] sm:$0xf]
      %v471 = vld [vmem:[%s224 + $0x3c] sm:$0xf]
      %v472 = vld [vmem:[%s224 + $0x40] sm:$0xf]
      %v473 = vld [vmem:[%s224 + $0x44] sm:$0xf]
      %v474 = vld [vmem:[%s224 + $0x48] sm:$0xf]
      %v475 = vld [vmem:[%s224 + $0x4c] sm:$0xf]
      %v476 = vld [vmem:[%s224 + $0x50] sm:$0xf]
      %v477 = vld [vmem:[%s224 + $0x54] sm:$0xf]
      %v478 = vld [vmem:[%s224 + $0x58] sm:$0xf]
      %v479 = vld [vmem:[%s224 + $0x5c] sm:$0xf]
      %v480 = vld [vmem:[%s224 + $0x60] sm:$0xf]
      %v481 = vld [vmem:[%s224 + $0x64] sm:$0xf]
      %v482 = vld [vmem:[%s224 + $0x68] sm:$0xf]
      %v483 = vld [vmem:[%s224 + $0x6c] sm:$0xf]
      %v484 = vld [vmem:[%s224 + $0x70] sm:$0xf]
      %v485 = vld [vmem:[%s224 + $0x74] sm:$0xf]
      %v486 = vld [vmem:[%s224 + $0x78] sm:$0xf]
      %v487 = vld [vmem:[%s224 + $0x7c] sm:$0xf]
      %v488 = vld [vmem:[%s224 + $0x80] sm:$0xf]
      %v489 = vld [vmem:[%s224 + $0x84] sm:$0xf]
      %v490 = vld [vmem:[%s224 + $0x88] sm:$0xf]
      %v491 = vld [vmem:[%s224 + $0x8c] sm:$0xf]
      %v492 = vld [vmem:[%s224 + $0x90] sm:$0xf]
      %v493 = vld [vmem:[%s224 + $0x94] sm:$0xf]
      %v494 = vld [vmem:[%s224 + $0x98] sm:$0xf]
      %v495 = vld [vmem:[%s224 + $0x9c] sm:$0xf]
      %v496 = vld [vmem:[%s224 + $0xa0] sm:$0xf]
      %v497 = vld [vmem:[%s224 + $0xa4] sm:$0xf]
      %v498 = vld [vmem:[%s224 + $0xa8] sm:$0xf]
      %v499 = vld [vmem:[%s224 + $0xac] sm:$0xf]
      %v500 = vld [vmem:[%s224 + $0xb0] sm:$0xf]
      %v501 = vld [vmem:[%s224 + $0xb4] sm:$0xf]
      %v502 = vld [vmem:[%s224 + $0xb8] sm:$0xf]
      %v503 = vld [vmem:[%s224 + $0xbc] sm:$0xf]
      %v552 = vunpack.c.l.b16 %v456
      %v553 = vunpack.c.l.b16 %v457
      %v554 = vunpack.c.l.b16 %v458
      %v555 = vunpack.c.l.b16 %v459
      %v556 = vunpack.c.l.b16 %v460
      %v557 = vunpack.c.l.b16 %v461
      %v558 = vunpack.c.l.b16 %v462
      %v559 = vunpack.c.l.b16 %v463
      %v560 = vunpack.c.l.b16 %v464
      %v561 = vunpack.c.l.b16 %v465
      %v562 = vunpack.c.l.b16 %v466
      %v563 = vunpack.c.l.b16 %v467
      %v564 = vunpack.c.l.b16 %v468
      %v565 = vunpack.c.l.b16 %v469
      %v566 = vunpack.c.l.b16 %v470
      %v567 = vunpack.c.l.b16 %v471
      %v568 = vunpack.c.l.b16 %v472
      %v569 = vunpack.c.l.b16 %v473
      %v570 = vunpack.c.l.b16 %v474
      %v571 = vunpack.c.l.b16 %v475
      %v572 = vunpack.c.l.b16 %v476
      %v573 = vunpack.c.l.b16 %v477
      %v574 = vunpack.c.l.b16 %v478
      %v575 = vunpack.c.l.b16 %v479
      %v576 = vunpack.c.l.b16 %v480
      %v577 = vunpack.c.l.b16 %v481
      %v578 = vunpack.c.l.b16 %v482
      %v579 = vunpack.c.l.b16 %v483
      %v580 = vunpack.c.l.b16 %v484
      %v581 = vunpack.c.l.b16 %v485
      %v582 = vunpack.c.l.b16 %v486
      %v583 = vunpack.c.l.b16 %v487
      %v584 = vunpack.c.l.b16 %v488
      %v585 = vunpack.c.l.b16 %v489
      %v586 = vunpack.c.l.b16 %v490
      %v587 = vunpack.c.l.b16 %v491
      %v588 = vunpack.c.l.b16 %v492
      %v589 = vunpack.c.l.b16 %v493
      %v590 = vunpack.c.l.b16 %v494
      %v591 = vunpack.c.l.b16 %v495
      %v592 = vunpack.c.l.b16 %v496
      %v593 = vunpack.c.l.b16 %v497
      %v594 = vunpack.c.l.b16 %v498
      %v595 = vunpack.c.l.b16 %v499
      %v596 = vunpack.c.l.b16 %v500
      %v597 = vunpack.c.l.b16 %v501
      %v598 = vunpack.c.l.b16 %v502
      %v599 = vunpack.c.l.b16 %v503
      %v600 = vpack.c.b16 %v553, %v552
      %v601 = vpack.c.b16 %v555, %v554
      %v602 = vpack.c.b16 %v557, %v556
      %v603 = vpack.c.b16 %v559, %v558
      %v604 = vpack.c.b16 %v561, %v560
      %v605 = vpack.c.b16 %v563, %v562
      %v606 = vpack.c.b16 %v565, %v564
      %v607 = vpack.c.b16 %v567, %v566
      %v608 = vpack.c.b16 %v569, %v568
      %v609 = vpack.c.b16 %v571, %v570
      %v610 = vpack.c.b16 %v573, %v572
      %v611 = vpack.c.b16 %v575, %v574
      %v612 = vpack.c.b16 %v577, %v576
      %v613 = vpack.c.b16 %v579, %v578
      %v614 = vpack.c.b16 %v581, %v580
      %v615 = vpack.c.b16 %v583, %v582
      %v616 = vpack.c.b16 %v585, %v584
      %v617 = vpack.c.b16 %v587, %v586
      %v618 = vpack.c.b16 %v589, %v588
      %v619 = vpack.c.b16 %v591, %v590
      %v620 = vpack.c.b16 %v593, %v592
      %v621 = vpack.c.b16 %v595, %v594
      %v622 = vpack.c.b16 %v597, %v596
      %v623 = vpack.c.b16 %v599, %v598
      %648 = vmatprep.subr.bf16.mxu0 0
      %649 = vmatpush1.bf16.msra.mxu0 %v600
      %650 = vmatprep.subr.bf16.mxu0 0
      %651 = vmatpush1.bf16.msra.mxu0 %v601
      %652 = vmatprep.subr.bf16.mxu0 0
      %653 = vmatpush1.bf16.msra.mxu0 %v602
      %654 = vmatprep.subr.bf16.mxu0 0
      %655 = vmatpush1.bf16.msra.mxu0 %v603
      %656 = vmatprep.subr.bf16.mxu0 0
      %657 = vmatpush1.bf16.msra.mxu0 %v604
      %658 = vmatprep.subr.bf16.mxu0 0
      %659 = vmatpush1.bf16.msra.mxu0 %v605
      %660 = vmatprep.subr.bf16.mxu0 0
      %661 = vmatpush1.bf16.msra.mxu0 %v606
      %662 = vmatprep.subr.bf16.mxu0 0
      %663 = vmatpush1.bf16.msra.mxu0 %v607
      %664 = vmatprep.subr.bf16.mxu0 0
      %665 = vmatpush1.bf16.msra.mxu0 %v608
      %666 = vmatprep.subr.bf16.mxu0 0
      %667 = vmatpush1.bf16.msra.mxu0 %v609
      %668 = vmatprep.subr.bf16.mxu0 0
      %669 = vmatpush1.bf16.msra.mxu0 %v610
      %670 = vmatprep.subr.bf16.mxu0 0
      %671 = vmatpush1.bf16.msra.mxu0 %v611
      %672 = vmatprep.subr.bf16.mxu0 0
      %673 = vmatpush1.bf16.msra.mxu0 %v612
      %674 = vmatprep.subr.bf16.mxu0 0
      %675 = vmatpush1.bf16.msra.mxu0 %v613
      %676 = vmatprep.subr.bf16.mxu0 0
      %677 = vmatpush1.bf16.msra.mxu0 %v614
      %678 = vmatprep.subr.bf16.mxu0 0
      %679 = vmatpush1.bf16.msra.mxu0 %v615
      %680 = vmatprep.mubr.bf16.mxu0 %v432
      %681 = vmatmul.mubr.bf16.gmra.mrb[0].mxu0 %v408
      %v682 = vpop.f32.mrb[0].mxu0
      %v683 = vadd.f32 0.0, %v682
      %v684 = vpop.f32.mrb[0].mxu0
      %v685 = vpop.f32.mrb[0].mxu0
      %v686 = vadd.f32 0.0, %v685
      %v687 = vpop.f32.mrb[0].mxu0
      %688 = vmatprep.mubr.bf16.mxu0 %v433
      %689 = vmatmul.mubr.bf16.gmra.mrb[0].mxu0 %v409
      %v690 = vpop.f32.mrb[0].mxu0
      %v691 = vadd.f32 0.0, %v690
      %v692 = vpop.f32.mrb[0].mxu0
      %v693 = vpop.f32.mrb[0].mxu0
      %v694 = vadd.f32 0.0, %v693
      %v695 = vpop.f32.mrb[0].mxu0
      %696 = vmatprep.mubr.bf16.mxu0 %v434
      %697 = vmatmul.mubr.bf16.gmra.mrb[0].mxu0 %v410
      %v698 = vpop.f32.mrb[0].mxu0
      %v699 = vadd.f32 0.0, %v698
      %v700 = vpop.f32.mrb[0].mxu0
      %v701 = vpop.f32.mrb[0].mxu0
      %v702 = vadd.f32 0.0, %v701
      %v703 = vpop.f32.mrb[0].mxu0
      %704 = vmatprep.mubr.bf16.mxu0 %v435
      %705 = vmatmul.mubr.bf16.gmra.mrb[0].mxu0 %v411
      %v706 = vpop.f32.mrb[0].mxu0
      %v707 = vadd.f32 0.0, %v706
      %v708 = vpop.f32.mrb[0].mxu0
      %v709 = vpop.f32.mrb[0].mxu0
      %v710 = vadd.f32 0.0, %v709
      %v711 = vpop.f32.mrb[0].mxu0
      %712 = vdwg.mxu0
      %713 = vmatprep.subr.bf16.mxu0 0
      %714 = vmatpush1.bf16.msra.mxu0 %v616
      %715 = vmatprep.subr.bf16.mxu0 0
      %716 = vmatpush1.bf16.msra.mxu0 %v617
      %717 = vmatprep.subr.bf16.mxu0 0
      %718 = vmatpush1.bf16.msra.mxu0 %v618
      %719 = vmatprep.subr.bf16.mxu0 0
      %720 = vmatpush1.bf16.msra.mxu0 %v619
      %721 = vmatprep.subr.bf16.mxu0 0
      %722 = vmatpush1.bf16.msra.mxu0 %v620
      %723 = vmatprep.subr.bf16.mxu0 0
      %724 = vmatpush1.bf16.msra.mxu0 %v621
      %725 = vmatprep.subr.bf16.mxu0 0
      %726 = vmatpush1.bf16.msra.mxu0 %v622
      %727 = vmatprep.subr.bf16.mxu0 0
      %728 = vmatpush1.bf16.msra.mxu0 %v623
      %729 = vmatprep.subr.bf16.mxu0 0
      %730 = vmatpush1.bf16.msra.mxu0 0
      %731 = vmatprep.subr.bf16.mxu0 0
      %732 = vmatpush1.bf16.msra.mxu0 0
      %733 = vmatprep.subr.bf16.mxu0 0
      %734 = vmatpush1.bf16.msra.mxu0 0
      %735 = vmatprep.subr.bf16.mxu0 0
      %736 = vmatpush1.bf16.msra.mxu0 0
      %737 = vmatprep.subr.bf16.mxu0 0
      %738 = vmatpush1.bf16.msra.mxu0 0
      %739 = vmatprep.subr.bf16.mxu0 0
      %740 = vmatpush1.bf16.msra.mxu0 0
      %741 = vmatprep.subr.bf16.mxu0 0
      %742 = vmatpush1.bf16.msra.mxu0 0
      %743 = vmatprep.subr.bf16.mxu0 0
      %744 = vmatpush1.bf16.msra.mxu0 0
      %745 = vmatprep.mubr.bf16.mxu0 0
      %746 = vmatmul.mubr.bf16.gmra.mrb[0].mxu0 %v448
      %v747 = vpop.f32.mrb[0].mxu0
      %v748 = vadd.f32 %v683, %v747
      %v749 = vpop.f32.mrb[0].mxu0
      %v750 = vpop.f32.mrb[0].mxu0
      %v751 = vadd.f32 %v686, %v750
      %v752 = vpop.f32.mrb[0].mxu0
      %753 = vmatprep.mubr.bf16.mxu0 0
      %754 = vmatmul.mubr.bf16.gmra.mrb[0].mxu0 %v449
      %v755 = vpop.f32.mrb[0].mxu0
      %v756 = vadd.f32 %v691, %v755
      %v757 = vpop.f32.mrb[0].mxu0
      %v758 = vpop.f32.mrb[0].mxu0
      %v759 = vadd.f32 %v694, %v758
      %v760 = vpop.f32.mrb[0].mxu0
      %761 = vmatprep.mubr.bf16.mxu0 0
      %762 = vmatmul.mubr.bf16.gmra.mrb[0].mxu0 %v450
      %v763 = vpop.f32.mrb[0].mxu0
      %v764 = vadd.f32 %v699, %v763
      %v765 = vpop.f32.mrb[0].mxu0
      %v766 = vpop.f32.mrb[0].mxu0
      %v767 = vadd.f32 %v702, %v766
      %v768 = vpop.f32.mrb[0].mxu0
      %769 = vmatprep.mubr.bf16.mxu0 0
      %770 = vmatmul.mubr.bf16.gmra.mrb[0].mxu0 %v451
      %v771 = vpop.f32.mrb[0].mxu0
      %v772 = vadd.f32 %v707, %v771
      %v773 = vpop.f32.mrb[0].mxu0
      %v774 = vpop.f32.mrb[0].mxu0
      %v775 = vadd.f32 %v710, %v774
      %v776 = vpop.f32.mrb[0].mxu0
      %777 = vdwg.mxu0
      %778 = vst [vmem:[#allocation2] sm:$0xff] %v748
      %779 = vst [vmem:[#allocation2 + $0x8] sm:$0xff] %v751
      %780 = vst [vmem:[#allocation2 + $0x10] sm:$0xff] %v756
      %781 = vst [vmem:[#allocation2 + $0x18] sm:$0xff] %v759
      %782 = vst [vmem:[#allocation2 + $0x20] sm:$0xff] %v764
      %783 = vst [vmem:[#allocation2 + $0x28] sm:$0xff] %v767
      %784 = vst [vmem:[#allocation2 + $0x30] sm:$0xff] %v772
      %785 = vst [vmem:[#allocation2 + $0x38] sm:$0xff] %v775
      %s786 = sadd.s32 %s247, 36
      %s787 = smul.addr %s786, 4
      %s788 = scalar_lea.vmem %s220, %s787
      %v789 = vld [vmem:[%s788] sm:$0xf]
      %v790 = vld [vmem:[%s788 + $0x8] sm:$0xf]
      %v791 = vld [vmem:[%s788 + $0x10] sm:$0xf]
      %v792 = vld [vmem:[%s788 + $0x18] sm:$0xf]
      %v793 = vld [vmem:[%s788 + $0x20] sm:$0xf]
      %v794 = vld [vmem:[%s788 + $0x28] sm:$0xf]
      %v795 = vld [vmem:[%s788 + $0x30] sm:$0xf]
      %v796 = vld [vmem:[%s788 + $0x38] sm:$0xf]
      %s797 = sadd.s32 %s247, 54
      %s798 = smul.addr %s797, 4
      %s799 = scalar_lea.vmem %s220, %s798
      %v800 = vld [vmem:[%s799] sm:$0xf]
      %v801 = vld [vmem:[%s799 + $0x8] sm:$0xf]
      %v802 = vld [vmem:[%s799 + $0x10] sm:$0xf]
      %v803 = vld [vmem:[%s799 + $0x18] sm:$0xf]
      %v804 = vld [vmem:[%s799 + $0x20] sm:$0xf]
      %v805 = vld [vmem:[%s799 + $0x28] sm:$0xf]
      %v806 = vld [vmem:[%s799 + $0x30] sm:$0xf]
      %v807 = vld [vmem:[%s799 + $0x38] sm:$0xf]
      %v808 = vld [vmem:[%s788 + $0x4] sm:$0x1]
      %v809 = vld [vmem:[%s788 + $0xc] sm:$0x1]
      %v810 = vld [vmem:[%s788 + $0x14] sm:$0x1]
      %v811 = vld [vmem:[%s788 + $0x1c] sm:$0x1]
      %v812 = vld [vmem:[%s788 + $0x24] sm:$0x1]
      %v813 = vld [vmem:[%s788 + $0x2c] sm:$0x1]
      %v814 = vld [vmem:[%s788 + $0x34] sm:$0x1]
      %v815 = vld [vmem:[%s788 + $0x3c] sm:$0x1]
      %v817 = vshrl.u32 %v789, 16
      %v819 = vrot.slane %v817, 4
      %v820 = vshll.u32 %v789, 16
      %v822 = vrot.slane %v820, 5
      %v823 = vor.u32 %v819, %v822
      %v824 = vrot.slane %v823, 4
      %v826 = vshll.u32 %v808, 16
      %v828 = vrot.slane %v826, 5
      %v829 = vsel %vm279, %v824, %v828
      %v831 = vshrl.u32 %v790, 16
      %v833 = vrot.slane %v831, 4
      %v834 = vshll.u32 %v790, 16
      %v836 = vrot.slane %v834, 5
      %v837 = vor.u32 %v833, %v836
      %v838 = vrot.slane %v837, 4
      %v840 = vshll.u32 %v809, 16
      %v842 = vrot.slane %v840, 5
      %v843 = vsel %vm279, %v838, %v842
      %v845 = vshrl.u32 %v791, 16
      %v847 = vrot.slane %v845, 4
      %v848 = vshll.u32 %v791, 16
      %v850 = vrot.slane %v848, 5
      %v851 = vor.u32 %v847, %v850
      %v852 = vrot.slane %v851, 4
      %v854 = vshll.u32 %v810, 16
      %v856 = vrot.slane %v854, 5
      %v857 = vsel %vm279, %v852, %v856
      %v859 = vshrl.u32 %v792, 16
      %v861 = vrot.slane %v859, 4
      %v862 = vshll.u32 %v792, 16
      %v864 = vrot.slane %v862, 5
      %v865 = vor.u32 %v861, %v864
      %v866 = vrot.slane %v865, 4
      %v868 = vshll.u32 %v811, 16
      %v870 = vrot.slane %v868, 5
      %v871 = vsel %vm279, %v866, %v870
      %v873 = vshrl.u32 %v793, 16
      %v875 = vrot.slane %v873, 4
      %v876 = vshll.u32 %v793, 16
      %v878 = vrot.slane %v876, 5
      %v879 = vor.u32 %v875, %v878
      %v880 = vrot.slane %v879, 4
      %v882 = vshll.u32 %v812, 16
      %v884 = vrot.slane %v882, 5
      %v885 = vsel %vm279, %v880, %v884
      %v887 = vshrl.u32 %v794, 16
      %v889 = vrot.slane %v887, 4
      %v890 = vshll.u32 %v794, 16
      %v892 = vrot.slane %v890, 5
      %v893 = vor.u32 %v889, %v892
      %v894 = vrot.slane %v893, 4
      %v896 = vshll.u32 %v813, 16
      %v898 = vrot.slane %v896, 5
      %v899 = vsel %vm279, %v894, %v898
      %v901 = vshrl.u32 %v795, 16
      %v903 = vrot.slane %v901, 4
      %v904 = vshll.u32 %v795, 16
      %v906 = vrot.slane %v904, 5
      %v907 = vor.u32 %v903, %v906
      %v908 = vrot.slane %v907, 4
      %v910 = vshll.u32 %v814, 16
      %v912 = vrot.slane %v910, 5
      %v913 = vsel %vm279, %v908, %v912
      %v915 = vshrl.u32 %v796, 16
      %v917 = vrot.slane %v915, 4
      %v918 = vshll.u32 %v796, 16
      %v920 = vrot.slane %v918, 5
      %v921 = vor.u32 %v917, %v920
      %v922 = vrot.slane %v921, 4
      %v924 = vshll.u32 %v815, 16
      %v926 = vrot.slane %v924, 5
      %v927 = vsel %vm279, %v922, %v926
      %v936 = vunpack.c.l.b16 %v789
      %v937 = vunpack.c.l.b16 %v790
      %v938 = vunpack.c.l.b16 %v791
      %v939 = vunpack.c.l.b16 %v792
      %v940 = vunpack.c.l.b16 %v793
      %v941 = vunpack.c.l.b16 %v794
      %v942 = vunpack.c.l.b16 %v795
      %v943 = vunpack.c.l.b16 %v796
      %v944 = vpack.c.b16 %v937, %v936
      %v945 = vpack.c.b16 %v939, %v938
      %v946 = vpack.c.b16 %v941, %v940
      %v947 = vpack.c.b16 %v943, %v942
      %v960 = vunpack.c.l.b16 %v800
      %v961 = vunpack.c.l.b16 %v801
      %v962 = vunpack.c.l.b16 %v802
      %v963 = vunpack.c.l.b16 %v803
      %v964 = vunpack.c.l.b16 %v804
      %v965 = vunpack.c.l.b16 %v805
      %v966 = vunpack.c.l.b16 %v806
      %v967 = vunpack.c.l.b16 %v807
      %v968 = vpack.c.b16 %v961, %v960
      %v969 = vpack.c.b16 %v963, %v962
      %v970 = vpack.c.b16 %v965, %v964
      %v971 = vpack.c.b16 %v967, %v966
      %v976 = vunpack.c.l.b16 %v829
      %v977 = vunpack.c.l.b16 %v843
      %v978 = vunpack.c.l.b16 %v857
      %v979 = vunpack.c.l.b16 %v871
      %v980 = vunpack.c.l.b16 %v885
      %v981 = vunpack.c.l.b16 %v899
      %v982 = vunpack.c.l.b16 %v913
      %v983 = vunpack.c.l.b16 %v927
      %v984 = vpack.c.b16 %v977, %v976
      %v985 = vpack.c.b16 %v979, %v978
      %v986 = vpack.c.b16 %v981, %v980
      %v987 = vpack.c.b16 %v983, %v982
      %s992 = scalar_lea.vmem %s224, 192
      %v993 = vld [vmem:[%s992] sm:$0xf]
      %v994 = vld [vmem:[%s992 + $0x4] sm:$0xf]
      %v995 = vld [vmem:[%s992 + $0x8] sm:$0xf]
      %v996 = vld [vmem:[%s992 + $0xc] sm:$0xf]
      %v997 = vld [vmem:[%s992 + $0x10] sm:$0xf]
      %v998 = vld [vmem:[%s992 + $0x14] sm:$0xf]
      %v999 = vld [vmem:[%s992 + $0x18] sm:$0xf]
      %v1000 = vld [vmem:[%s992 + $0x1c] sm:$0xf]
      %v1001 = vld [vmem:[%s992 + $0x20] sm:$0xf]
      %v1002 = vld [vmem:[%s992 + $0x24] sm:$0xf]
      %v1003 = vld [vmem:[%s992 + $0x28] sm:$0xf]
      %v1004 = vld [vmem:[%s992 + $0x2c] sm:$0xf]
      %v1005 = vld [vmem:[%s992 + $0x30] sm:$0xf]
      %v1006 = vld [vmem:[%s992 + $0x34] sm:$0xf]
      %v1007 = vld [vmem:[%s992 + $0x38] sm:$0xf]
      %v1008 = vld [vmem:[%s992 + $0x3c] sm:$0xf]
      %v1009 = vld [vmem:[%s992 + $0x40] sm:$0xf]
      %v1010 = vld [vmem:[%s992 + $0x44] sm:$0xf]
      %v1011 = vld [vmem:[%s992 + $0x48] sm:$0xf]
      %v1012 = vld [vmem:[%s992 + $0x4c] sm:$0xf]
      %v1013 = vld [vmem:[%s992 + $0x50] sm:$0xf]
      %v1014 = vld [vmem:[%s992 + $0x54] sm:$0xf]
      %v1015 = vld [vmem:[%s992 + $0x58] sm:$0xf]
      %v1016 = vld [vmem:[%s992 + $0x5c] sm:$0xf]
      %v1017 = vld [vmem:[%s992 + $0x60] sm:$0xf]
      %v1018 = vld [vmem:[%s992 + $0x64] sm:$0xf]
      %v1019 = vld [vmem:[%s992 + $0x68] sm:$0xf]
      %v1020 = vld [vmem:[%s992 + $0x6c] sm:$0xf]
      %v1021 = vld [vmem:[%s992 + $0x70] sm:$0xf]
      %v1022 = vld [vmem:[%s992 + $0x74] sm:$0xf]
      %v1023 = vld [vmem:[%s992 + $0x78] sm:$0xf]
      %v1024 = vld [vmem:[%s992 + $0x7c] sm:$0xf]
      %v1025 = vld [vmem:[%s992 + $0x80] sm:$0xf]
      %v1026 = vld [vmem:[%s992 + $0x84] sm:$0xf]
      %v1027 = vld [vmem:[%s992 + $0x88] sm:$0xf]
      %v1028 = vld [vmem:[%s992 + $0x8c] sm:$0xf]
      %v1029 = vld [vmem:[%s992 + $0x90] sm:$0xf]
      %v1030 = vld [vmem:[%s992 + $0x94] sm:$0xf]
      %v1031 = vld [vmem:[%s992 + $0x98] sm:$0xf]
      %v1032 = vld [vmem:[%s992 + $0x9c] sm:$0xf]
      %v1033 = vld [vmem:[%s992 + $0xa0] sm:$0xf]
      %v1034 = vld [vmem:[%s992 + $0xa4] sm:$0xf]
      %v1035 = vld [vmem:[%s992 + $0xa8] sm:$0xf]
      %v1036 = vld [vmem:[%s992 + $0xac] sm:$0xf]
      %v1037 = vld [vmem:[%s992 + $0xb0] sm:$0xf]
      %v1038 = vld [vmem:[%s992 + $0xb4] sm:$0xf]
      %v1039 = vld [vmem:[%s992 + $0xb8] sm:$0xf]
      %v1040 = vld [vmem:[%s992 + $0xbc] sm:$0xf]
      %v1089 = vunpack.c.l.b16 %v993
      %v1090 = vunpack.c.l.b16 %v994
      %v1091 = vunpack.c.l.b16 %v995
      %v1092 = vunpack.c.l.b16 %v996
      %v1093 = vunpack.c.l.b16 %v997
      %v1094 = vunpack.c.l.b16 %v998
      %v1095 = vunpack.c.l.b16 %v999
      %v1096 = vunpack.c.l.b16 %v1000
      %v1097 = vunpack.c.l.b16 %v1001
      %v1098 = vunpack.c.l.b16 %v1002
      %v1099 = vunpack.c.l.b16 %v1003
      %v1100 = vunpack.c.l.b16 %v1004
      %v1101 = vunpack.c.l.b16 %v1005
      %v1102 = vunpack.c.l.b16 %v1006
      %v1103 = vunpack.c.l.b16 %v1007
      %v1104 = vunpack.c.l.b16 %v1008
      %v1105 = vunpack.c.l.b16 %v1009
      %v1106 = vunpack.c.l.b16 %v1010
      %v1107 = vunpack.c.l.b16 %v1011
      %v1108 = vunpack.c.l.b16 %v1012
      %v1109 = vunpack.c.l.b16 %v1013
      %v1110 = vunpack.c.l.b16 %v1014
      %v1111 = vunpack.c.l.b16 %v1015
      %v1112 = vunpack.c.l.b16 %v1016
      %v1113 = vunpack.c.l.b16 %v1017
      %v1114 = vunpack.c.l.b16 %v1018
      %v1115 = vunpack.c.l.b16 %v1019
      %v1116 = vunpack.c.l.b16 %v1020
      %v1117 = vunpack.c.l.b16 %v1021
      %v1118 = vunpack.c.l.b16 %v1022
      %v1119 = vunpack.c.l.b16 %v1023
      %v1120 = vunpack.c.l.b16 %v1024
      %v1121 = vunpack.c.l.b16 %v1025
      %v1122 = vunpack.c.l.b16 %v1026
      %v1123 = vunpack.c.l.b16 %v1027
      %v1124 = vunpack.c.l.b16 %v1028
      %v1125 = vunpack.c.l.b16 %v1029
      %v1126 = vunpack.c.l.b16 %v1030
      %v1127 = vunpack.c.l.b16 %v1031
      %v1128 = vunpack.c.l.b16 %v1032
      %v1129 = vunpack.c.l.b16 %v1033
      %v1130 = vunpack.c.l.b16 %v1034
      %v1131 = vunpack.c.l.b16 %v1035
      %v1132 = vunpack.c.l.b16 %v1036
      %v1133 = vunpack.c.l.b16 %v1037
      %v1134 = vunpack.c.l.b16 %v1038
      %v1135 = vunpack.c.l.b16 %v1039
      %v1136 = vunpack.c.l.b16 %v1040
      %v1137 = vpack.c.b16 %v1090, %v1089
      %v1138 = vpack.c.b16 %v1092, %v1091
      %v1139 = vpack.c.b16 %v1094, %v1093
      %v1140 = vpack.c.b16 %v1096, %v1095
      %v1141 = vpack.c.b16 %v1098, %v1097
      %v1142 = vpack.c.b16 %v1100, %v1099
      %v1143 = vpack.c.b16 %v1102, %v1101
      %v1144 = vpack.c.b16 %v1104, %v1103
      %v1145 = vpack.c.b16 %v1106, %v1105
      %v1146 = vpack.c.b16 %v1108, %v1107
      %v1147 = vpack.c.b16 %v1110, %v1109
      %v1148 = vpack.c.b16 %v1112, %v1111
      %v1149 = vpack.c.b16 %v1114, %v1113
      %v1150 = vpack.c.b16 %v1116, %v1115
      %v1151 = vpack.c.b16 %v1118, %v1117
      %v1152 = vpack.c.b16 %v1120, %v1119
      %v1153 = vpack.c.b16 %v1122, %v1121
      %v1154 = vpack.c.b16 %v1124, %v1123
      %v1155 = vpack.c.b16 %v1126, %v1125
      %v1156 = vpack.c.b16 %v1128, %v1127
      %v1157 = vpack.c.b16 %v1130, %v1129
      %v1158 = vpack.c.b16 %v1132, %v1131
      %v1159 = vpack.c.b16 %v1134, %v1133
      %v1160 = vpack.c.b16 %v1136, %v1135
      %1185 = vmatprep.subr.bf16.mxu0 0
      %1186 = vmatpush1.bf16.msra.mxu0 %v1137
      %1187 = vmatprep.subr.bf16.mxu0 0
      %1188 = vmatpush1.bf16.msra.mxu0 %v1138
      %1189 = vmatprep.subr.bf16.mxu0 0
      %1190 = vmatpush1.bf16.msra.mxu0 %v1139
      %1191 = vmatprep.subr.bf16.mxu0 0
      %1192 = vmatpush1.bf16.msra.mxu0 %v1140
      %1193 = vmatprep.subr.bf16.mxu0 0
      %1194 = vmatpush1.bf16.msra.mxu0 %v1141
      %1195 = vmatprep.subr.bf16.mxu0 0
      %1196 = vmatpush1.bf16.msra.mxu0 %v1142
      %1197 = vmatprep.subr.bf16.mxu0 0
      %1198 = vmatpush1.bf16.msra.mxu0 %v1143
      %1199 = vmatprep.subr.bf16.mxu0 0
      %1200 = vmatpush1.bf16.msra.mxu0 %v1144
      %1201 = vmatprep.subr.bf16.mxu0 0
      %1202 = vmatpush1.bf16.msra.mxu0 %v1145
      %1203 = vmatprep.subr.bf16.mxu0 0
      %1204 = vmatpush1.bf16.msra.mxu0 %v1146
      %1205 = vmatprep.subr.bf16.mxu0 0
      %1206 = vmatpush1.bf16.msra.mxu0 %v1147
      %1207 = vmatprep.subr.bf16.mxu0 0
      %1208 = vmatpush1.bf16.msra.mxu0 %v1148
      %1209 = vmatprep.subr.bf16.mxu0 0
      %1210 = vmatpush1.bf16.msra.mxu0 %v1149
      %1211 = vmatprep.subr.bf16.mxu0 0
      %1212 = vmatpush1.bf16.msra.mxu0 %v1150
      %1213 = vmatprep.subr.bf16.mxu0 0
      %1214 = vmatpush1.bf16.msra.mxu0 %v1151
      %1215 = vmatprep.subr.bf16.mxu0 0
      %1216 = vmatpush1.bf16.msra.mxu0 %v1152
      %1217 = vmatprep.mubr.bf16.mxu0 %v968
      %1218 = vmatmul.mubr.bf16.gmra.mrb[0].mxu0 %v944
      %v1219 = vpop.f32.mrb[0].mxu0
      %v1220 = vadd.f32 0.0, %v1219
      %v1221 = vpop.f32.mrb[0].mxu0
      %v1222 = vpop.f32.mrb[0].mxu0
      %v1223 = vadd.f32 0.0, %v1222
      %v1224 = vpop.f32.mrb[0].mxu0
      %1225 = vmatprep.mubr.bf16.mxu0 %v969
      %1226 = vmatmul.mubr.bf16.gmra.mrb[0].mxu0 %v945
      %v1227 = vpop.f32.mrb[0].mxu0
      %v1228 = vadd.f32 0.0, %v1227
      %v1229 = vpop.f32.mrb[0].mxu0
      %v1230 = vpop.f32.mrb[0].mxu0
      %v1231 = vadd.f32 0.0, %v1230
      %v1232 = vpop.f32.mrb[0].mxu0
      %1233 = vmatprep.mubr.bf16.mxu0 %v970
      %1234 = vmatmul.mubr.bf16.gmra.mrb[0].mxu0 %v946
      %v1235 = vpop.f32.mrb[0].mxu0
      %v1236 = vadd.f32 0.0, %v1235
      %v1237 = vpop.f32.mrb[0].mxu0
      %v1238 = vpop.f32.mrb[0].mxu0
      %v1239 = vadd.f32 0.0, %v1238
      %v1240 = vpop.f32.mrb[0].mxu0
      %1241 = vmatprep.mubr.bf16.mxu0 %v971
      %1242 = vmatmul.mubr.bf16.gmra.mrb[0].mxu0 %v947
      %v1243 = vpop.f32.mrb[0].mxu0
      %v1244 = vadd.f32 0.0, %v1243
      %v1245 = vpop.f32.mrb[0].mxu0
      %v1246 = vpop.f32.mrb[0].mxu0
      %v1247 = vadd.f32 0.0, %v1246
      %v1248 = vpop.f32.mrb[0].mxu0
      %1249 = vdwg.mxu0
      %1250 = vmatprep.subr.bf16.mxu0 0
      %1251 = vmatpush1.bf16.msra.mxu0 %v1153
      %1252 = vmatprep.subr.bf16.mxu0 0
      %1253 = vmatpush1.bf16.msra.mxu0 %v1154
      %1254 = vmatprep.subr.bf16.mxu0 0
      %1255 = vmatpush1.bf16.msra.mxu0 %v1155
      %1256 = vmatprep.subr.bf16.mxu0 0
      %1257 = vmatpush1.bf16.msra.mxu0 %v1156
      %1258 = vmatprep.subr.bf16.mxu0 0
      %1259 = vmatpush1.bf16.msra.mxu0 %v1157
      %1260 = vmatprep.subr.bf16.mxu0 0
      %1261 = vmatpush1.bf16.msra.mxu0 %v1158
      %1262 = vmatprep.subr.bf16.mxu0 0
      %1263 = vmatpush1.bf16.msra.mxu0 %v1159
      %1264 = vmatprep.subr.bf16.mxu0 0
      %1265 = vmatpush1.bf16.msra.mxu0 %v1160
      %1266 = vmatprep.subr.bf16.mxu0 0
      %1267 = vmatpush1.bf16.msra.mxu0 0
      %1268 = vmatprep.subr.bf16.mxu0 0
      %1269 = vmatpush1.bf16.msra.mxu0 0
      %1270 = vmatprep.subr.bf16.mxu0 0
      %1271 = vmatpush1.bf16.msra.mxu0 0
      %1272 = vmatprep.subr.bf16.mxu0 0
      %1273 = vmatpush1.bf16.msra.mxu0 0
      %1274 = vmatprep.subr.bf16.mxu0 0
      %1275 = vmatpush1.bf16.msra.mxu0 0
      %1276 = vmatprep.subr.bf16.mxu0 0
      %1277 = vmatpush1.bf16.msra.mxu0 0
      %1278 = vmatprep.subr.bf16.mxu0 0
      %1279 = vmatpush1.bf16.msra.mxu0 0
      %1280 = vmatprep.subr.bf16.mxu0 0
      %1281 = vmatpush1.bf16.msra.mxu0 0
      %1282 = vmatprep.mubr.bf16.mxu0 0
      %1283 = vmatmul.mubr.bf16.gmra.mrb[0].mxu0 %v984
      %v1284 = vpop.f32.mrb[0].mxu0
      %v1285 = vadd.f32 %v1220, %v1284
      %v1286 = vpop.f32.mrb[0].mxu0
      %v1287 = vpop.f32.mrb[0].mxu0
      %v1288 = vadd.f32 %v1223, %v1287
      %v1289 = vpop.f32.mrb[0].mxu0
      %1290 = vmatprep.mubr.bf16.mxu0 0
      %1291 = vmatmul.mubr.bf16.gmra.mrb[0].mxu0 %v985
      %v1292 = vpop.f32.mrb[0].mxu0
      %v1293 = vadd.f32 %v1228, %v1292
      %v1294 = vpop.f32.mrb[0].mxu0
      %v1295 = vpop.f32.mrb[0].mxu0
      %v1296 = vadd.f32 %v1231, %v1295
      %v1297 = vpop.f32.mrb[0].mxu0
      %1298 = vmatprep.mubr.bf16.mxu0 0
      %1299 = vmatmul.mubr.bf16.gmra.mrb[0].mxu0 %v986
      %v1300 = vpop.f32.mrb[0].mxu0
      %v1301 = vadd.f32 %v1236, %v1300
      %v1302 = vpop.f32.mrb[0].mxu0
      %v1303 = vpop.f32.mrb[0].mxu0
      %v1304 = vadd.f32 %v1239, %v1303
      %v1305 = vpop.f32.mrb[0].mxu0
      %1306 = vmatprep.mubr.bf16.mxu0 0
      %1307 = vmatmul.mubr.bf16.gmra.mrb[0].mxu0 %v987
      %v1308 = vpop.f32.mrb[0].mxu0
      %v1309 = vadd.f32 %v1244, %v1308
      %v1310 = vpop.f32.mrb[0].mxu0
      %v1311 = vpop.f32.mrb[0].mxu0
      %v1312 = vadd.f32 %v1247, %v1311
      %v1313 = vpop.f32.mrb[0].mxu0
      %1314 = vdwg.mxu0
      %v1315 = vld [vmem:[#allocation2] sm:$0xff]
      %v1316 = vld [vmem:[#allocation2 + $0x8] sm:$0xff]
      %v1317 = vld [vmem:[#allocation2 + $0x10] sm:$0xff]
      %v1318 = vld [vmem:[#allocation2 + $0x18] sm:$0xff]
      %v1319 = vld [vmem:[#allocation2 + $0x20] sm:$0xff]
      %v1320 = vld [vmem:[#allocation2 + $0x28] sm:$0xff]
      %v1321 = vld [vmem:[#allocation2 + $0x30] sm:$0xff]
      %v1322 = vld [vmem:[#allocation2 + $0x38] sm:$0xff]
      %v1323 = vadd.f32 %v1315, %v1285
      %v1324 = vadd.f32 %v1316, %v1288
      %v1325 = vadd.f32 %v1317, %v1293
      %v1326 = vadd.f32 %v1318, %v1296
      %v1327 = vadd.f32 %v1319, %v1301
      %v1328 = vadd.f32 %v1320, %v1304
      %v1329 = vadd.f32 %v1321, %v1309
      %v1330 = vadd.f32 %v1322, %v1312
      %1331 = vst [vmem:[#allocation2] sm:$0xff] %v1323
      %1332 = vst [vmem:[#allocation2 + $0x8] sm:$0xff] %v1324
      %1333 = vst [vmem:[#allocation2 + $0x10] sm:$0xff] %v1325
      %1334 = vst [vmem:[#allocation2 + $0x18] sm:$0xff] %v1326
      %1335 = vst [vmem:[#allocation2 + $0x20] sm:$0xff] %v1327
      %1336 = vst [vmem:[#allocation2 + $0x28] sm:$0xff] %v1328
      %1337 = vst [vmem:[#allocation2 + $0x30] sm:$0xff] %v1329
      %1338 = vst [vmem:[#allocation2 + $0x38] sm:$0xff] %v1330
      %s1339 = sadd.s32 %s246, 1
      %s1340 = smul.u32 %s1339, 2
      %s1341 = smul.addr %s1340, 4
      %s1342 = scalar_lea.vmem %s220, %s1341
      %v1343 = vld [vmem:[%s1342] sm:$0xf]
      %v1344 = vld [vmem:[%s1342 + $0x8] sm:$0xf]
      %v1345 = vld [vmem:[%s1342 + $0x10] sm:$0xf]
      %v1346 = vld [vmem:[%s1342 + $0x18] sm:$0xf]
      %v1347 = vld [vmem:[%s1342 + $0x20] sm:$0xf]
      %v1348 = vld [vmem:[%s1342 + $0x28] sm:$0xf]
      %v1349 = vld [vmem:[%s1342 + $0x30] sm:$0xf]
      %v1350 = vld [vmem:[%s1342 + $0x38] sm:$0xf]
      %s1351 = sadd.s32 %s1340, 18
      %s1352 = smul.addr %s1351, 4
      %s1353 = scalar_lea.vmem %s220, %s1352
      %v1354 = vld [vmem:[%s1353] sm:$0xf]
      %v1355 = vld [vmem:[%s1353 + $0x8] sm:$0xf]
      %v1356 = vld [vmem:[%s1353 + $0x10] sm:$0xf]
      %v1357 = vld [vmem:[%s1353 + $0x18] sm:$0xf]
      %v1358 = vld [vmem:[%s1353 + $0x20] sm:$0xf]
      %v1359 = vld [vmem:[%s1353 + $0x28] sm:$0xf]
      %v1360 = vld [vmem:[%s1353 + $0x30] sm:$0xf]
      %v1361 = vld [vmem:[%s1353 + $0x38] sm:$0xf]
      %v1362 = vld [vmem:[%s1342 + $0x4] sm:$0x1]
      %v1363 = vld [vmem:[%s1342 + $0xc] sm:$0x1]
      %v1364 = vld [vmem:[%s1342 + $0x14] sm:$0x1]
      %v1365 = vld [vmem:[%s1342 + $0x1c] sm:$0x1]
      %v1366 = vld [vmem:[%s1342 + $0x24] sm:$0x1]
      %v1367 = vld [vmem:[%s1342 + $0x2c] sm:$0x1]
      %v1368 = vld [vmem:[%s1342 + $0x34] sm:$0x1]
      %v1369 = vld [vmem:[%s1342 + $0x3c] sm:$0x1]
      %v1371 = vshrl.u32 %v1343, 16
      %v1373 = vrot.slane %v1371, 4
      %v1374 = vshll.u32 %v1343, 16
      %v1376 = vrot.slane %v1374, 5
      %v1377 = vor.u32 %v1373, %v1376
      %v1378 = vrot.slane %v1377, 4
      %v1380 = vshll.u32 %v1362, 16
      %v1382 = vrot.slane %v1380, 5
      %v1383 = vsel %vm279, %v1378, %v1382
      %v1385 = vshrl.u32 %v1344, 16
      %v1387 = vrot.slane %v1385, 4
      %v1388 = vshll.u32 %v1344, 16
      %v1390 = vrot.slane %v1388, 5
      %v1391 = vor.u32 %v1387, %v1390
      %v1392 = vrot.slane %v1391, 4
      %v1394 = vshll.u32 %v1363, 16
      %v1396 = vrot.slane %v1394, 5
      %v1397 = vsel %vm279, %v1392, %v1396
      %v1399 = vshrl.u32 %v1345, 16
      %v1401 = vrot.slane %v1399, 4
      %v1402 = vshll.u32 %v1345, 16
      %v1404 = vrot.slane %v1402, 5
      %v1405 = vor.u32 %v1401, %v1404
      %v1406 = vrot.slane %v1405, 4
      %v1408 = vshll.u32 %v1364, 16
      %v1410 = vrot.slane %v1408, 5
      %v1411 = vsel %vm279, %v1406, %v1410
      %v1413 = vshrl.u32 %v1346, 16
      %v1415 = vrot.slane %v1413, 4
      %v1416 = vshll.u32 %v1346, 16
      %v1418 = vrot.slane %v1416, 5
      %v1419 = vor.u32 %v1415, %v1418
      %v1420 = vrot.slane %v1419, 4
      %v1422 = vshll.u32 %v1365, 16
      %v1424 = vrot.slane %v1422, 5
      %v1425 = vsel %vm279, %v1420, %v1424
      %v1427 = vshrl.u32 %v1347, 16
      %v1429 = vrot.slane %v1427, 4
      %v1430 = vshll.u32 %v1347, 16
      %v1432 = vrot.slane %v1430, 5
      %v1433 = vor.u32 %v1429, %v1432
      %v1434 = vrot.slane %v1433, 4
      %v1436 = vshll.u32 %v1366, 16
      %v1438 = vrot.slane %v1436, 5
      %v1439 = vsel %vm279, %v1434, %v1438
      %v1441 = vshrl.u32 %v1348, 16
      %v1443 = vrot.slane %v1441, 4
      %v1444 = vshll.u32 %v1348, 16
      %v1446 = vrot.slane %v1444, 5
      %v1447 = vor.u32 %v1443, %v1446
      %v1448 = vrot.slane %v1447, 4
      %v1450 = vshll.u32 %v1367, 16
      %v1452 = vrot.slane %v1450, 5
      %v1453 = vsel %vm279, %v1448, %v1452
      %v1455 = vshrl.u32 %v1349, 16
      %v1457 = vrot.slane %v1455, 4
      %v1458 = vshll.u32 %v1349, 16
      %v1460 = vrot.slane %v1458, 5
      %v1461 = vor.u32 %v1457, %v1460
      %v1462 = vrot.slane %v1461, 4
      %v1464 = vshll.u32 %v1368, 16
      %v1466 = vrot.slane %v1464, 5
      %v1467 = vsel %vm279, %v1462, %v1466
      %v1469 = vshrl.u32 %v1350, 16
      %v1471 = vrot.slane %v1469, 4
      %v1472 = vshll.u32 %v1350, 16
      %v1474 = vrot.slane %v1472, 5
      %v1475 = vor.u32 %v1471, %v1474
      %v1476 = vrot.slane %v1475, 4
      %v1478 = vshll.u32 %v1369, 16
      %v1480 = vrot.slane %v1478, 5
      %v1481 = vsel %vm279, %v1476, %v1480
      %v1490 = vunpack.c.l.b16 %v1343
      %v1491 = vunpack.c.l.b16 %v1344
      %v1492 = vunpack.c.l.b16 %v1345
      %v1493 = vunpack.c.l.b16 %v1346
      %v1494 = vunpack.c.l.b16 %v1347
      %v1495 = vunpack.c.l.b16 %v1348
      %v1496 = vunpack.c.l.b16 %v1349
      %v1497 = vunpack.c.l.b16 %v1350
      %v1498 = vpack.c.b16 %v1491, %v1490
      %v1499 = vpack.c.b16 %v1493, %v1492
      %v1500 = vpack.c.b16 %v1495, %v1494
      %v1501 = vpack.c.b16 %v1497, %v1496
      %v1514 = vunpack.c.l.b16 %v1354
      %v1515 = vunpack.c.l.b16 %v1355
      %v1516 = vunpack.c.l.b16 %v1356
      %v1517 = vunpack.c.l.b16 %v1357
      %v1518 = vunpack.c.l.b16 %v1358
      %v1519 = vunpack.c.l.b16 %v1359
      %v1520 = vunpack.c.l.b16 %v1360
      %v1521 = vunpack.c.l.b16 %v1361
      %v1522 = vpack.c.b16 %v1515, %v1514
      %v1523 = vpack.c.b16 %v1517, %v1516
      %v1524 = vpack.c.b16 %v1519, %v1518
      %v1525 = vpack.c.b16 %v1521, %v1520
      %v1530 = vunpack.c.l.b16 %v1383
      %v1531 = vunpack.c.l.b16 %v1397
      %v1532 = vunpack.c.l.b16 %v1411
      %v1533 = vunpack.c.l.b16 %v1425
      %v1534 = vunpack.c.l.b16 %v1439
      %v1535 = vunpack.c.l.b16 %v1453
      %v1536 = vunpack.c.l.b16 %v1467
      %v1537 = vunpack.c.l.b16 %v1481
      %v1538 = vpack.c.b16 %v1531, %v1530
      %v1539 = vpack.c.b16 %v1533, %v1532
      %v1540 = vpack.c.b16 %v1535, %v1534
      %v1541 = vpack.c.b16 %v1537, %v1536
      %s1546 = scalar_lea.vmem %s224, 384
      %v1547 = vld [vmem:[%s1546] sm:$0xf]
      %v1548 = vld [vmem:[%s1546 + $0x4] sm:$0xf]
      %v1549 = vld [vmem:[%s1546 + $0x8] sm:$0xf]
      %v1550 = vld [vmem:[%s1546 + $0xc] sm:$0xf]
      %v1551 = vld [vmem:[%s1546 + $0x10] sm:$0xf]
      %v1552 = vld [vmem:[%s1546 + $0x14] sm:$0xf]
      %v1553 = vld [vmem:[%s1546 + $0x18] sm:$0xf]
      %v1554 = vld [vmem:[%s1546 + $0x1c] sm:$0xf]
      %v1555 = vld [vmem:[%s1546 + $0x20] sm:$0xf]
      %v1556 = vld [vmem:[%s1546 + $0x24] sm:$0xf]
      %v1557 = vld [vmem:[%s1546 + $0x28] sm:$0xf]
      %v1558 = vld [vmem:[%s1546 + $0x2c] sm:$0xf]
      %v1559 = vld [vmem:[%s1546 + $0x30] sm:$0xf]
      %v1560 = vld [vmem:[%s1546 + $0x34] sm:$0xf]
      %v1561 = vld [vmem:[%s1546 + $0x38] sm:$0xf]
      %v1562 = vld [vmem:[%s1546 + $0x3c] sm:$0xf]
      %v1563 = vld [vmem:[%s1546 + $0x40] sm:$0xf]
      %v1564 = vld [vmem:[%s1546 + $0x44] sm:$0xf]
      %v1565 = vld [vmem:[%s1546 + $0x48] sm:$0xf]
      %v1566 = vld [vmem:[%s1546 + $0x4c] sm:$0xf]
      %v1567 = vld [vmem:[%s1546 + $0x50] sm:$0xf]
      %v1568 = vld [vmem:[%s1546 + $0x54] sm:$0xf]
      %v1569 = vld [vmem:[%s1546 + $0x58] sm:$0xf]
      %v1570 = vld [vmem:[%s1546 + $0x5c] sm:$0xf]
      %v1571 = vld [vmem:[%s1546 + $0x60] sm:$0xf]
      %v1572 = vld [vmem:[%s1546 + $0x64] sm:$0xf]
      %v1573 = vld [vmem:[%s1546 + $0x68] sm:$0xf]
      %v1574 = vld [vmem:[%s1546 + $0x6c] sm:$0xf]
      %v1575 = vld [vmem:[%s1546 + $0x70] sm:$0xf]
      %v1576 = vld [vmem:[%s1546 + $0x74] sm:$0xf]
      %v1577 = vld [vmem:[%s1546 + $0x78] sm:$0xf]
      %v1578 = vld [vmem:[%s1546 + $0x7c] sm:$0xf]
      %v1579 = vld [vmem:[%s1546 + $0x80] sm:$0xf]
      %v1580 = vld [vmem:[%s1546 + $0x84] sm:$0xf]
      %v1581 = vld [vmem:[%s1546 + $0x88] sm:$0xf]
      %v1582 = vld [vmem:[%s1546 + $0x8c] sm:$0xf]
      %v1583 = vld [vmem:[%s1546 + $0x90] sm:$0xf]
      %v1584 = vld [vmem:[%s1546 + $0x94] sm:$0xf]
      %v1585 = vld [vmem:[%s1546 + $0x98] sm:$0xf]
      %v1586 = vld [vmem:[%s1546 + $0x9c] sm:$0xf]
      %v1587 = vld [vmem:[%s1546 + $0xa0] sm:$0xf]
      %v1588 = vld [vmem:[%s1546 + $0xa4] sm:$0xf]
      %v1589 = vld [vmem:[%s1546 + $0xa8] sm:$0xf]
      %v1590 = vld [vmem:[%s1546 + $0xac] sm:$0xf]
      %v1591 = vld [vmem:[%s1546 + $0xb0] sm:$0xf]
      %v1592 = vld [vmem:[%s1546 + $0xb4] sm:$0xf]
      %v1593 = vld [vmem:[%s1546 + $0xb8] sm:$0xf]
      %v1594 = vld [vmem:[%s1546 + $0xbc] sm:$0xf]
      %v1643 = vunpack.c.l.b16 %v1547
      %v1644 = vunpack.c.l.b16 %v1548
      %v1645 = vunpack.c.l.b16 %v1549
      %v1646 = vunpack.c.l.b16 %v1550
      %v1647 = vunpack.c.l.b16 %v1551
      %v1648 = vunpack.c.l.b16 %v1552
      %v1649 = vunpack.c.l.b16 %v1553
      %v1650 = vunpack.c.l.b16 %v1554
      %v1651 = vunpack.c.l.b16 %v1555
      %v1652 = vunpack.c.l.b16 %v1556
      %v1653 = vunpack.c.l.b16 %v1557
      %v1654 = vunpack.c.l.b16 %v1558
      %v1655 = vunpack.c.l.b16 %v1559
      %v1656 = vunpack.c.l.b16 %v1560
      %v1657 = vunpack.c.l.b16 %v1561
      %v1658 = vunpack.c.l.b16 %v1562
      %v1659 = vunpack.c.l.b16 %v1563
      %v1660 = vunpack.c.l.b16 %v1564
      %v1661 = vunpack.c.l.b16 %v1565
      %v1662 = vunpack.c.l.b16 %v1566
      %v1663 = vunpack.c.l.b16 %v1567
      %v1664 = vunpack.c.l.b16 %v1568
      %v1665 = vunpack.c.l.b16 %v1569
      %v1666 = vunpack.c.l.b16 %v1570
      %v1667 = vunpack.c.l.b16 %v1571
      %v1668 = vunpack.c.l.b16 %v1572
      %v1669 = vunpack.c.l.b16 %v1573
      %v1670 = vunpack.c.l.b16 %v1574
      %v1671 = vunpack.c.l.b16 %v1575
      %v1672 = vunpack.c.l.b16 %v1576
      %v1673 = vunpack.c.l.b16 %v1577
      %v1674 = vunpack.c.l.b16 %v1578
      %v1675 = vunpack.c.l.b16 %v1579
      %v1676 = vunpack.c.l.b16 %v1580
      %v1677 = vunpack.c.l.b16 %v1581
      %v1678 = vunpack.c.l.b16 %v1582
      %v1679 = vunpack.c.l.b16 %v1583
      %v1680 = vunpack.c.l.b16 %v1584
      %v1681 = vunpack.c.l.b16 %v1585
      %v1682 = vunpack.c.l.b16 %v1586
      %v1683 = vunpack.c.l.b16 %v1587
      %v1684 = vunpack.c.l.b16 %v1588
      %v1685 = vunpack.c.l.b16 %v1589
      %v1686 = vunpack.c.l.b16 %v1590
      %v1687 = vunpack.c.l.b16 %v1591
      %v1688 = vunpack.c.l.b16 %v1592
      %v1689 = vunpack.c.l.b16 %v1593
      %v1690 = vunpack.c.l.b16 %v1594
      %v1691 = vpack.c.b16 %v1644, %v1643
      %v1692 = vpack.c.b16 %v1646, %v1645
      %v1693 = vpack.c.b16 %v1648, %v1647
      %v1694 = vpack.c.b16 %v1650, %v1649
      %v1695 = vpack.c.b16 %v1652, %v1651
      %v1696 = vpack.c.b16 %v1654, %v1653
      %v1697 = vpack.c.b16 %v1656, %v1655
      %v1698 = vpack.c.b16 %v1658, %v1657
      %v1699 = vpack.c.b16 %v1660, %v1659
      %v1700 = vpack.c.b16 %v1662, %v1661
      %v1701 = vpack.c.b16 %v1664, %v1663
      %v1702 = vpack.c.b16 %v1666, %v1665
      %v1703 = vpack.c.b16 %v1668, %v1667
      %v1704 = vpack.c.b16 %v1670, %v1669
      %v1705 = vpack.c.b16 %v1672, %v1671
      %v1706 = vpack.c.b16 %v1674, %v1673
      %v1707 = vpack.c.b16 %v1676, %v1675
      %v1708 = vpack.c.b16 %v1678, %v1677
      %v1709 = vpack.c.b16 %v1680, %v1679
      %v1710 = vpack.c.b16 %v1682, %v1681
      %v1711 = vpack.c.b16 %v1684, %v1683
      %v1712 = vpack.c.b16 %v1686, %v1685
      %v1713 = vpack.c.b16 %v1688, %v1687
      %v1714 = vpack.c.b16 %v1690, %v1689
      %1739 = vmatprep.subr.bf16.mxu0 0
      %1740 = vmatpush1.bf16.msra.mxu0 %v1691
      %1741 = vmatprep.subr.bf16.mxu0 0
      %1742 = vmatpush1.bf16.msra.mxu0 %v1692
      %1743 = vmatprep.subr.bf16.mxu0 0
      %1744 = vmatpush1.bf16.msra.mxu0 %v1693
      %1745 = vmatprep.subr.bf16.mxu0 0
      %1746 = vmatpush1.bf16.msra.mxu0 %v1694
      %1747 = vmatprep.subr.bf16.mxu0 0
      %1748 = vmatpush1.bf16.msra.mxu0 %v1695
      %1749 = vmatprep.subr.bf16.mxu0 0
      %1750 = vmatpush1.bf16.msra.mxu0 %v1696
      %1751 = vmatprep.subr.bf16.mxu0 0
      %1752 = vmatpush1.bf16.msra.mxu0 %v1697
      %1753 = vmatprep.subr.bf16.mxu0 0
      %1754 = vmatpush1.bf16.msra.mxu0 %v1698
      %1755 = vmatprep.subr.bf16.mxu0 0
      %1756 = vmatpush1.bf16.msra.mxu0 %v1699
      %1757 = vmatprep.subr.bf16.mxu0 0
      %1758 = vmatpush1.bf16.msra.mxu0 %v1700
      %1759 = vmatprep.subr.bf16.mxu0 0
      %1760 = vmatpush1.bf16.msra.mxu0 %v1701
      %1761 = vmatprep.subr.bf16.mxu0 0
      %1762 = vmatpush1.bf16.msra.mxu0 %v1702
      %1763 = vmatprep.subr.bf16.mxu0 0
      %1764 = vmatpush1.bf16.msra.mxu0 %v1703
      %1765 = vmatprep.subr.bf16.mxu0 0
      %1766 = vmatpush1.bf16.msra.mxu0 %v1704
      %1767 = vmatprep.subr.bf16.mxu0 0
      %1768 = vmatpush1.bf16.msra.mxu0 %v1705
      %1769 = vmatprep.subr.bf16.mxu0 0
      %1770 = vmatpush1.bf16.msra.mxu0 %v1706
      %1771 = vmatprep.mubr.bf16.mxu0 %v1522
      %1772 = vmatmul.mubr.bf16.gmra.mrb[0].mxu0 %v1498
      %v1773 = vpop.f32.mrb[0].mxu0
      %v1774 = vadd.f32 0.0, %v1773
      %v1775 = vpop.f32.mrb[0].mxu0
      %v1776 = vpop.f32.mrb[0].mxu0
      %v1777 = vadd.f32 0.0, %v1776
      %v1778 = vpop.f32.mrb[0].mxu0
      %1779 = vmatprep.mubr.bf16.mxu0 %v1523
      %1780 = vmatmul.mubr.bf16.gmra.mrb[0].mxu0 %v1499
      %v1781 = vpop.f32.mrb[0].mxu0
      %v1782 = vadd.f32 0.0, %v1781
      %v1783 = vpop.f32.mrb[0].mxu0
      %v1784 = vpop.f32.mrb[0].mxu0
      %v1785 = vadd.f32 0.0, %v1784
      %v1786 = vpop.f32.mrb[0].mxu0
      %1787 = vmatprep.mubr.bf16.mxu0 %v1524
      %1788 = vmatmul.mubr.bf16.gmra.mrb[0].mxu0 %v1500
      %v1789 = vpop.f32.mrb[0].mxu0
      %v1790 = vadd.f32 0.0, %v1789
      %v1791 = vpop.f32.mrb[0].mxu0
      %v1792 = vpop.f32.mrb[0].mxu0
      %v1793 = vadd.f32 0.0, %v1792
      %v1794 = vpop.f32.mrb[0].mxu0
      %1795 = vmatprep.mubr.bf16.mxu0 %v1525
      %1796 = vmatmul.mubr.bf16.gmra.mrb[0].mxu0 %v1501
      %v1797 = vpop.f32.mrb[0].mxu0
      %v1798 = vadd.f32 0.0, %v1797
      %v1799 = vpop.f32.mrb[0].mxu0
      %v1800 = vpop.f32.mrb[0].mxu0
      %v1801 = vadd.f32 0.0, %v1800
      %v1802 = vpop.f32.mrb[0].mxu0
      %1803 = vdwg.mxu0
      %1804 = vmatprep.subr.bf16.mxu0 0
      %1805 = vmatpush1.bf16.msra.mxu0 %v1707
      %1806 = vmatprep.subr.bf16.mxu0 0
      %1807 = vmatpush1.bf16.msra.mxu0 %v1708
      %1808 = vmatprep.subr.bf16.mxu0 0
      %1809 = vmatpush1.bf16.msra.mxu0 %v1709
      %1810 = vmatprep.subr.bf16.mxu0 0
      %1811 = vmatpush1.bf16.msra.mxu0 %v1710
      %1812 = vmatprep.subr.bf16.mxu0 0
      %1813 = vmatpush1.bf16.msra.mxu0 %v1711
      %1814 = vmatprep.subr.bf16.mxu0 0
      %1815 = vmatpush1.bf16.msra.mxu0 %v1712
      %1816 = vmatprep.subr.bf16.mxu0 0
      %1817 = vmatpush1.bf16.msra.mxu0 %v1713
      %1818 = vmatprep.subr.bf16.mxu0 0
      %1819 = vmatpush1.bf16.msra.mxu0 %v1714
      %1820 = vmatprep.subr.bf16.mxu0 0
      %1821 = vmatpush1.bf16.msra.mxu0 0
      %1822 = vmatprep.subr.bf16.mxu0 0
      %1823 = vmatpush1.bf16.msra.mxu0 0
      %1824 = vmatprep.subr.bf16.mxu0 0
      %1825 = vmatpush1.bf16.msra.mxu0 0
      %1826 = vmatprep.subr.bf16.mxu0 0
      %1827 = vmatpush1.bf16.msra.mxu0 0
      %1828 = vmatprep.subr.bf16.mxu0 0
      %1829 = vmatpush1.bf16.msra.mxu0 0
      %1830 = vmatprep.subr.bf16.mxu0 0
      %1831 = vmatpush1.bf16.msra.mxu0 0
      %1832 = vmatprep.subr.bf16.mxu0 0
      %1833 = vmatpush1.bf16.msra.mxu0 0
      %1834 = vmatprep.subr.bf16.mxu0 0
      %1835 = vmatpush1.bf16.msra.mxu0 0
      %1836 = vmatprep.mubr.bf16.mxu0 0
      %1837 = vmatmul.mubr.bf16.gmra.mrb[0].mxu0 %v1538
      %v1838 = vpop.f32.mrb[0].mxu0
      %v1839 = vadd.f32 %v1774, %v1838
      %v1840 = vpop.f32.mrb[0].mxu0
      %v1841 = vpop.f32.mrb[0].mxu0
      %v1842 = vadd.f32 %v1777, %v1841
      %v1843 = vpop.f32.mrb[0].mxu0
      %1844 = vmatprep.mubr.bf16.mxu0 0
      %1845 = vmatmul.mubr.bf16.gmra.mrb[0].mxu0 %v1539
      %v1846 = vpop.f32.mrb[0].mxu0
      %v1847 = vadd.f32 %v1782, %v1846
      %v1848 = vpop.f32.mrb[0].mxu0
      %v1849 = vpop.f32.mrb[0].mxu0
      %v1850 = vadd.f32 %v1785, %v1849
      %v1851 = vpop.f32.mrb[0].mxu0
      %1852 = vmatprep.mubr.bf16.mxu0 0
      %1853 = vmatmul.mubr.bf16.gmra.mrb[0].mxu0 %v1540
      %v1854 = vpop.f32.mrb[0].mxu0
      %v1855 = vadd.f32 %v1790, %v1854
      %v1856 = vpop.f32.mrb[0].mxu0
      %v1857 = vpop.f32.mrb[0].mxu0
      %v1858 = vadd.f32 %v1793, %v1857
      %v1859 = vpop.f32.mrb[0].mxu0
      %1860 = vmatprep.mubr.bf16.mxu0 0
      %1861 = vmatmul.mubr.bf16.gmra.mrb[0].mxu0 %v1541
      %v1862 = vpop.f32.mrb[0].mxu0
      %v1863 = vadd.f32 %v1798, %v1862
      %v1864 = vpop.f32.mrb[0].mxu0
      %v1865 = vpop.f32.mrb[0].mxu0
      %v1866 = vadd.f32 %v1801, %v1865
      %v1867 = vpop.f32.mrb[0].mxu0
      %1868 = vdwg.mxu0
      %v1869 = vld [vmem:[#allocation2] sm:$0xff]
      %v1870 = vld [vmem:[#allocation2 + $0x8] sm:$0xff]
      %v1871 = vld [vmem:[#allocation2 + $0x10] sm:$0xff]
      %v1872 = vld [vmem:[#allocation2 + $0x18] sm:$0xff]
      %v1873 = vld [vmem:[#allocation2 + $0x20] sm:$0xff]
      %v1874 = vld [vmem:[#allocation2 + $0x28] sm:$0xff]
      %v1875 = vld [vmem:[#allocation2 + $0x30] sm:$0xff]
      %v1876 = vld [vmem:[#allocation2 + $0x38] sm:$0xff]
      %v1877 = vadd.f32 %v1869, %v1839
      %v1878 = vadd.f32 %v1870, %v1842
      %v1879 = vadd.f32 %v1871, %v1847
      %v1880 = vadd.f32 %v1872, %v1850
      %v1881 = vadd.f32 %v1873, %v1855
      %v1882 = vadd.f32 %v1874, %v1858
      %v1883 = vadd.f32 %v1875, %v1863
      %v1884 = vadd.f32 %v1876, %v1866
      %1885 = vst [vmem:[#allocation2] sm:$0xff] %v1877
      %1886 = vst [vmem:[#allocation2 + $0x8] sm:$0xff] %v1878
      %1887 = vst [vmem:[#allocation2 + $0x10] sm:$0xff] %v1879
      %1888 = vst [vmem:[#allocation2 + $0x18] sm:$0xff] %v1880
      %1889 = vst [vmem:[#allocation2 + $0x20] sm:$0xff] %v1881
      %1890 = vst [vmem:[#allocation2 + $0x28] sm:$0xff] %v1882
      %1891 = vst [vmem:[#allocation2 + $0x30] sm:$0xff] %v1883
      %1892 = vst [vmem:[#allocation2 + $0x38] sm:$0xff] %v1884
      %v1893 = vld [vmem:[#allocation2] sm:$0xff]
      %v1894 = vld [vmem:[#allocation2 + $0x8] sm:$0xff]
      %v1895 = vld [vmem:[#allocation2 + $0x10] sm:$0xff]
      %v1896 = vld [vmem:[#allocation2 + $0x18] sm:$0xff]
      %v1897 = vld [vmem:[#allocation2 + $0x20] sm:$0xff]
      %v1898 = vld [vmem:[#allocation2 + $0x28] sm:$0xff]
      %v1899 = vld [vmem:[#allocation2 + $0x30] sm:$0xff]
      %v1900 = vld [vmem:[#allocation2 + $0x38] sm:$0xff]
      %v1901 = vpack.c.bf16 %v1893, %v1893
      %v1902 = vpack.c.bf16 %v1894, %v1894
      %v1903 = vpack.c.bf16 %v1895, %v1895
      %v1904 = vpack.c.bf16 %v1896, %v1896
      %v1905 = vpack.c.bf16 %v1897, %v1897
      %v1906 = vpack.c.bf16 %v1898, %v1898
      %v1907 = vpack.c.bf16 %v1899, %v1899
      %v1908 = vpack.c.bf16 %v1900, %v1900
      %1909 = vst [vmem:[%s236] sm:$0xf] %v1901
      %1910 = vst [vmem:[%s236 + $0x4] sm:$0xf] %v1902
      %1911 = vst [vmem:[%s236 + $0x8] sm:$0xf] %v1903
      %1912 = vst [vmem:[%s236 + $0xc] sm:$0xf] %v1904
      %1913 = vst [vmem:[%s236 + $0x10] sm:$0xf] %v1905
      %1914 = vst [vmem:[%s236 + $0x14] sm:$0xf] %v1906
      %1915 = vst [vmem:[%s236 + $0x18] sm:$0xf] %v1907
      %1916 = vst [vmem:[%s236 + $0x1c] sm:$0xf] %v1908
      %v1917 = vadd.f32 %v1893, %v1894
      %v1918 = vadd.f32 %v1917, %v1895
      %v1919 = vadd.f32 %v1918, %v1896
      %v1920 = vadd.f32 %v1919, %v1897
      %v1921 = vadd.f32 %v1920, %v1898
      %v1922 = vadd.f32 %v1921, %v1899
      %v1923 = vadd.f32 %v1922, %v1900
      %v1924 = vrot.slane %v1923, 4
      %v1925 = vadd.f32 %v1923, %v1924
      %v1926 = vrot.slane %v1925, 2
      %v1927 = vadd.f32 %v1925, %v1926
      %v1928 = vrot.slane %v1927, 1
      %v1929 = vadd.f32 %v1927, %v1928
      %v1930 = vmul.f32 %v1893, %v1893
      %v1931 = vmul.f32 %v1894, %v1894
      %v1932 = vmul.f32 %v1895, %v1895
      %v1933 = vmul.f32 %v1896, %v1896
      %v1934 = vmul.f32 %v1897, %v1897
      %v1935 = vmul.f32 %v1898, %v1898
      %v1936 = vmul.f32 %v1899, %v1899
      %v1937 = vmul.f32 %v1900, %v1900
      %v1938 = vadd.f32 %v1930, %v1931
      %v1939 = vadd.f32 %v1938, %v1932
      %v1940 = vadd.f32 %v1939, %v1933
      %v1941 = vadd.f32 %v1940, %v1934
      %v1942 = vadd.f32 %v1941, %v1935
      %v1943 = vadd.f32 %v1942, %v1936
      %v1944 = vadd.f32 %v1943, %v1937
      %v1945 = vrot.slane %v1944, 4
      %v1946 = vadd.f32 %v1944, %v1945
      %v1947 = vrot.slane %v1946, 2
      %v1948 = vadd.f32 %v1946, %v1947
      %v1949 = vrot.slane %v1948, 1
      %v1950 = vadd.f32 %v1948, %v1949
      %vm1951 = vcmask 1040384
      %v1952 = vsel %vm1951, %v1929, %v1950
      %p1953 = scmp.eq.s32.totalorder %s22, 0
      // Predicated region
      $region29: #{_lambda_.9} parent=27 // pred_check
        %p1954 = pneg %p1953
      $region30: #{_lambda_.9} parent=27 // pred_check_branch
        %1956 = sbr.rel (%p1954) target = $region32
      $region31: #{_lambda_.9} parent=27 // pred_region
        %1957 = vst [vmem:[%s244] sm:$0x3] %v1952
      $region32: #{_lambda_.9} parent=27 // pred_fallthru
        _
      %p1958 = scmp.ne.s32.totalorder %s22, 0
      // Predicated region
      $region33: #{_lambda_.9} parent=27 // pred_check
        %p1959 = pneg %p1958
      $region34: #{_lambda_.9} parent=27 // pred_check_branch
        %1961 = sbr.rel (%p1959) target = $region36
      $region35: #{_lambda_.9} parent=27 // pred_region
        %v1962 = vld [vmem:[%s244] sm:$0x3]
        %v1963 = vadd.f32 %v1962, %v1952
        %1964 = vst [vmem:[%s244] sm:$0x3] %v1963
      $region36: #{_lambda_.9} parent=27 // pred_fallthru
        _
      %s1965 = smul.u32 8, %s22
      %p1966 = scmp.lt.s32.totalorder %s20, 1
      %s1967 = scalar_select %p1966, %s20, 1
      %p1968 = scmp.lt.s32.totalorder %s1965, 7
      %s1969 = scalar_select %p1968, %s1965, 7
      %p1970 = scmp.lt.s32.totalorder %s21, 0
      %s1971 = scalar_select %p1970, %s21, 0
      %s1972 = sadd.s32 %s1971, %s1969
      %s1973 = smul.addr %s1967, 8
      %s1974 = sadd.s32 %s1972, %s1973
      %s1975 = smul.addr %s1974, 4
      %s1976 = scalar_lea.vmem %s2, %s1975
      %p1977 = scmp.lt.s32.totalorder %s20, 1
      %s1978 = scalar_select %p1977, %s20, 1
      %p1979 = scmp.lt.s32.totalorder %s21, 0
      %s1980 = scalar_select %p1979, %s21, 0
      %s1981 = sadd.s32 %s1980, %s1978
      %s1982 = smul.addr %s1981, 2
      %s1983 = scalar_lea.vmem %s3, %s1982
      // Predicated region
      $region37: #{_lambda_.9} parent=27 // pred_check
        %p1984 = pneg %p108
      $region38: #{_lambda_.9} parent=27 // pred_check_branch
        %1986 = sbr.rel (%p1984) target = $region40
      $region39: #{_lambda_.9} parent=27 // pred_region
        %s1987 = smul.u32 8, %s22
      $region40: #{_lambda_.9} parent=27 // pred_fallthru
        _
      // Predicated region
      $region41: #{_lambda_.9} parent=27 // pred_check
        %p1988 = pneg %p136
      $region42: #{_lambda_.9} parent=27 // pred_check_branch
        %1990 = sbr.rel (%p1988) target = $region44
      $region43: #{_lambda_.9} parent=27 // pred_region
        _
      $region44: #{_lambda_.9} parent=27 // pred_fallthru
        _
    $region28: #{_lambda_.9} parent=5 // pred_fallthru
      _
    %p1991 = scmp.le.s32.totalorder 2, %s10
    // Predicated region
    $region45: #{_lambda_.9} parent=5 // pred_check
      %p1992 = pneg %p1991
    $region46: #{_lambda_.9} parent=5 // pred_check_branch
      %1994 = sbr.rel (%p1992) target = $region48
    $region47: #{_lambda_.9} parent=5 // pred_region
      %s1995 = ssub.s32 %s10, 2
      // Predicated region
      $region49: #{_lambda_.9} parent=47 // pred_check
        %p1996 = pneg %p114
      $region50: #{_lambda_.9} parent=47 // pred_check_branch
        %1998 = sbr.rel (%p1996) target = $region52
      $region51: #{_lambda_.9} parent=47 // pred_region
        %s1999 = smul.u32 8, %s25
        %p2000 = scmp.lt.s32.totalorder %s23, 1
        %s2001 = scalar_select %p2000, %s23, 1
        %p2002 = scmp.lt.s32.totalorder %s1999, 7
        %s2003 = scalar_select %p2002, %s1999, 7
        %p2004 = scmp.lt.s32.totalorder %s24, 0
        %s2005 = scalar_select %p2004, %s24, 0
        %s2006 = sadd.s32 %s2005, %s2003
        %s2007 = smul.addr %s2001, 8
        %s2008 = sadd.s32 %s2006, %s2007
        %s2009 = smul.addr %s2008, 4
        %s2010 = scalar_lea.vmem %s2, %s2009
      $region52: #{_lambda_.9} parent=47 // pred_fallthru
        _
      // Predicated region
      $region53: #{_lambda_.9} parent=47 // pred_check
        %p2011 = pneg %p142
      $region54: #{_lambda_.9} parent=47 // pred_check_branch
        %2013 = sbr.rel (%p2011) target = $region56
      $region55: #{_lambda_.9} parent=47 // pred_region
        %p2014 = scmp.lt.s32.totalorder %s23, 1
        %s2015 = scalar_select %p2014, %s23, 1
        %p2016 = scmp.lt.s32.totalorder %s24, 0
        %s2017 = scalar_select %p2016, %s24, 0
        %s2018 = sadd.s32 %s2017, %s2015
        %s2019 = smul.addr %s2018, 2
        %s2020 = scalar_lea.vmem %s3, %s2019
      $region56: #{_lambda_.9} parent=47 // pred_fallthru
        _
    $region48: #{_lambda_.9} parent=5 // pred_fallthru
      _
  $region6: #{_lambda_.9} parent=0 // loop_footer
    %s14 = sadd.s32 1, %s10
  $region7: #{_lambda_.9} parent=0 // loop_footer_branch
    %9 = sbr.rel target = $region3
  $region8: #{_lambda_.9} parent=0 // loop_exit
    _

// kernel: _lambda_.17
$region0: #{_lambda_.17}
  #allocation0 [shape = 'u32[]', space=smem, size = 0x4, offset = 0x4, fixed_abs, tag = 'smem constant byte address 0x4 - core index']
  #allocation1 [shape = 'u32[144,128]{1,0:T(1,128)}', space=vmem, size = 0x12000, scoped, tag = 'internal scratch']
  %s0 = inlined_call_operand.vmem [shape: bf16[128,128], index: 0, kind: input, shape index: {}]
  %s1 = inlined_call_operand.vmem [shape: bf16[128,128], index: 1, kind: input, shape index: {}]
  %s2 = inlined_call_operand.vmem [shape: f32[1,128], index: 2, kind: input, shape index: {}]
  %s3 = inlined_call_operand.vmem [shape: f32[1,128], index: 3, kind: input, shape index: {}]
  %s4 = inlined_call_operand.vmem [shape: bf16[128,128], index: 4, kind: output, shape index: {}]
  %s5 = sld [smem:[#allocation0]]
  $region26: #{_lambda_.17} parent=0
    _
  %s7 = ssub.s32 1, %s5
  %s8 = scalar_select 0, %s7, %s5
  // Predicated region
  $region2: #{_lambda_.17} parent=0 // pred_check
    _
  $region3: #{_lambda_.17} parent=0 // pred_check_branch
    %10 = sbr.rel (0) target = $region5
  $region4: #{_lambda_.17} parent=0 // pred_region
    _
  $region5: #{_lambda_.17} parent=0 // pred_fallthru
    _
  // Predicated region
  $region6: #{_lambda_.17} parent=0 // pred_check
    _
  $region7: #{_lambda_.17} parent=0 // pred_check_branch
    %12 = sbr.rel (0) target = $region9
  $region8: #{_lambda_.17} parent=0 // pred_region
    _
  $region9: #{_lambda_.17} parent=0 // pred_fallthru
    _
  // Predicated region
  $region10: #{_lambda_.17} parent=0 // pred_check
    _
  $region11: #{_lambda_.17} parent=0 // pred_check_branch
    %14 = sbr.rel (0) target = $region13
  $region12: #{_lambda_.17} parent=0 // pred_region
    _
  $region13: #{_lambda_.17} parent=0 // pred_fallthru
    _
  // Predicated region
  $region14: #{_lambda_.17} parent=0 // pred_check
    _
  $region15: #{_lambda_.17} parent=0 // pred_check_branch
    %16 = sbr.rel (0) target = $region17
  $region16: #{_lambda_.17} parent=0 // pred_region
    _
  $region17: #{_lambda_.17} parent=0 // pred_fallthru
    _
  %v17 = vld [vmem:[%s0] sm:$0xf]
  %v18 = vld [vmem:[%s0 + $0x4] sm:$0xf]
  %v19 = vld [vmem:[%s0 + $0x8] sm:$0xf]
  %v20 = vld [vmem:[%s0 + $0xc] sm:$0xf]
  %v21 = vld [vmem:[%s0 + $0x10] sm:$0xf]
  %v22 = vld [vmem:[%s0 + $0x14] sm:$0xf]
  %v23 = vld [vmem:[%s0 + $0x18] sm:$0xf]
  %v24 = vld [vmem:[%s0 + $0x1c] sm:$0xf]
  %v25 = vld [vmem:[%s0 + $0x20] sm:$0xf]
  %v26 = vld [vmem:[%s0 + $0x24] sm:$0xf]
  %v27 = vld [vmem:[%s0 + $0x28] sm:$0xf]
  %v28 = vld [vmem:[%s0 + $0x2c] sm:$0xf]
  %v29 = vld [vmem:[%s0 + $0x30] sm:$0xf]
  %v30 = vld [vmem:[%s0 + $0x34] sm:$0xf]
  %v31 = vld [vmem:[%s0 + $0x38] sm:$0xf]
  %v32 = vld [vmem:[%s0 + $0x3c] sm:$0xf]
  %v33 = vunpack.c.l.bf16 %v17
  %v34 = vunpack.c.l.bf16 %v18
  %v35 = vunpack.c.l.bf16 %v19
  %v36 = vunpack.c.l.bf16 %v20
  %v37 = vunpack.c.l.bf16 %v21
  %v38 = vunpack.c.l.bf16 %v22
  %v39 = vunpack.c.l.bf16 %v23
  %v40 = vunpack.c.l.bf16 %v24
  %v41 = vunpack.c.l.bf16 %v25
  %v42 = vunpack.c.l.bf16 %v26
  %v43 = vunpack.c.l.bf16 %v27
  %v44 = vunpack.c.l.bf16 %v28
  %v45 = vunpack.c.l.bf16 %v29
  %v46 = vunpack.c.l.bf16 %v30
  %v47 = vunpack.c.l.bf16 %v31
  %v48 = vunpack.c.l.bf16 %v32
  %v49 = vld [vmem:[%s2] sm:$0x1]
  %v51 = vlaneseq
  %v52 = vshrl.u32 %v51, 7
  %v53 = vsub.s32 0, %v52
  %v54 = vrot.slane %v49, %v53
  %v56 = vmul.f32 %v33, %v54
  %v57 = vmul.f32 %v34, %v54
  %v58 = vmul.f32 %v35, %v54
  %v59 = vmul.f32 %v36, %v54
  %v60 = vmul.f32 %v37, %v54
  %v61 = vmul.f32 %v38, %v54
  %v62 = vmul.f32 %v39, %v54
  %v63 = vmul.f32 %v40, %v54
  %v64 = vmul.f32 %v41, %v54
  %v65 = vmul.f32 %v42, %v54
  %v66 = vmul.f32 %v43, %v54
  %v67 = vmul.f32 %v44, %v54
  %v68 = vmul.f32 %v45, %v54
  %v69 = vmul.f32 %v46, %v54
  %v70 = vmul.f32 %v47, %v54
  %v71 = vmul.f32 %v48, %v54
  %v72 = vld [vmem:[%s3] sm:$0x1]
  %v74 = vlaneseq
  %v75 = vshrl.u32 %v74, 7
  %v76 = vsub.s32 0, %v75
  %v77 = vrot.slane %v72, %v76
  %v79 = vadd.f32 %v56, %v77
  %v80 = vadd.f32 %v57, %v77
  %v81 = vadd.f32 %v58, %v77
  %v82 = vadd.f32 %v59, %v77
  %v83 = vadd.f32 %v60, %v77
  %v84 = vadd.f32 %v61, %v77
  %v85 = vadd.f32 %v62, %v77
  %v86 = vadd.f32 %v63, %v77
  %v87 = vadd.f32 %v64, %v77
  %v88 = vadd.f32 %v65, %v77
  %v89 = vadd.f32 %v66, %v77
  %v90 = vadd.f32 %v67, %v77
  %v91 = vadd.f32 %v68, %v77
  %v92 = vadd.f32 %v69, %v77
  %v93 = vadd.f32 %v70, %v77
  %v94 = vadd.f32 %v71, %v77
  %v95 = vld [vmem:[%s1] sm:$0xf]
  %v96 = vld [vmem:[%s1 + $0x4] sm:$0xf]
  %v97 = vld [vmem:[%s1 + $0x8] sm:$0xf]
  %v98 = vld [vmem:[%s1 + $0xc] sm:$0xf]
  %v99 = vld [vmem:[%s1 + $0x10] sm:$0xf]
  %v100 = vld [vmem:[%s1 + $0x14] sm:$0xf]
  %v101 = vld [vmem:[%s1 + $0x18] sm:$0xf]
  %v102 = vld [vmem:[%s1 + $0x1c] sm:$0xf]
  %v103 = vld [vmem:[%s1 + $0x20] sm:$0xf]
  %v104 = vld [vmem:[%s1 + $0x24] sm:$0xf]
  %v105 = vld [vmem:[%s1 + $0x28] sm:$0xf]
  %v106 = vld [vmem:[%s1 + $0x2c] sm:$0xf]
  %v107 = vld [vmem:[%s1 + $0x30] sm:$0xf]
  %v108 = vld [vmem:[%s1 + $0x34] sm:$0xf]
  %v109 = vld [vmem:[%s1 + $0x38] sm:$0xf]
  %v110 = vld [vmem:[%s1 + $0x3c] sm:$0xf]
  %v111 = vunpack.c.l.bf16 %v95
  %v112 = vunpack.c.l.bf16 %v96
  %v113 = vunpack.c.l.bf16 %v97
  %v114 = vunpack.c.l.bf16 %v98
  %v115 = vunpack.c.l.bf16 %v99
  %v116 = vunpack.c.l.bf16 %v100
  %v117 = vunpack.c.l.bf16 %v101
  %v118 = vunpack.c.l.bf16 %v102
  %v119 = vunpack.c.l.bf16 %v103
  %v120 = vunpack.c.l.bf16 %v104
  %v121 = vunpack.c.l.bf16 %v105
  %v122 = vunpack.c.l.bf16 %v106
  %v123 = vunpack.c.l.bf16 %v107
  %v124 = vunpack.c.l.bf16 %v108
  %v125 = vunpack.c.l.bf16 %v109
  %v126 = vunpack.c.l.bf16 %v110
  %v127 = vadd.f32 %v79, %v111
  %v128 = vadd.f32 %v80, %v112
  %v129 = vadd.f32 %v81, %v113
  %v130 = vadd.f32 %v82, %v114
  %v131 = vadd.f32 %v83, %v115
  %v132 = vadd.f32 %v84, %v116
  %v133 = vadd.f32 %v85, %v117
  %v134 = vadd.f32 %v86, %v118
  %v135 = vadd.f32 %v87, %v119
  %v136 = vadd.f32 %v88, %v120
  %v137 = vadd.f32 %v89, %v121
  %v138 = vadd.f32 %v90, %v122
  %v139 = vadd.f32 %v91, %v123
  %v140 = vadd.f32 %v92, %v124
  %v141 = vadd.f32 %v93, %v125
  %v142 = vadd.f32 %v94, %v126
  %v143 = vmax.f32 %v127, 0.0
  %v144 = vmax.f32 %v128, 0.0
  %v145 = vmax.f32 %v129, 0.0
  %v146 = vmax.f32 %v130, 0.0
  %v147 = vmax.f32 %v131, 0.0
  %v148 = vmax.f32 %v132, 0.0
  %v149 = vmax.f32 %v133, 0.0
  %v150 = vmax.f32 %v134, 0.0
  %v151 = vmax.f32 %v135, 0.0
  %v152 = vmax.f32 %v136, 0.0
  %v153 = vmax.f32 %v137, 0.0
  %v154 = vmax.f32 %v138, 0.0
  %v155 = vmax.f32 %v139, 0.0
  %v156 = vmax.f32 %v140, 0.0
  %v157 = vmax.f32 %v141, 0.0
  %v158 = vmax.f32 %v142, 0.0
  %v159 = vpack.c.bf16 %v144, %v143
  %v160 = vpack.c.bf16 %v146, %v145
  %v161 = vpack.c.bf16 %v148, %v147
  %v162 = vpack.c.bf16 %v150, %v149
  %v163 = vpack.c.bf16 %v152, %v151
  %v164 = vpack.c.bf16 %v154, %v153
  %v165 = vpack.c.bf16 %v156, %v155
  %v166 = vpack.c.bf16 %v158, %v157
  %v175 = vunpack.c.l.b16 %v159
  %v176 = vunpack.c.h.b16 %v159
  %v177 = vunpack.c.l.b16 %v160
  %v178 = vunpack.c.h.b16 %v160
  %v179 = vunpack.c.l.b16 %v161
  %v180 = vunpack.c.h.b16 %v161
  %v181 = vunpack.c.l.b16 %v162
  %v182 = vunpack.c.h.b16 %v162
  %v183 = vunpack.c.l.b16 %v163
  %v184 = vunpack.c.h.b16 %v163
  %v185 = vunpack.c.l.b16 %v164
  %v186 = vunpack.c.h.b16 %v164
  %v187 = vunpack.c.l.b16 %v165
  %v188 = vunpack.c.h.b16 %v165
  %v189 = vunpack.c.l.b16 %v166
  %v190 = vunpack.c.h.b16 %v166
  %v191 = vpack.c.b16 %v175, %v175
  %v192 = vpack.c.b16 %v176, %v176
  %v193 = vpack.c.b16 %v177, %v177
  %v194 = vpack.c.b16 %v178, %v178
  %v195 = vpack.c.b16 %v179, %v179
  %v196 = vpack.c.b16 %v180, %v180
  %v197 = vpack.c.b16 %v181, %v181
  %v198 = vpack.c.b16 %v182, %v182
  %v199 = vpack.c.b16 %v183, %v183
  %v200 = vpack.c.b16 %v184, %v184
  %v201 = vpack.c.b16 %v185, %v185
  %v202 = vpack.c.b16 %v186, %v186
  %v203 = vpack.c.b16 %v187, %v187
  %v204 = vpack.c.b16 %v188, %v188
  %v205 = vpack.c.b16 %v189, %v189
  %v206 = vpack.c.b16 %v190, %v190
  %223 = vst [vmem:[%s4] sm:$0xf] %v191
  %224 = vst [vmem:[%s4 + $0x4] sm:$0xf] %v192
  %225 = vst [vmem:[%s4 + $0x8] sm:$0xf] %v193
  %226 = vst [vmem:[%s4 + $0xc] sm:$0xf] %v194
  %227 = vst [vmem:[%s4 + $0x10] sm:$0xf] %v195
  %228 = vst [vmem:[%s4 + $0x14] sm:$0xf] %v196
  %229 = vst [vmem:[%s4 + $0x18] sm:$0xf] %v197
  %230 = vst [vmem:[%s4 + $0x1c] sm:$0xf] %v198
  %231 = vst [vmem:[%s4 + $0x20] sm:$0xf] %v199
  %232 = vst [vmem:[%s4 + $0x24] sm:$0xf] %v200
  %233 = vst [vmem:[%s4 + $0x28] sm:$0xf] %v201
  %234 = vst [vmem:[%s4 + $0x2c] sm:$0xf] %v202
  %235 = vst [vmem:[%s4 + $0x30] sm:$0xf] %v203
  %236 = vst [vmem:[%s4 + $0x34] sm:$0xf] %v204
  %237 = vst [vmem:[%s4 + $0x38] sm:$0xf] %v205
  %238 = vst [vmem:[%s4 + $0x3c] sm:$0xf] %v206
  // Predicated region
  $region18: #{_lambda_.17} parent=0 // pred_check
    _
  $region19: #{_lambda_.17} parent=0 // pred_check_branch
    %240 = sbr.rel (0) target = $region21
  $region20: #{_lambda_.17} parent=0 // pred_region
    _
  $region21: #{_lambda_.17} parent=0 // pred_fallthru
    _
  // Predicated region
  $region22: #{_lambda_.17} parent=0 // pred_check
    _
  $region23: #{_lambda_.17} parent=0 // pred_check_branch
    %242 = sbr.rel (0) target = $region25
  $region24: #{_lambda_.17} parent=0 // pred_region
    _
  $region25: #{_lambda_.17} parent=0 // pred_fallthru
    _

// kernel: _lambda_.11
$region0: #{_lambda_.11}
  #allocation0 [shape = 'u32[]', space=smem, size = 0x4, offset = 0x4, fixed_abs, tag = 'smem constant byte address 0x4 - core index']
  #allocation1 [shape = 'u32[144,128]{1,0:T(1,128)}', space=vmem, size = 0x12000, scoped, tag = 'internal scratch']
  #allocation2 [shape = 'f32[64,128]{1,0:T(8,128)}', space=vmem, size = 0x8000, scoped, tag = 'scratch operand']
  %s0 = inlined_call_operand.vmem [shape: bf16[2,1,10,10,128], index: 0, kind: input, shape index: {}]
  %s1 = inlined_call_operand.vmem [shape: bf16[3,384,128], index: 1, kind: input, shape index: {}]
  %s2 = inlined_call_operand.vmem [shape: bf16[2,8,8,128], index: 2, kind: output, shape index: {0}]
  %s3 = inlined_call_operand.vmem [shape: f32[2,2,128], index: 3, kind: output, shape index: {1}]
  %4 = xla_tuple %s2, %s3
  %s5 = sld [smem:[#allocation0]]
  $region57: #{_lambda_.11} parent=0
    _
  %s7 = ssub.s32 1, %s5
  %s8 = scalar_select 0, %s7, %s5
  loop: start=0, step=1, limit=4
  $region2: #{_lambda_.11} parent=0 // loop_pre_header
    _
  $region3: #{_lambda_.11} parent=0 // loop_header
    %s10 = sphi 0, %s14
    %p11 = scmp.ge.s32.totalorder %s10, 4
    %s17 = sphi 0, %s36
    %s18 = sphi 0, %s32
    %s19 = sphi 0, %s28
    %s20 = sphi 0, %s17
    %s21 = sphi 0, %s18
    %s22 = sphi 0, %s19
    %s23 = sphi 0, %s20
    %s24 = sphi 0, %s21
    %s25 = sphi 0, %s22
    %s39 = sphi 0, %s41
    %s42 = sphi 0, %s39
    %s43 = sphi 0, %s42
    %s59 = sphi 0, %s43
    %s65 = sphi 0, %s67
    %s68 = sphi 0, %s65
    %s69 = sphi 0, %s68
    %s85 = sphi 0, %s69
    %s95 = sphi 0, %s97
    %s98 = sphi 0, %s95
    %s99 = sphi 0, %s98
    %s115 = sphi 0, %s99
    %s123 = sphi 0, %s125
    %s126 = sphi 0, %s123
    %s127 = sphi 0, %s126
    %s143 = sphi 0, %s127
  $region4: #{_lambda_.11} parent=0 // loop_header_branch
    %13 = sbr.rel (%p11) target = $region8
  $region5: #{_lambda_.11} parent=0 // loop_body
    %s15 = ssub.s32 %s10, 1
    %s16 = ssub.s32 %s10, 2
    %s26 = sadd.s32 1, %s19
    %p27 = scmp.ge.s32.totalorder %s26, 1
    %s28 = scalar_select %p27, 0, %s26
    %s29 = sadd.s32 1, %s18
    %s30 = scalar_select %p27, %s29, %s18
    %p31 = scmp.ge.s32.totalorder %s30, 1
    %s32 = scalar_select %p31, 0, %s30
    %s33 = sadd.s32 1, %s17
    %s34 = scalar_select %p31, %s33, %s17
    %p35 = scmp.ge.s32.totalorder %s34, 2
    %s36 = scalar_select %p35, 0, %s34
    %s37 = ssub.s32 %s17, %s36
    %p38 = scmp.eq.s32.totalorder %s37, 0
    %s40 = sadd.s32 %s39, 1
    %s41 = scalar_select %p38, %s39, %s40
    %p44 = pneg %p38
    %p45 = scmp.eq.s32.totalorder %s10, 1
    %p46 = por %p44, %p45
    %p47 = scmp.ne.s32.totalorder %s39, %s42
    %p48 = scmp.eq.s32.totalorder %s10, 0
    %p49 = por %p47, %p48
    %p50 = scmp.ne.s32.totalorder %s39, %s42
    %p51 = scmp.eq.s32.totalorder %s15, 1
    %p52 = por %p50, %p51
    %p53 = scmp.ne.s32.totalorder %s42, %s43
    %p54 = scmp.eq.s32.totalorder %s15, 0
    %p55 = por %p53, %p54
    %p56 = scmp.ne.s32.totalorder %s42, %s43
    %p57 = scmp.eq.s32.totalorder %s16, 1
    %p58 = por %p56, %p57
    %p60 = scmp.ne.s32.totalorder %s43, %s59
    %p61 = scmp.eq.s32.totalorder %s16, 0
    %p62 = por %p60, %p61
    %s63 = ssub.s32 %s18, %s32
    %p64 = scmp.eq.s32.totalorder %s63, 0
    %s66 = sadd.s32 %s65, 1
    %s67 = scalar_select %p64, %s65, %s66
    %p70 = pneg %p64
    %p71 = scmp.eq.s32.totalorder %s10, 1
    %p72 = por %p70, %p71
    %p73 = scmp.ne.s32.totalorder %s65, %s68
    %p74 = scmp.eq.s32.totalorder %s10, 0
    %p75 = por %p73, %p74
    %p76 = scmp.ne.s32.totalorder %s65, %s68
    %p77 = scmp.eq.s32.totalorder %s15, 1
    %p78 = por %p76, %p77
    %p79 = scmp.ne.s32.totalorder %s68, %s69
    %p80 = scmp.eq.s32.totalorder %s15, 0
    %p81 = por %p79, %p80
    %p82 = scmp.ne.s32.totalorder %s68, %s69
    %p83 = scmp.eq.s32.totalorder %s16, 1
    %p84 = por %p82, %p83
    %p86 = scmp.ne.s32.totalorder %s69, %s85
    %p87 = scmp.eq.s32.totalorder %s16, 0
    %p88 = por %p86, %p87
    %s89 = ssub.s32 %s17, %s36
    %s90 = ssub.s32 %s19, %s28
    %s91 = sor.u32 %s89, %s90
    %s92 = ssub.s32 %s18, %s32
    %s93 = sor.u32 %s91, %s92
    %p94 = scmp.eq.s32.totalorder %s93, 0
    %s96 = sadd.s32 %s95, 1
    %s97 = scalar_select %p94, %s95, %s96
    %p100 = pneg %p94
    %p101 = scmp.eq.s32.totalorder %s10, 1
    %p102 = por %p100, %p101
    %p103 = scmp.ne.s32.totalorder %s95, %s98
    %p104 = scmp.eq.s32.totalorder %s10, 0
    %p105 = por %p103, %p104
    %p106 = scmp.ne.s32.totalorder %s95, %s98
    %p107 = scmp.eq.s32.totalorder %s15, 1
    %p108 = por %p106, %p107
    %p109 = scmp.ne.s32.totalorder %s98, %s99
    %p110 = scmp.eq.s32.totalorder %s15, 0
    %p111 = por %p109, %p110
    %p112 = scmp.ne.s32.totalorder %s98, %s99
    %p113 = scmp.eq.s32.totalorder %s16, 1
    %p114 = por %p112, %p113
    %p116 = scmp.ne.s32.totalorder %s99, %s115
    %p117 = scmp.eq.s32.totalorder %s16, 0
    %p118 = por %p116, %p117
    %s119 = ssub.s32 %s17, %s36
    %s120 = ssub.s32 %s18, %s32
    %s121 = sor.u32 %s119, %s120
    %p122 = scmp.eq.s32.totalorder %s121, 0
    %s124 = sadd.s32 %s123, 1
    %s125 = scalar_select %p122, %s123, %s124
    %p128 = pneg %p122
    %p129 = scmp.eq.s32.totalorder %s10, 1
    %p130 = por %p128, %p129
    %p131 = scmp.ne.s32.totalorder %s123, %s126
    %p132 = scmp.eq.s32.totalorder %s10, 0
    %p133 = por %p131, %p132
    %p134 = scmp.ne.s32.totalorder %s123, %s126
    %p135 = scmp.eq.s32.totalorder %s15, 1
    %p136 = por %p134, %p135
    %p137 = scmp.ne.s32.totalorder %s126, %s127
    %p138 = scmp.eq.s32.totalorder %s15, 0
    %p139 = por %p137, %p138
    %p140 = scmp.ne.s32.totalorder %s126, %s127
    %p141 = scmp.eq.s32.totalorder %s16, 1
    %p142 = por %p140, %p141
    %p144 = scmp.ne.s32.totalorder %s127, %s143
    %p145 = scmp.eq.s32.totalorder %s16, 0
    %p146 = por %p144, %p145
    %p147 = scmp.le.s32.totalorder 1, %s10
    %p148 = scmp.lt.s32.totalorder %s10, 3
    %p149 = pnand %p147, %p148
    %p150 = pneg %p149
    // Predicated region
    $region9: #{_lambda_.11} parent=5 // pred_check
      _
    $region10: #{_lambda_.11} parent=5 // pred_check_branch
      %152 = sbr.rel (%p149) target = $region12
    $region11: #{_lambda_.11} parent=5 // pred_region
      %s153 = ssub.s32 %s10, 1
      // Predicated region
      $region13: #{_lambda_.11} parent=11 // pred_check
        %p154 = pneg %p81
      $region14: #{_lambda_.11} parent=11 // pred_check_branch
        %156 = sbr.rel (%p154) target = $region16
      $region15: #{_lambda_.11} parent=11 // pred_region
        %p157 = scmp.lt.s32.totalorder %s21, 0
        %s158 = scalar_select %p157, %s21, 0
        %s159 = smul.addr %s158, 4
        %s160 = scalar_lea.vmem %s1, %s159
      $region16: #{_lambda_.11} parent=11 // pred_fallthru
        _
    $region12: #{_lambda_.11} parent=5 // pred_fallthru
      _
    %p161 = scmp.lt.s32.totalorder %s10, 2
    // Predicated region
    $region17: #{_lambda_.11} parent=5 // pred_check
      %p162 = pneg %p161
    $region18: #{_lambda_.11} parent=5 // pred_check_branch
      %164 = sbr.rel (%p162) target = $region20
    $region19: #{_lambda_.11} parent=5 // pred_region
      // Predicated region
      $region21: #{_lambda_.11} parent=19 // pred_check
        %p165 = pneg %p49
      $region22: #{_lambda_.11} parent=19 // pred_check_branch
        %167 = sbr.rel (%p165) target = $region24
      $region23: #{_lambda_.11} parent=19 // pred_region
        %p168 = scmp.lt.s32.totalorder %s17, 1
        %s169 = scalar_select %p168, %s17, 1
        %s170 = smul.addr %s169, 20
        %s171 = smul.addr %s170, 4
        %s172 = scalar_lea.vmem %s0, %s171
      $region24: #{_lambda_.11} parent=19 // pred_fallthru
        _
    $region20: #{_lambda_.11} parent=5 // pred_fallthru
      _
    %p173 = scmp.le.s32.totalorder 1, %s10
    %p174 = scmp.lt.s32.totalorder %s10, 3
    %p175 = pnand %p173, %p174
    %p176 = pneg %p175
    // Predicated region
    $region25: #{_lambda_.11} parent=5 // pred_check
      _
    $region26: #{_lambda_.11} parent=5 // pred_check_branch
      %178 = sbr.rel (%p175) target = $region28
    $region27: #{_lambda_.11} parent=5 // pred_region
      %s179 = ssub.s32 %s10, 1
      %p180 = scmp.lt.s32.totalorder %s20, 1
      %s181 = scalar_select %p180, %s20, 1
      %s182 = smul.addr %s181, 20
      %s183 = smul.addr %s182, 4
      %s184 = scalar_lea.vmem %s0, %s183
      %p185 = pneg %p55
      %p186 = pneg %p52
      %p187 = scmp.lt.s32.totalorder %s21, 0
      %s188 = scalar_select %p187, %s21, 0
      %s189 = smul.addr %s188, 4
      %s190 = scalar_lea.vmem %s1, %s189
      %p191 = pneg %p81
      %p192 = pneg %p78
      %p193 = pneg %p111
      %p194 = pneg %p108
      %s195 = smul.u32 8, %s22
      %p196 = scmp.lt.s32.totalorder %s20, 1
      %s197 = scalar_select %p196, %s20, 1
      %p198 = scmp.lt.s32.totalorder %s195, 7
      %s199 = scalar_select %p198, %s195, 7
      %p200 = scmp.lt.s32.totalorder %s21, 0
      %s201 = scalar_select %p200, %s21, 0
      %s202 = sadd.s32 %s201, %s199
      %s203 = smul.addr %s197, 8
      %s204 = sadd.s32 %s202, %s203
      %s205 = smul.addr %s204, 4
      %s206 = scalar_lea.vmem %s2, %s205
      %p207 = pneg %p139
      %p208 = pneg %p136
      %p209 = scmp.lt.s32.totalorder %s20, 1
      %s210 = scalar_select %p209, %s20, 1
      %p211 = scmp.lt.s32.totalorder %s21, 0
      %s212 = scalar_select %p211, %s21, 0
      %s213 = sadd.s32 %s212, %s210
      %s214 = smul.addr %s213, 2
      %s215 = scalar_lea.vmem %s3, %s214
      %p216 = scmp.lt.s32.totalorder %s20, 1
      %s217 = scalar_select %p216, %s20, 1
      %s218 = smul.addr %s217, 20
      %s219 = smul.addr %s218, 4
      %s220 = scalar_lea.vmem %s0, %s219
      %p221 = scmp.lt.s32.totalorder %s21, 0
      %s222 = scalar_select %p221, %s21, 0
      %s223 = smul.addr %s222, 4
      %s224 = scalar_lea.vmem %s1, %s223
      %s225 = smul.u32 8, %s22
      %p226 = scmp.lt.s32.totalorder %s20, 1
      %s227 = scalar_select %p226, %s20, 1
      %p228 = scmp.lt.s32.totalorder %s225, 7
      %s229 = scalar_select %p228, %s225, 7
      %p230 = scmp.lt.s32.totalorder %s21, 0
      %s231 = scalar_select %p230, %s21, 0
      %s232 = sadd.s32 %s231, %s229
      %s233 = smul.addr %s227, 8
      %s234 = sadd.s32 %s232, %s233
      %s235 = smul.addr %s234, 4
      %s236 = scalar_lea.vmem %s2, %s235
      %s237 = smul.u32 8, %s22
      %p238 = scmp.lt.s32.totalorder %s20, 1
      %s239 = scalar_select %p238, %s20, 1
      %p240 = scmp.lt.s32.totalorder %s21, 0
      %s241 = scalar_select %p240, %s21, 0
      %s242 = sadd.s32 %s241, %s239
      %s243 = smul.addr %s242, 2
      %s244 = scalar_lea.vmem %s3, %s243
      %s246 = smul.u32 %s22, 8
      %s247 = smul.u32 %s246, 2
      %s248 = smul.addr %s247, 4
      %s249 = scalar_lea.vmem %s220, %s248
      %v250 = vld [vmem:[%s249] sm:$0xf]
      %v251 = vld [vmem:[%s249 + $0x8] sm:$0xf]
      %v252 = vld [vmem:[%s249 + $0x10] sm:$0xf]
      %v253 = vld [vmem:[%s249 + $0x18] sm:$0xf]
      %v254 = vld [vmem:[%s249 + $0x20] sm:$0xf]
      %v255 = vld [vmem:[%s249 + $0x28] sm:$0xf]
      %v256 = vld [vmem:[%s249 + $0x30] sm:$0xf]
      %v257 = vld [vmem:[%s249 + $0x38] sm:$0xf]
      %v258 = vld [vmem:[%s249 + $0x4] sm:$0x1]
      %v259 = vld [vmem:[%s249 + $0xc] sm:$0x1]
      %v260 = vld [vmem:[%s249 + $0x14] sm:$0x1]
      %v261 = vld [vmem:[%s249 + $0x1c] sm:$0x1]
      %v262 = vld [vmem:[%s249 + $0x24] sm:$0x1]
      %v263 = vld [vmem:[%s249 + $0x2c] sm:$0x1]
      %v264 = vld [vmem:[%s249 + $0x34] sm:$0x1]
      %v265 = vld [vmem:[%s249 + $0x3c] sm:$0x1]
      %vm266 = vsmask.f32 3328
      %vm267 = vsmask.f32 7440
      %vm268 = vmor %vm266, %vm267
      %v270 = vshrl.u32 %v250, 16
      %v272 = vrot.slane %v270, 4
      %v273 = vshll.u32 %v250, 16
      %v275 = vrot.slane %v273, 5
      %v276 = vor.u32 %v272, %v275
      %v277 = vrot.slane %v276, 4
      %v279 = vshll.u32 %v258, 16
      %v281 = vrot.slane %v279, 5
      %v282 = vsel %vm268, %v277, %v281
      %v284 = vshrl.u32 %v251, 16
      %v286 = vrot.slane %v284, 4
      %v287 = vshll.u32 %v251, 16
      %v289 = vrot.slane %v287, 5
      %v290 = vor.u32 %v286, %v289
      %v291 = vrot.slane %v290, 4
      %v293 = vshll.u32 %v259, 16
      %v295 = vrot.slane %v293, 5
      %v296 = vsel %vm268, %v291, %v295
      %v298 = vshrl.u32 %v252, 16
      %v300 = vrot.slane %v298, 4
      %v301 = vshll.u32 %v252, 16
      %v303 = vrot.slane %v301, 5
      %v304 = vor.u32 %v300, %v303
      %v305 = vrot.slane %v304, 4
      %v307 = vshll.u32 %v260, 16
      %v309 = vrot.slane %v307, 5
      %v310 = vsel %vm268, %v305, %v309
      %v312 = vshrl.u32 %v253, 16
      %v314 = vrot.slane %v312, 4
      %v315 = vshll.u32 %v253, 16
      %v317 = vrot.slane %v315, 5
      %v318 = vor.u32 %v314, %v317
      %v319 = vrot.slane %v318, 4
      %v321 = vshll.u32 %v261, 16
      %v323 = vrot.slane %v321, 5
      %v324 = vsel %vm268, %v319, %v323
      %v326 = vshrl.u32 %v254, 16
      %v328 = vrot.slane %v326, 4
      %v329 = vshll.u32 %v254, 16
      %v331 = vrot.slane %v329, 5
      %v332 = vor.u32 %v328, %v331
      %v333 = vrot.slane %v332, 4
      %v335 = vshll.u32 %v262, 16
      %v337 = vrot.slane %v335, 5
      %v338 = vsel %vm268, %v333, %v337
      %v340 = vshrl.u32 %v255, 16
      %v342 = vrot.slane %v340, 4
      %v343 = vshll.u32 %v255, 16
      %v345 = vrot.slane %v343, 5
      %v346 = vor.u32 %v342, %v345
      %v347 = vrot.slane %v346, 4
      %v349 = vshll.u32 %v263, 16
      %v351 = vrot.slane %v349, 5
      %v352 = vsel %vm268, %v347, %v351
      %v354 = vshrl.u32 %v256, 16
      %v356 = vrot.slane %v354, 4
      %v357 = vshll.u32 %v256, 16
      %v359 = vrot.slane %v357, 5
      %v360 = vor.u32 %v356, %v359
      %v361 = vrot.slane %v360, 4
      %v363 = vshll.u32 %v264, 16
      %v365 = vrot.slane %v363, 5
      %v366 = vsel %vm268, %v361, %v365
      %v368 = vshrl.u32 %v257, 16
      %v370 = vrot.slane %v368, 4
      %v371 = vshll.u32 %v257, 16
      %v373 = vrot.slane %v371, 5
      %v374 = vor.u32 %v370, %v373
      %v375 = vrot.slane %v374, 4
      %v377 = vshll.u32 %v265, 16
      %v379 = vrot.slane %v377, 5
      %v380 = vsel %vm268, %v375, %v379
      %v381 = vld [vmem:[%s249] sm:$0xe]
      %v382 = vld [vmem:[%s249 + $0x8] sm:$0xe]
      %v383 = vld [vmem:[%s249 + $0x10] sm:$0xe]
      %v384 = vld [vmem:[%s249 + $0x18] sm:$0xe]
      %v385 = vld [vmem:[%s249 + $0x20] sm:$0xe]
      %v386 = vld [vmem:[%s249 + $0x28] sm:$0xe]
      %v387 = vld [vmem:[%s249 + $0x30] sm:$0xe]
      %v388 = vld [vmem:[%s249 + $0x38] sm:$0xe]
      %vm405 = vcmask 1042432
      %vm406 = vcmask 1046532
      %vm407 = vmor %vm405, %vm406
      %v408 = vrot.slane %v381, 5
      %v409 = vrot.slane %v408, 4
      %v410 = vrot.slane %v258, 5
      %v411 = vsel %vm407, %v409, %v410
      %v412 = vrot.slane %v382, 5
      %v413 = vrot.slane %v412, 4
      %v414 = vrot.slane %v259, 5
      %v415 = vsel %vm407, %v413, %v414
      %v416 = vrot.slane %v383, 5
      %v417 = vrot.slane %v416, 4
      %v418 = vrot.slane %v260, 5
      %v419 = vsel %vm407, %v417, %v418
      %v420 = vrot.slane %v384, 5
      %v421 = vrot.slane %v420, 4
      %v422 = vrot.slane %v261, 5
      %v423 = vsel %vm407, %v421, %v422
      %v424 = vrot.slane %v385, 5
      %v425 = vrot.slane %v424, 4
      %v426 = vrot.slane %v262, 5
      %v427 = vsel %vm407, %v425, %v426
      %v428 = vrot.slane %v386, 5
      %v429 = vrot.slane %v428, 4
      %v430 = vrot.slane %v263, 5
      %v431 = vsel %vm407, %v429, %v430
      %v432 = vrot.slane %v387, 5
      %v433 = vrot.slane %v432, 4
      %v434 = vrot.slane %v264, 5
      %v435 = vsel %vm407, %v433, %v434
      %v436 = vrot.slane %v388, 5
      %v437 = vrot.slane %v436, 4
      %v438 = vrot.slane %v265, 5
      %v439 = vsel %vm407, %v437, %v438
      %v448 = vunpack.c.l.b16 %v250
      %v449 = vunpack.c.l.b16 %v251
      %v450 = vunpack.c.l.b16 %v252
      %v451 = vunpack.c.l.b16 %v253
      %v452 = vunpack.c.l.b16 %v254
      %v453 = vunpack.c.l.b16 %v255
      %v454 = vunpack.c.l.b16 %v256
      %v455 = vunpack.c.l.b16 %v257
      %v456 = vpack.c.b16 %v449, %v448
      %v457 = vpack.c.b16 %v451, %v450
      %v458 = vpack.c.b16 %v453, %v452
      %v459 = vpack.c.b16 %v455, %v454
      %v464 = vunpack.c.l.b16 %v282
      %v465 = vunpack.c.l.b16 %v296
      %v466 = vunpack.c.l.b16 %v310
      %v467 = vunpack.c.l.b16 %v324
      %v468 = vunpack.c.l.b16 %v338
      %v469 = vunpack.c.l.b16 %v352
      %v470 = vunpack.c.l.b16 %v366
      %v471 = vunpack.c.l.b16 %v380
      %v472 = vpack.c.b16 %v465, %v464
      %v473 = vpack.c.b16 %v467, %v466
      %v474 = vpack.c.b16 %v469, %v468
      %v475 = vpack.c.b16 %v471, %v470
      %v480 = vunpack.c.l.b16 %v411
      %v481 = vunpack.c.l.b16 %v415
      %v482 = vunpack.c.l.b16 %v419
      %v483 = vunpack.c.l.b16 %v423
      %v484 = vunpack.c.l.b16 %v427
      %v485 = vunpack.c.l.b16 %v431
      %v486 = vunpack.c.l.b16 %v435
      %v487 = vunpack.c.l.b16 %v439
      %v488 = vpack.c.b16 %v481, %v480
      %v489 = vpack.c.b16 %v483, %v482
      %v490 = vpack.c.b16 %v485, %v484
      %v491 = vpack.c.b16 %v487, %v486
      %v496 = vld [vmem:[%s224] sm:$0xf]
      %v497 = vld [vmem:[%s224 + $0x4] sm:$0xf]
      %v498 = vld [vmem:[%s224 + $0x8] sm:$0xf]
      %v499 = vld [vmem:[%s224 + $0xc] sm:$0xf]
      %v500 = vld [vmem:[%s224 + $0x10] sm:$0xf]
      %v501 = vld [vmem:[%s224 + $0x14] sm:$0xf]
      %v502 = vld [vmem:[%s224 + $0x18] sm:$0xf]
      %v503 = vld [vmem:[%s224 + $0x1c] sm:$0xf]
      %v504 = vld [vmem:[%s224 + $0x20] sm:$0xf]
      %v505 = vld [vmem:[%s224 + $0x24] sm:$0xf]
      %v506 = vld [vmem:[%s224 + $0x28] sm:$0xf]
      %v507 = vld [vmem:[%s224 + $0x2c] sm:$0xf]
      %v508 = vld [vmem:[%s224 + $0x30] sm:$0xf]
      %v509 = vld [vmem:[%s224 + $0x34] sm:$0xf]
      %v510 = vld [vmem:[%s224 + $0x38] sm:$0xf]
      %v511 = vld [vmem:[%s224 + $0x3c] sm:$0xf]
      %v512 = vld [vmem:[%s224 + $0x40] sm:$0xf]
      %v513 = vld [vmem:[%s224 + $0x44] sm:$0xf]
      %v514 = vld [vmem:[%s224 + $0x48] sm:$0xf]
      %v515 = vld [vmem:[%s224 + $0x4c] sm:$0xf]
      %v516 = vld [vmem:[%s224 + $0x50] sm:$0xf]
      %v517 = vld [vmem:[%s224 + $0x54] sm:$0xf]
      %v518 = vld [vmem:[%s224 + $0x58] sm:$0xf]
      %v519 = vld [vmem:[%s224 + $0x5c] sm:$0xf]
      %v520 = vld [vmem:[%s224 + $0x60] sm:$0xf]
      %v521 = vld [vmem:[%s224 + $0x64] sm:$0xf]
      %v522 = vld [vmem:[%s224 + $0x68] sm:$0xf]
      %v523 = vld [vmem:[%s224 + $0x6c] sm:$0xf]
      %v524 = vld [vmem:[%s224 + $0x70] sm:$0xf]
      %v525 = vld [vmem:[%s224 + $0x74] sm:$0xf]
      %v526 = vld [vmem:[%s224 + $0x78] sm:$0xf]
      %v527 = vld [vmem:[%s224 + $0x7c] sm:$0xf]
      %v528 = vld [vmem:[%s224 + $0x80] sm:$0xf]
      %v529 = vld [vmem:[%s224 + $0x84] sm:$0xf]
      %v530 = vld [vmem:[%s224 + $0x88] sm:$0xf]
      %v531 = vld [vmem:[%s224 + $0x8c] sm:$0xf]
      %v532 = vld [vmem:[%s224 + $0x90] sm:$0xf]
      %v533 = vld [vmem:[%s224 + $0x94] sm:$0xf]
      %v534 = vld [vmem:[%s224 + $0x98] sm:$0xf]
      %v535 = vld [vmem:[%s224 + $0x9c] sm:$0xf]
      %v536 = vld [vmem:[%s224 + $0xa0] sm:$0xf]
      %v537 = vld [vmem:[%s224 + $0xa4] sm:$0xf]
      %v538 = vld [vmem:[%s224 + $0xa8] sm:$0xf]
      %v539 = vld [vmem:[%s224 + $0xac] sm:$0xf]
      %v540 = vld [vmem:[%s224 + $0xb0] sm:$0xf]
      %v541 = vld [vmem:[%s224 + $0xb4] sm:$0xf]
      %v542 = vld [vmem:[%s224 + $0xb8] sm:$0xf]
      %v543 = vld [vmem:[%s224 + $0xbc] sm:$0xf]
      %v592 = vunpack.c.l.b16 %v496
      %v593 = vunpack.c.l.b16 %v497
      %v594 = vunpack.c.l.b16 %v498
      %v595 = vunpack.c.l.b16 %v499
      %v596 = vunpack.c.l.b16 %v500
      %v597 = vunpack.c.l.b16 %v501
      %v598 = vunpack.c.l.b16 %v502
      %v599 = vunpack.c.l.b16 %v503
      %v600 = vunpack.c.l.b16 %v504
      %v601 = vunpack.c.l.b16 %v505
      %v602 = vunpack.c.l.b16 %v506
      %v603 = vunpack.c.l.b16 %v507
      %v604 = vunpack.c.l.b16 %v508
      %v605 = vunpack.c.l.b16 %v509
      %v606 = vunpack.c.l.b16 %v510
      %v607 = vunpack.c.l.b16 %v511
      %v608 = vunpack.c.l.b16 %v512
      %v609 = vunpack.c.l.b16 %v513
      %v610 = vunpack.c.l.b16 %v514
      %v611 = vunpack.c.l.b16 %v515
      %v612 = vunpack.c.l.b16 %v516
      %v613 = vunpack.c.l.b16 %v517
      %v614 = vunpack.c.l.b16 %v518
      %v615 = vunpack.c.l.b16 %v519
      %v616 = vunpack.c.l.b16 %v520
      %v617 = vunpack.c.l.b16 %v521
      %v618 = vunpack.c.l.b16 %v522
      %v619 = vunpack.c.l.b16 %v523
      %v620 = vunpack.c.l.b16 %v524
      %v621 = vunpack.c.l.b16 %v525
      %v622 = vunpack.c.l.b16 %v526
      %v623 = vunpack.c.l.b16 %v527
      %v624 = vunpack.c.l.b16 %v528
      %v625 = vunpack.c.l.b16 %v529
      %v626 = vunpack.c.l.b16 %v530
      %v627 = vunpack.c.l.b16 %v531
      %v628 = vunpack.c.l.b16 %v532
      %v629 = vunpack.c.l.b16 %v533
      %v630 = vunpack.c.l.b16 %v534
      %v631 = vunpack.c.l.b16 %v535
      %v632 = vunpack.c.l.b16 %v536
      %v633 = vunpack.c.l.b16 %v537
      %v634 = vunpack.c.l.b16 %v538
      %v635 = vunpack.c.l.b16 %v539
      %v636 = vunpack.c.l.b16 %v540
      %v637 = vunpack.c.l.b16 %v541
      %v638 = vunpack.c.l.b16 %v542
      %v639 = vunpack.c.l.b16 %v543
      %v640 = vpack.c.b16 %v593, %v592
      %v641 = vpack.c.b16 %v595, %v594
      %v642 = vpack.c.b16 %v597, %v596
      %v643 = vpack.c.b16 %v599, %v598
      %v644 = vpack.c.b16 %v601, %v600
      %v645 = vpack.c.b16 %v603, %v602
      %v646 = vpack.c.b16 %v605, %v604
      %v647 = vpack.c.b16 %v607, %v606
      %v648 = vpack.c.b16 %v609, %v608
      %v649 = vpack.c.b16 %v611, %v610
      %v650 = vpack.c.b16 %v613, %v612
      %v651 = vpack.c.b16 %v615, %v614
      %v652 = vpack.c.b16 %v617, %v616
      %v653 = vpack.c.b16 %v619, %v618
      %v654 = vpack.c.b16 %v621, %v620
      %v655 = vpack.c.b16 %v623, %v622
      %v656 = vpack.c.b16 %v625, %v624
      %v657 = vpack.c.b16 %v627, %v626
      %v658 = vpack.c.b16 %v629, %v628
      %v659 = vpack.c.b16 %v631, %v630
      %v660 = vpack.c.b16 %v633, %v632
      %v661 = vpack.c.b16 %v635, %v634
      %v662 = vpack.c.b16 %v637, %v636
      %v663 = vpack.c.b16 %v639, %v638
      %688 = vmatprep.subr.bf16.mxu0 0
      %689 = vmatpush1.bf16.msra.mxu0 %v640
      %690 = vmatprep.subr.bf16.mxu0 0
      %691 = vmatpush1.bf16.msra.mxu0 %v641
      %692 = vmatprep.subr.bf16.mxu0 0
      %693 = vmatpush1.bf16.msra.mxu0 %v642
      %694 = vmatprep.subr.bf16.mxu0 0
      %695 = vmatpush1.bf16.msra.mxu0 %v643
      %696 = vmatprep.subr.bf16.mxu0 0
      %697 = vmatpush1.bf16.msra.mxu0 %v644
      %698 = vmatprep.subr.bf16.mxu0 0
      %699 = vmatpush1.bf16.msra.mxu0 %v645
      %700 = vmatprep.subr.bf16.mxu0 0
      %701 = vmatpush1.bf16.msra.mxu0 %v646
      %702 = vmatprep.subr.bf16.mxu0 0
      %703 = vmatpush1.bf16.msra.mxu0 %v647
      %704 = vmatprep.subr.bf16.mxu0 0
      %705 = vmatpush1.bf16.msra.mxu0 %v648
      %706 = vmatprep.subr.bf16.mxu0 0
      %707 = vmatpush1.bf16.msra.mxu0 %v649
      %708 = vmatprep.subr.bf16.mxu0 0
      %709 = vmatpush1.bf16.msra.mxu0 %v650
      %710 = vmatprep.subr.bf16.mxu0 0
      %711 = vmatpush1.bf16.msra.mxu0 %v651
      %712 = vmatprep.subr.bf16.mxu0 0
      %713 = vmatpush1.bf16.msra.mxu0 %v652
      %714 = vmatprep.subr.bf16.mxu0 0
      %715 = vmatpush1.bf16.msra.mxu0 %v653
      %716 = vmatprep.subr.bf16.mxu0 0
      %717 = vmatpush1.bf16.msra.mxu0 %v654
      %718 = vmatprep.subr.bf16.mxu0 0
      %719 = vmatpush1.bf16.msra.mxu0 %v655
      %720 = vmatprep.mubr.bf16.mxu0 %v472
      %721 = vmatmul.mubr.bf16.gmra.mrb[0].mxu0 %v456
      %v722 = vpop.f32.mrb[0].mxu0
      %v723 = vadd.f32 0.0, %v722
      %v724 = vpop.f32.mrb[0].mxu0
      %v725 = vpop.f32.mrb[0].mxu0
      %v726 = vadd.f32 0.0, %v725
      %v727 = vpop.f32.mrb[0].mxu0
      %728 = vmatprep.mubr.bf16.mxu0 %v473
      %729 = vmatmul.mubr.bf16.gmra.mrb[0].mxu0 %v457
      %v730 = vpop.f32.mrb[0].mxu0
      %v731 = vadd.f32 0.0, %v730
      %v732 = vpop.f32.mrb[0].mxu0
      %v733 = vpop.f32.mrb[0].mxu0
      %v734 = vadd.f32 0.0, %v733
      %v735 = vpop.f32.mrb[0].mxu0
      %736 = vmatprep.mubr.bf16.mxu0 %v474
      %737 = vmatmul.mubr.bf16.gmra.mrb[0].mxu0 %v458
      %v738 = vpop.f32.mrb[0].mxu0
      %v739 = vadd.f32 0.0, %v738
      %v740 = vpop.f32.mrb[0].mxu0
      %v741 = vpop.f32.mrb[0].mxu0
      %v742 = vadd.f32 0.0, %v741
      %v743 = vpop.f32.mrb[0].mxu0
      %744 = vmatprep.mubr.bf16.mxu0 %v475
      %745 = vmatmul.mubr.bf16.gmra.mrb[0].mxu0 %v459
      %v746 = vpop.f32.mrb[0].mxu0
      %v747 = vadd.f32 0.0, %v746
      %v748 = vpop.f32.mrb[0].mxu0
      %v749 = vpop.f32.mrb[0].mxu0
      %v750 = vadd.f32 0.0, %v749
      %v751 = vpop.f32.mrb[0].mxu0
      %752 = vdwg.mxu0
      %753 = vmatprep.subr.bf16.mxu0 0
      %754 = vmatpush1.bf16.msra.mxu0 %v656
      %755 = vmatprep.subr.bf16.mxu0 0
      %756 = vmatpush1.bf16.msra.mxu0 %v657
      %757 = vmatprep.subr.bf16.mxu0 0
      %758 = vmatpush1.bf16.msra.mxu0 %v658
      %759 = vmatprep.subr.bf16.mxu0 0
      %760 = vmatpush1.bf16.msra.mxu0 %v659
      %761 = vmatprep.subr.bf16.mxu0 0
      %762 = vmatpush1.bf16.msra.mxu0 %v660
      %763 = vmatprep.subr.bf16.mxu0 0
      %764 = vmatpush1.bf16.msra.mxu0 %v661
      %765 = vmatprep.subr.bf16.mxu0 0
      %766 = vmatpush1.bf16.msra.mxu0 %v662
      %767 = vmatprep.subr.bf16.mxu0 0
      %768 = vmatpush1.bf16.msra.mxu0 %v663
      %769 = vmatprep.subr.bf16.mxu0 0
      %770 = vmatpush1.bf16.msra.mxu0 0
      %771 = vmatprep.subr.bf16.mxu0 0
      %772 = vmatpush1.bf16.msra.mxu0 0
      %773 = vmatprep.subr.bf16.mxu0 0
      %774 = vmatpush1.bf16.msra.mxu0 0
      %775 = vmatprep.subr.bf16.mxu0 0
      %776 = vmatpush1.bf16.msra.mxu0 0
      %777 = vmatprep.subr.bf16.mxu0 0
      %778 = vmatpush1.bf16.msra.mxu0 0
      %779 = vmatprep.subr.bf16.mxu0 0
      %780 = vmatpush1.bf16.msra.mxu0 0
      %781 = vmatprep.subr.bf16.mxu0 0
      %782 = vmatpush1.bf16.msra.mxu0 0
      %783 = vmatprep.subr.bf16.mxu0 0
      %784 = vmatpush1.bf16.msra.mxu0 0
      %785 = vmatprep.mubr.bf16.mxu0 0
      %786 = vmatmul.mubr.bf16.gmra.mrb[0].mxu0 %v488
      %v787 = vpop.f32.mrb[0].mxu0
      %v788 = vadd.f32 %v723, %v787
      %v789 = vpop.f32.mrb[0].mxu0
      %v790 = vpop.f32.mrb[0].mxu0
      %v791 = vadd.f32 %v726, %v790
      %v792 = vpop.f32.mrb[0].mxu0
      %793 = vmatprep.mubr.bf16.mxu0 0
      %794 = vmatmul.mubr.bf16.gmra.mrb[0].mxu0 %v489
      %v795 = vpop.f32.mrb[0].mxu0
      %v796 = vadd.f32 %v731, %v795
      %v797 = vpop.f32.mrb[0].mxu0
      %v798 = vpop.f32.mrb[0].mxu0
      %v799 = vadd.f32 %v734, %v798
      %v800 = vpop.f32.mrb[0].mxu0
      %801 = vmatprep.mubr.bf16.mxu0 0
      %802 = vmatmul.mubr.bf16.gmra.mrb[0].mxu0 %v490
      %v803 = vpop.f32.mrb[0].mxu0
      %v804 = vadd.f32 %v739, %v803
      %v805 = vpop.f32.mrb[0].mxu0
      %v806 = vpop.f32.mrb[0].mxu0
      %v807 = vadd.f32 %v742, %v806
      %v808 = vpop.f32.mrb[0].mxu0
      %809 = vmatprep.mubr.bf16.mxu0 0
      %810 = vmatmul.mubr.bf16.gmra.mrb[0].mxu0 %v491
      %v811 = vpop.f32.mrb[0].mxu0
      %v812 = vadd.f32 %v747, %v811
      %v813 = vpop.f32.mrb[0].mxu0
      %v814 = vpop.f32.mrb[0].mxu0
      %v815 = vadd.f32 %v750, %v814
      %v816 = vpop.f32.mrb[0].mxu0
      %817 = vdwg.mxu0
      %818 = vst [vmem:[#allocation2] sm:$0xff] %v788
      %819 = vst [vmem:[#allocation2 + $0x8] sm:$0xff] %v791
      %820 = vst [vmem:[#allocation2 + $0x10] sm:$0xff] %v796
      %821 = vst [vmem:[#allocation2 + $0x18] sm:$0xff] %v799
      %822 = vst [vmem:[#allocation2 + $0x20] sm:$0xff] %v804
      %823 = vst [vmem:[#allocation2 + $0x28] sm:$0xff] %v807
      %824 = vst [vmem:[#allocation2 + $0x30] sm:$0xff] %v812
      %825 = vst [vmem:[#allocation2 + $0x38] sm:$0xff] %v815
      %s826 = sadd.s32 %s246, 1
      %s827 = smul.u32 %s826, 2
      %s828 = smul.addr %s827, 4
      %s829 = scalar_lea.vmem %s220, %s828
      %v830 = vld [vmem:[%s829] sm:$0xf]
      %v831 = vld [vmem:[%s829 + $0x8] sm:$0xf]
      %v832 = vld [vmem:[%s829 + $0x10] sm:$0xf]
      %v833 = vld [vmem:[%s829 + $0x18] sm:$0xf]
      %v834 = vld [vmem:[%s829 + $0x20] sm:$0xf]
      %v835 = vld [vmem:[%s829 + $0x28] sm:$0xf]
      %v836 = vld [vmem:[%s829 + $0x30] sm:$0xf]
      %v837 = vld [vmem:[%s829 + $0x38] sm:$0xf]
      %v838 = vld [vmem:[%s829 + $0x4] sm:$0x1]
      %v839 = vld [vmem:[%s829 + $0xc] sm:$0x1]
      %v840 = vld [vmem:[%s829 + $0x14] sm:$0x1]
      %v841 = vld [vmem:[%s829 + $0x1c] sm:$0x1]
      %v842 = vld [vmem:[%s829 + $0x24] sm:$0x1]
      %v843 = vld [vmem:[%s829 + $0x2c] sm:$0x1]
      %v844 = vld [vmem:[%s829 + $0x34] sm:$0x1]
      %v845 = vld [vmem:[%s829 + $0x3c] sm:$0x1]
      %v847 = vshrl.u32 %v830, 16
      %v849 = vrot.slane %v847, 4
      %v850 = vshll.u32 %v830, 16
      %v852 = vrot.slane %v850, 5
      %v853 = vor.u32 %v849, %v852
      %v854 = vrot.slane %v853, 4
      %v856 = vshll.u32 %v838, 16
      %v858 = vrot.slane %v856, 5
      %v859 = vsel %vm268, %v854, %v858
      %v861 = vshrl.u32 %v831, 16
      %v863 = vrot.slane %v861, 4
      %v864 = vshll.u32 %v831, 16
      %v866 = vrot.slane %v864, 5
      %v867 = vor.u32 %v863, %v866
      %v868 = vrot.slane %v867, 4
      %v870 = vshll.u32 %v839, 16
      %v872 = vrot.slane %v870, 5
      %v873 = vsel %vm268, %v868, %v872
      %v875 = vshrl.u32 %v832, 16
      %v877 = vrot.slane %v875, 4
      %v878 = vshll.u32 %v832, 16
      %v880 = vrot.slane %v878, 5
      %v881 = vor.u32 %v877, %v880
      %v882 = vrot.slane %v881, 4
      %v884 = vshll.u32 %v840, 16
      %v886 = vrot.slane %v884, 5
      %v887 = vsel %vm268, %v882, %v886
      %v889 = vshrl.u32 %v833, 16
      %v891 = vrot.slane %v889, 4
      %v892 = vshll.u32 %v833, 16
      %v894 = vrot.slane %v892, 5
      %v895 = vor.u32 %v891, %v894
      %v896 = vrot.slane %v895, 4
      %v898 = vshll.u32 %v841, 16
      %v900 = vrot.slane %v898, 5
      %v901 = vsel %vm268, %v896, %v900
      %v903 = vshrl.u32 %v834, 16
      %v905 = vrot.slane %v903, 4
      %v906 = vshll.u32 %v834, 16
      %v908 = vrot.slane %v906, 5
      %v909 = vor.u32 %v905, %v908
      %v910 = vrot.slane %v909, 4
      %v912 = vshll.u32 %v842, 16
      %v914 = vrot.slane %v912, 5
      %v915 = vsel %vm268, %v910, %v914
      %v917 = vshrl.u32 %v835, 16
      %v919 = vrot.slane %v917, 4
      %v920 = vshll.u32 %v835, 16
      %v922 = vrot.slane %v920, 5
      %v923 = vor.u32 %v919, %v922
      %v924 = vrot.slane %v923, 4
      %v926 = vshll.u32 %v843, 16
      %v928 = vrot.slane %v926, 5
      %v929 = vsel %vm268, %v924, %v928
      %v931 = vshrl.u32 %v836, 16
      %v933 = vrot.slane %v931, 4
      %v934 = vshll.u32 %v836, 16
      %v936 = vrot.slane %v934, 5
      %v937 = vor.u32 %v933, %v936
      %v938 = vrot.slane %v937, 4
      %v940 = vshll.u32 %v844, 16
      %v942 = vrot.slane %v940, 5
      %v943 = vsel %vm268, %v938, %v942
      %v945 = vshrl.u32 %v837, 16
      %v947 = vrot.slane %v945, 4
      %v948 = vshll.u32 %v837, 16
      %v950 = vrot.slane %v948, 5
      %v951 = vor.u32 %v947, %v950
      %v952 = vrot.slane %v951, 4
      %v954 = vshll.u32 %v845, 16
      %v956 = vrot.slane %v954, 5
      %v957 = vsel %vm268, %v952, %v956
      %v958 = vld [vmem:[%s829] sm:$0xe]
      %v959 = vld [vmem:[%s829 + $0x8] sm:$0xe]
      %v960 = vld [vmem:[%s829 + $0x10] sm:$0xe]
      %v961 = vld [vmem:[%s829 + $0x18] sm:$0xe]
      %v962 = vld [vmem:[%s829 + $0x20] sm:$0xe]
      %v963 = vld [vmem:[%s829 + $0x28] sm:$0xe]
      %v964 = vld [vmem:[%s829 + $0x30] sm:$0xe]
      %v965 = vld [vmem:[%s829 + $0x38] sm:$0xe]
      %v982 = vrot.slane %v958, 5
      %v983 = vrot.slane %v982, 4
      %v984 = vrot.slane %v838, 5
      %v985 = vsel %vm407, %v983, %v984
      %v986 = vrot.slane %v959, 5
      %v987 = vrot.slane %v986, 4
      %v988 = vrot.slane %v839, 5
      %v989 = vsel %vm407, %v987, %v988
      %v990 = vrot.slane %v960, 5
      %v991 = vrot.slane %v990, 4
      %v992 = vrot.slane %v840, 5
      %v993 = vsel %vm407, %v991, %v992
      %v994 = vrot.slane %v961, 5
      %v995 = vrot.slane %v994, 4
      %v996 = vrot.slane %v841, 5
      %v997 = vsel %vm407, %v995, %v996
      %v998 = vrot.slane %v962, 5
      %v999 = vrot.slane %v998, 4
      %v1000 = vrot.slane %v842, 5
      %v1001 = vsel %vm407, %v999, %v1000
      %v1002 = vrot.slane %v963, 5
      %v1003 = vrot.slane %v1002, 4
      %v1004 = vrot.slane %v843, 5
      %v1005 = vsel %vm407, %v1003, %v1004
      %v1006 = vrot.slane %v964, 5
      %v1007 = vrot.slane %v1006, 4
      %v1008 = vrot.slane %v844, 5
      %v1009 = vsel %vm407, %v1007, %v1008
      %v1010 = vrot.slane %v965, 5
      %v1011 = vrot.slane %v1010, 4
      %v1012 = vrot.slane %v845, 5
      %v1013 = vsel %vm407, %v1011, %v1012
      %v1022 = vunpack.c.l.b16 %v830
      %v1023 = vunpack.c.l.b16 %v831
      %v1024 = vunpack.c.l.b16 %v832
      %v1025 = vunpack.c.l.b16 %v833
      %v1026 = vunpack.c.l.b16 %v834
      %v1027 = vunpack.c.l.b16 %v835
      %v1028 = vunpack.c.l.b16 %v836
      %v1029 = vunpack.c.l.b16 %v837
      %v1030 = vpack.c.b16 %v1023, %v1022
      %v1031 = vpack.c.b16 %v1025, %v1024
      %v1032 = vpack.c.b16 %v1027, %v1026
      %v1033 = vpack.c.b16 %v1029, %v1028
      %v1038 = vunpack.c.l.b16 %v859
      %v1039 = vunpack.c.l.b16 %v873
      %v1040 = vunpack.c.l.b16 %v887
      %v1041 = vunpack.c.l.b16 %v901
      %v1042 = vunpack.c.l.b16 %v915
      %v1043 = vunpack.c.l.b16 %v929
      %v1044 = vunpack.c.l.b16 %v943
      %v1045 = vunpack.c.l.b16 %v957
      %v1046 = vpack.c.b16 %v1039, %v1038
      %v1047 = vpack.c.b16 %v1041, %v1040
      %v1048 = vpack.c.b16 %v1043, %v1042
      %v1049 = vpack.c.b16 %v1045, %v1044
      %v1054 = vunpack.c.l.b16 %v985
      %v1055 = vunpack.c.l.b16 %v989
      %v1056 = vunpack.c.l.b16 %v993
      %v1057 = vunpack.c.l.b16 %v997
      %v1058 = vunpack.c.l.b16 %v1001
      %v1059 = vunpack.c.l.b16 %v1005
      %v1060 = vunpack.c.l.b16 %v1009
      %v1061 = vunpack.c.l.b16 %v1013
      %v1062 = vpack.c.b16 %v1055, %v1054
      %v1063 = vpack.c.b16 %v1057, %v1056
      %v1064 = vpack.c.b16 %v1059, %v1058
      %v1065 = vpack.c.b16 %v1061, %v1060
      %s1070 = scalar_lea.vmem %s224, 192
      %v1071 = vld [vmem:[%s1070] sm:$0xf]
      %v1072 = vld [vmem:[%s1070 + $0x4] sm:$0xf]
      %v1073 = vld [vmem:[%s1070 + $0x8] sm:$0xf]
      %v1074 = vld [vmem:[%s1070 + $0xc] sm:$0xf]
      %v1075 = vld [vmem:[%s1070 + $0x10] sm:$0xf]
      %v1076 = vld [vmem:[%s1070 + $0x14] sm:$0xf]
      %v1077 = vld [vmem:[%s1070 + $0x18] sm:$0xf]
      %v1078 = vld [vmem:[%s1070 + $0x1c] sm:$0xf]
      %v1079 = vld [vmem:[%s1070 + $0x20] sm:$0xf]
      %v1080 = vld [vmem:[%s1070 + $0x24] sm:$0xf]
      %v1081 = vld [vmem:[%s1070 + $0x28] sm:$0xf]
      %v1082 = vld [vmem:[%s1070 + $0x2c] sm:$0xf]
      %v1083 = vld [vmem:[%s1070 + $0x30] sm:$0xf]
      %v1084 = vld [vmem:[%s1070 + $0x34] sm:$0xf]
      %v1085 = vld [vmem:[%s1070 + $0x38] sm:$0xf]
      %v1086 = vld [vmem:[%s1070 + $0x3c] sm:$0xf]
      %v1087 = vld [vmem:[%s1070 + $0x40] sm:$0xf]
      %v1088 = vld [vmem:[%s1070 + $0x44] sm:$0xf]
      %v1089 = vld [vmem:[%s1070 + $0x48] sm:$0xf]
      %v1090 = vld [vmem:[%s1070 + $0x4c] sm:$0xf]
      %v1091 = vld [vmem:[%s1070 + $0x50] sm:$0xf]
      %v1092 = vld [vmem:[%s1070 + $0x54] sm:$0xf]
      %v1093 = vld [vmem:[%s1070 + $0x58] sm:$0xf]
      %v1094 = vld [vmem:[%s1070 + $0x5c] sm:$0xf]
      %v1095 = vld [vmem:[%s1070 + $0x60] sm:$0xf]
      %v1096 = vld [vmem:[%s1070 + $0x64] sm:$0xf]
      %v1097 = vld [vmem:[%s1070 + $0x68] sm:$0xf]
      %v1098 = vld [vmem:[%s1070 + $0x6c] sm:$0xf]
      %v1099 = vld [vmem:[%s1070 + $0x70] sm:$0xf]
      %v1100 = vld [vmem:[%s1070 + $0x74] sm:$0xf]
      %v1101 = vld [vmem:[%s1070 + $0x78] sm:$0xf]
      %v1102 = vld [vmem:[%s1070 + $0x7c] sm:$0xf]
      %v1103 = vld [vmem:[%s1070 + $0x80] sm:$0xf]
      %v1104 = vld [vmem:[%s1070 + $0x84] sm:$0xf]
      %v1105 = vld [vmem:[%s1070 + $0x88] sm:$0xf]
      %v1106 = vld [vmem:[%s1070 + $0x8c] sm:$0xf]
      %v1107 = vld [vmem:[%s1070 + $0x90] sm:$0xf]
      %v1108 = vld [vmem:[%s1070 + $0x94] sm:$0xf]
      %v1109 = vld [vmem:[%s1070 + $0x98] sm:$0xf]
      %v1110 = vld [vmem:[%s1070 + $0x9c] sm:$0xf]
      %v1111 = vld [vmem:[%s1070 + $0xa0] sm:$0xf]
      %v1112 = vld [vmem:[%s1070 + $0xa4] sm:$0xf]
      %v1113 = vld [vmem:[%s1070 + $0xa8] sm:$0xf]
      %v1114 = vld [vmem:[%s1070 + $0xac] sm:$0xf]
      %v1115 = vld [vmem:[%s1070 + $0xb0] sm:$0xf]
      %v1116 = vld [vmem:[%s1070 + $0xb4] sm:$0xf]
      %v1117 = vld [vmem:[%s1070 + $0xb8] sm:$0xf]
      %v1118 = vld [vmem:[%s1070 + $0xbc] sm:$0xf]
      %v1167 = vunpack.c.l.b16 %v1071
      %v1168 = vunpack.c.l.b16 %v1072
      %v1169 = vunpack.c.l.b16 %v1073
      %v1170 = vunpack.c.l.b16 %v1074
      %v1171 = vunpack.c.l.b16 %v1075
      %v1172 = vunpack.c.l.b16 %v1076
      %v1173 = vunpack.c.l.b16 %v1077
      %v1174 = vunpack.c.l.b16 %v1078
      %v1175 = vunpack.c.l.b16 %v1079
      %v1176 = vunpack.c.l.b16 %v1080
      %v1177 = vunpack.c.l.b16 %v1081
      %v1178 = vunpack.c.l.b16 %v1082
      %v1179 = vunpack.c.l.b16 %v1083
      %v1180 = vunpack.c.l.b16 %v1084
      %v1181 = vunpack.c.l.b16 %v1085
      %v1182 = vunpack.c.l.b16 %v1086
      %v1183 = vunpack.c.l.b16 %v1087
      %v1184 = vunpack.c.l.b16 %v1088
      %v1185 = vunpack.c.l.b16 %v1089
      %v1186 = vunpack.c.l.b16 %v1090
      %v1187 = vunpack.c.l.b16 %v1091
      %v1188 = vunpack.c.l.b16 %v1092
      %v1189 = vunpack.c.l.b16 %v1093
      %v1190 = vunpack.c.l.b16 %v1094
      %v1191 = vunpack.c.l.b16 %v1095
      %v1192 = vunpack.c.l.b16 %v1096
      %v1193 = vunpack.c.l.b16 %v1097
      %v1194 = vunpack.c.l.b16 %v1098
      %v1195 = vunpack.c.l.b16 %v1099
      %v1196 = vunpack.c.l.b16 %v1100
      %v1197 = vunpack.c.l.b16 %v1101
      %v1198 = vunpack.c.l.b16 %v1102
      %v1199 = vunpack.c.l.b16 %v1103
      %v1200 = vunpack.c.l.b16 %v1104
      %v1201 = vunpack.c.l.b16 %v1105
      %v1202 = vunpack.c.l.b16 %v1106
      %v1203 = vunpack.c.l.b16 %v1107
      %v1204 = vunpack.c.l.b16 %v1108
      %v1205 = vunpack.c.l.b16 %v1109
      %v1206 = vunpack.c.l.b16 %v1110
      %v1207 = vunpack.c.l.b16 %v1111
      %v1208 = vunpack.c.l.b16 %v1112
      %v1209 = vunpack.c.l.b16 %v1113
      %v1210 = vunpack.c.l.b16 %v1114
      %v1211 = vunpack.c.l.b16 %v1115
      %v1212 = vunpack.c.l.b16 %v1116
      %v1213 = vunpack.c.l.b16 %v1117
      %v1214 = vunpack.c.l.b16 %v1118
      %v1215 = vpack.c.b16 %v1168, %v1167
      %v1216 = vpack.c.b16 %v1170, %v1169
      %v1217 = vpack.c.b16 %v1172, %v1171
      %v1218 = vpack.c.b16 %v1174, %v1173
      %v1219 = vpack.c.b16 %v1176, %v1175
      %v1220 = vpack.c.b16 %v1178, %v1177
      %v1221 = vpack.c.b16 %v1180, %v1179
      %v1222 = vpack.c.b16 %v1182, %v1181
      %v1223 = vpack.c.b16 %v1184, %v1183
      %v1224 = vpack.c.b16 %v1186, %v1185
      %v1225 = vpack.c.b16 %v1188, %v1187
      %v1226 = vpack.c.b16 %v1190, %v1189
      %v1227 = vpack.c.b16 %v1192, %v1191
      %v1228 = vpack.c.b16 %v1194, %v1193
      %v1229 = vpack.c.b16 %v1196, %v1195
      %v1230 = vpack.c.b16 %v1198, %v1197
      %v1231 = vpack.c.b16 %v1200, %v1199
      %v1232 = vpack.c.b16 %v1202, %v1201
      %v1233 = vpack.c.b16 %v1204, %v1203
      %v1234 = vpack.c.b16 %v1206, %v1205
      %v1235 = vpack.c.b16 %v1208, %v1207
      %v1236 = vpack.c.b16 %v1210, %v1209
      %v1237 = vpack.c.b16 %v1212, %v1211
      %v1238 = vpack.c.b16 %v1214, %v1213
      %1263 = vmatprep.subr.bf16.mxu0 0
      %1264 = vmatpush1.bf16.msra.mxu0 %v1215
      %1265 = vmatprep.subr.bf16.mxu0 0
      %1266 = vmatpush1.bf16.msra.mxu0 %v1216
      %1267 = vmatprep.subr.bf16.mxu0 0
      %1268 = vmatpush1.bf16.msra.mxu0 %v1217
      %1269 = vmatprep.subr.bf16.mxu0 0
      %1270 = vmatpush1.bf16.msra.mxu0 %v1218
      %1271 = vmatprep.subr.bf16.mxu0 0
      %1272 = vmatpush1.bf16.msra.mxu0 %v1219
      %1273 = vmatprep.subr.bf16.mxu0 0
      %1274 = vmatpush1.bf16.msra.mxu0 %v1220
      %1275 = vmatprep.subr.bf16.mxu0 0
      %1276 = vmatpush1.bf16.msra.mxu0 %v1221
      %1277 = vmatprep.subr.bf16.mxu0 0
      %1278 = vmatpush1.bf16.msra.mxu0 %v1222
      %1279 = vmatprep.subr.bf16.mxu0 0
      %1280 = vmatpush1.bf16.msra.mxu0 %v1223
      %1281 = vmatprep.subr.bf16.mxu0 0
      %1282 = vmatpush1.bf16.msra.mxu0 %v1224
      %1283 = vmatprep.subr.bf16.mxu0 0
      %1284 = vmatpush1.bf16.msra.mxu0 %v1225
      %1285 = vmatprep.subr.bf16.mxu0 0
      %1286 = vmatpush1.bf16.msra.mxu0 %v1226
      %1287 = vmatprep.subr.bf16.mxu0 0
      %1288 = vmatpush1.bf16.msra.mxu0 %v1227
      %1289 = vmatprep.subr.bf16.mxu0 0
      %1290 = vmatpush1.bf16.msra.mxu0 %v1228
      %1291 = vmatprep.subr.bf16.mxu0 0
      %1292 = vmatpush1.bf16.msra.mxu0 %v1229
      %1293 = vmatprep.subr.bf16.mxu0 0
      %1294 = vmatpush1.bf16.msra.mxu0 %v1230
      %1295 = vmatprep.mubr.bf16.mxu0 %v1046
      %1296 = vmatmul.mubr.bf16.gmra.mrb[0].mxu0 %v1030
      %v1297 = vpop.f32.mrb[0].mxu0
      %v1298 = vadd.f32 0.0, %v1297
      %v1299 = vpop.f32.mrb[0].mxu0
      %v1300 = vpop.f32.mrb[0].mxu0
      %v1301 = vadd.f32 0.0, %v1300
      %v1302 = vpop.f32.mrb[0].mxu0
      %1303 = vmatprep.mubr.bf16.mxu0 %v1047
      %1304 = vmatmul.mubr.bf16.gmra.mrb[0].mxu0 %v1031
      %v1305 = vpop.f32.mrb[0].mxu0
      %v1306 = vadd.f32 0.0, %v1305
      %v1307 = vpop.f32.mrb[0].mxu0
      %v1308 = vpop.f32.mrb[0].mxu0
      %v1309 = vadd.f32 0.0, %v1308
      %v1310 = vpop.f32.mrb[0].mxu0
      %1311 = vmatprep.mubr.bf16.mxu0 %v1048
      %1312 = vmatmul.mubr.bf16.gmra.mrb[0].mxu0 %v1032
      %v1313 = vpop.f32.mrb[0].mxu0
      %v1314 = vadd.f32 0.0, %v1313
      %v1315 = vpop.f32.mrb[0].mxu0
      %v1316 = vpop.f32.mrb[0].mxu0
      %v1317 = vadd.f32 0.0, %v1316
      %v1318 = vpop.f32.mrb[0].mxu0
      %1319 = vmatprep.mubr.bf16.mxu0 %v1049
      %1320 = vmatmul.mubr.bf16.gmra.mrb[0].mxu0 %v1033
      %v1321 = vpop.f32.mrb[0].mxu0
      %v1322 = vadd.f32 0.0, %v1321
      %v1323 = vpop.f32.mrb[0].mxu0
      %v1324 = vpop.f32.mrb[0].mxu0
      %v1325 = vadd.f32 0.0, %v1324
      %v1326 = vpop.f32.mrb[0].mxu0
      %1327 = vdwg.mxu0
      %1328 = vmatprep.subr.bf16.mxu0 0
      %1329 = vmatpush1.bf16.msra.mxu0 %v1231
      %1330 = vmatprep.subr.bf16.mxu0 0
      %1331 = vmatpush1.bf16.msra.mxu0 %v1232
      %1332 = vmatprep.subr.bf16.mxu0 0
      %1333 = vmatpush1.bf16.msra.mxu0 %v1233
      %1334 = vmatprep.subr.bf16.mxu0 0
      %1335 = vmatpush1.bf16.msra.mxu0 %v1234
      %1336 = vmatprep.subr.bf16.mxu0 0
      %1337 = vmatpush1.bf16.msra.mxu0 %v1235
      %1338 = vmatprep.subr.bf16.mxu0 0
      %1339 = vmatpush1.bf16.msra.mxu0 %v1236
      %1340 = vmatprep.subr.bf16.mxu0 0
      %1341 = vmatpush1.bf16.msra.mxu0 %v1237
      %1342 = vmatprep.subr.bf16.mxu0 0
      %1343 = vmatpush1.bf16.msra.mxu0 %v1238
      %1344 = vmatprep.subr.bf16.mxu0 0
      %1345 = vmatpush1.bf16.msra.mxu0 0
      %1346 = vmatprep.subr.bf16.mxu0 0
      %1347 = vmatpush1.bf16.msra.mxu0 0
      %1348 = vmatprep.subr.bf16.mxu0 0
      %1349 = vmatpush1.bf16.msra.mxu0 0
      %1350 = vmatprep.subr.bf16.mxu0 0
      %1351 = vmatpush1.bf16.msra.mxu0 0
      %1352 = vmatprep.subr.bf16.mxu0 0
      %1353 = vmatpush1.bf16.msra.mxu0 0
      %1354 = vmatprep.subr.bf16.mxu0 0
      %1355 = vmatpush1.bf16.msra.mxu0 0
      %1356 = vmatprep.subr.bf16.mxu0 0
      %1357 = vmatpush1.bf16.msra.mxu0 0
      %1358 = vmatprep.subr.bf16.mxu0 0
      %1359 = vmatpush1.bf16.msra.mxu0 0
      %1360 = vmatprep.mubr.bf16.mxu0 0
      %1361 = vmatmul.mubr.bf16.gmra.mrb[0].mxu0 %v1062
      %v1362 = vpop.f32.mrb[0].mxu0
      %v1363 = vadd.f32 %v1298, %v1362
      %v1364 = vpop.f32.mrb[0].mxu0
      %v1365 = vpop.f32.mrb[0].mxu0
      %v1366 = vadd.f32 %v1301, %v1365
      %v1367 = vpop.f32.mrb[0].mxu0
      %1368 = vmatprep.mubr.bf16.mxu0 0
      %1369 = vmatmul.mubr.bf16.gmra.mrb[0].mxu0 %v1063
      %v1370 = vpop.f32.mrb[0].mxu0
      %v1371 = vadd.f32 %v1306, %v1370
      %v1372 = vpop.f32.mrb[0].mxu0
      %v1373 = vpop.f32.mrb[0].mxu0
      %v1374 = vadd.f32 %v1309, %v1373
      %v1375 = vpop.f32.mrb[0].mxu0
      %1376 = vmatprep.mubr.bf16.mxu0 0
      %1377 = vmatmul.mubr.bf16.gmra.mrb[0].mxu0 %v1064
      %v1378 = vpop.f32.mrb[0].mxu0
      %v1379 = vadd.f32 %v1314, %v1378
      %v1380 = vpop.f32.mrb[0].mxu0
      %v1381 = vpop.f32.mrb[0].mxu0
      %v1382 = vadd.f32 %v1317, %v1381
      %v1383 = vpop.f32.mrb[0].mxu0
      %1384 = vmatprep.mubr.bf16.mxu0 0
      %1385 = vmatmul.mubr.bf16.gmra.mrb[0].mxu0 %v1065
      %v1386 = vpop.f32.mrb[0].mxu0
      %v1387 = vadd.f32 %v1322, %v1386
      %v1388 = vpop.f32.mrb[0].mxu0
      %v1389 = vpop.f32.mrb[0].mxu0
      %v1390 = vadd.f32 %v1325, %v1389
      %v1391 = vpop.f32.mrb[0].mxu0
      %1392 = vdwg.mxu0
      %v1393 = vld [vmem:[#allocation2] sm:$0xff]
      %v1394 = vld [vmem:[#allocation2 + $0x8] sm:$0xff]
      %v1395 = vld [vmem:[#allocation2 + $0x10] sm:$0xff]
      %v1396 = vld [vmem:[#allocation2 + $0x18] sm:$0xff]
      %v1397 = vld [vmem:[#allocation2 + $0x20] sm:$0xff]
      %v1398 = vld [vmem:[#allocation2 + $0x28] sm:$0xff]
      %v1399 = vld [vmem:[#allocation2 + $0x30] sm:$0xff]
      %v1400 = vld [vmem:[#allocation2 + $0x38] sm:$0xff]
      %v1401 = vadd.f32 %v1393, %v1363
      %v1402 = vadd.f32 %v1394, %v1366
      %v1403 = vadd.f32 %v1395, %v1371
      %v1404 = vadd.f32 %v1396, %v1374
      %v1405 = vadd.f32 %v1397, %v1379
      %v1406 = vadd.f32 %v1398, %v1382
      %v1407 = vadd.f32 %v1399, %v1387
      %v1408 = vadd.f32 %v1400, %v1390
      %1409 = vst [vmem:[#allocation2] sm:$0xff] %v1401
      %1410 = vst [vmem:[#allocation2 + $0x8] sm:$0xff] %v1402
      %1411 = vst [vmem:[#allocation2 + $0x10] sm:$0xff] %v1403
      %1412 = vst [vmem:[#allocation2 + $0x18] sm:$0xff] %v1404
      %1413 = vst [vmem:[#allocation2 + $0x20] sm:$0xff] %v1405
      %1414 = vst [vmem:[#allocation2 + $0x28] sm:$0xff] %v1406
      %1415 = vst [vmem:[#allocation2 + $0x30] sm:$0xff] %v1407
      %1416 = vst [vmem:[#allocation2 + $0x38] sm:$0xff] %v1408
      %s1417 = sadd.s32 %s246, 2
      %s1418 = smul.u32 %s1417, 2
      %s1419 = smul.addr %s1418, 4
      %s1420 = scalar_lea.vmem %s220, %s1419
      %v1421 = vld [vmem:[%s1420] sm:$0xf]
      %v1422 = vld [vmem:[%s1420 + $0x8] sm:$0xf]
      %v1423 = vld [vmem:[%s1420 + $0x10] sm:$0xf]
      %v1424 = vld [vmem:[%s1420 + $0x18] sm:$0xf]
      %v1425 = vld [vmem:[%s1420 + $0x20] sm:$0xf]
      %v1426 = vld [vmem:[%s1420 + $0x28] sm:$0xf]
      %v1427 = vld [vmem:[%s1420 + $0x30] sm:$0xf]
      %v1428 = vld [vmem:[%s1420 + $0x38] sm:$0xf]
      %v1429 = vld [vmem:[%s1420 + $0x4] sm:$0x1]
      %v1430 = vld [vmem:[%s1420 + $0xc] sm:$0x1]
      %v1431 = vld [vmem:[%s1420 + $0x14] sm:$0x1]
      %v1432 = vld [vmem:[%s1420 + $0x1c] sm:$0x1]
      %v1433 = vld [vmem:[%s1420 + $0x24] sm:$0x1]
      %v1434 = vld [vmem:[%s1420 + $0x2c] sm:$0x1]
      %v1435 = vld [vmem:[%s1420 + $0x34] sm:$0x1]
      %v1436 = vld [vmem:[%s1420 + $0x3c] sm:$0x1]
      %v1438 = vshrl.u32 %v1421, 16
      %v1440 = vrot.slane %v1438, 4
      %v1441 = vshll.u32 %v1421, 16
      %v1443 = vrot.slane %v1441, 5
      %v1444 = vor.u32 %v1440, %v1443
      %v1445 = vrot.slane %v1444, 4
      %v1447 = vshll.u32 %v1429, 16
      %v1449 = vrot.slane %v1447, 5
      %v1450 = vsel %vm268, %v1445, %v1449
      %v1452 = vshrl.u32 %v1422, 16
      %v1454 = vrot.slane %v1452, 4
      %v1455 = vshll.u32 %v1422, 16
      %v1457 = vrot.slane %v1455, 5
      %v1458 = vor.u32 %v1454, %v1457
      %v1459 = vrot.slane %v1458, 4
      %v1461 = vshll.u32 %v1430, 16
      %v1463 = vrot.slane %v1461, 5
      %v1464 = vsel %vm268, %v1459, %v1463
      %v1466 = vshrl.u32 %v1423, 16
      %v1468 = vrot.slane %v1466, 4
      %v1469 = vshll.u32 %v1423, 16
      %v1471 = vrot.slane %v1469, 5
      %v1472 = vor.u32 %v1468, %v1471
      %v1473 = vrot.slane %v1472, 4
      %v1475 = vshll.u32 %v1431, 16
      %v1477 = vrot.slane %v1475, 5
      %v1478 = vsel %vm268, %v1473, %v1477
      %v1480 = vshrl.u32 %v1424, 16
      %v1482 = vrot.slane %v1480, 4
      %v1483 = vshll.u32 %v1424, 16
      %v1485 = vrot.slane %v1483, 5
      %v1486 = vor.u32 %v1482, %v1485
      %v1487 = vrot.slane %v1486, 4
      %v1489 = vshll.u32 %v1432, 16
      %v1491 = vrot.slane %v1489, 5
      %v1492 = vsel %vm268, %v1487, %v1491
      %v1494 = vshrl.u32 %v1425, 16
      %v1496 = vrot.slane %v1494, 4
      %v1497 = vshll.u32 %v1425, 16
      %v1499 = vrot.slane %v1497, 5
      %v1500 = vor.u32 %v1496, %v1499
      %v1501 = vrot.slane %v1500, 4
      %v1503 = vshll.u32 %v1433, 16
      %v1505 = vrot.slane %v1503, 5
      %v1506 = vsel %vm268, %v1501, %v1505
      %v1508 = vshrl.u32 %v1426, 16
      %v1510 = vrot.slane %v1508, 4
      %v1511 = vshll.u32 %v1426, 16
      %v1513 = vrot.slane %v1511, 5
      %v1514 = vor.u32 %v1510, %v1513
      %v1515 = vrot.slane %v1514, 4
      %v1517 = vshll.u32 %v1434, 16
      %v1519 = vrot.slane %v1517, 5
      %v1520 = vsel %vm268, %v1515, %v1519
      %v1522 = vshrl.u32 %v1427, 16
      %v1524 = vrot.slane %v1522, 4
      %v1525 = vshll.u32 %v1427, 16
      %v1527 = vrot.slane %v1525, 5
      %v1528 = vor.u32 %v1524, %v1527
      %v1529 = vrot.slane %v1528, 4
      %v1531 = vshll.u32 %v1435, 16
      %v1533 = vrot.slane %v1531, 5
      %v1534 = vsel %vm268, %v1529, %v1533
      %v1536 = vshrl.u32 %v1428, 16
      %v1538 = vrot.slane %v1536, 4
      %v1539 = vshll.u32 %v1428, 16
      %v1541 = vrot.slane %v1539, 5
      %v1542 = vor.u32 %v1538, %v1541
      %v1543 = vrot.slane %v1542, 4
      %v1545 = vshll.u32 %v1436, 16
      %v1547 = vrot.slane %v1545, 5
      %v1548 = vsel %vm268, %v1543, %v1547
      %v1549 = vld [vmem:[%s1420] sm:$0xe]
      %v1550 = vld [vmem:[%s1420 + $0x8] sm:$0xe]
      %v1551 = vld [vmem:[%s1420 + $0x10] sm:$0xe]
      %v1552 = vld [vmem:[%s1420 + $0x18] sm:$0xe]
      %v1553 = vld [vmem:[%s1420 + $0x20] sm:$0xe]
      %v1554 = vld [vmem:[%s1420 + $0x28] sm:$0xe]
      %v1555 = vld [vmem:[%s1420 + $0x30] sm:$0xe]
      %v1556 = vld [vmem:[%s1420 + $0x38] sm:$0xe]
      %v1573 = vrot.slane %v1549, 5
      %v1574 = vrot.slane %v1573, 4
      %v1575 = vrot.slane %v1429, 5
      %v1576 = vsel %vm407, %v1574, %v1575
      %v1577 = vrot.slane %v1550, 5
      %v1578 = vrot.slane %v1577, 4
      %v1579 = vrot.slane %v1430, 5
      %v1580 = vsel %vm407, %v1578, %v1579
      %v1581 = vrot.slane %v1551, 5
      %v1582 = vrot.slane %v1581, 4
      %v1583 = vrot.slane %v1431, 5
      %v1584 = vsel %vm407, %v1582, %v1583
      %v1585 = vrot.slane %v1552, 5
      %v1586 = vrot.slane %v1585, 4
      %v1587 = vrot.slane %v1432, 5
      %v1588 = vsel %vm407, %v1586, %v1587
      %v1589 = vrot.slane %v1553, 5
      %v1590 = vrot.slane %v1589, 4
      %v1591 = vrot.slane %v1433, 5
      %v1592 = vsel %vm407, %v1590, %v1591
      %v1593 = vrot.slane %v1554, 5
      %v1594 = vrot.slane %v1593, 4
      %v1595 = vrot.slane %v1434, 5
      %v1596 = vsel %vm407, %v1594, %v1595
      %v1597 = vrot.slane %v1555, 5
      %v1598 = vrot.slane %v1597, 4
      %v1599 = vrot.slane %v1435, 5
      %v1600 = vsel %vm407, %v1598, %v1599
      %v1601 = vrot.slane %v1556, 5
      %v1602 = vrot.slane %v1601, 4
      %v1603 = vrot.slane %v1436, 5
      %v1604 = vsel %vm407, %v1602, %v1603
      %v1613 = vunpack.c.l.b16 %v1421
      %v1614 = vunpack.c.l.b16 %v1422
      %v1615 = vunpack.c.l.b16 %v1423
      %v1616 = vunpack.c.l.b16 %v1424
      %v1617 = vunpack.c.l.b16 %v1425
      %v1618 = vunpack.c.l.b16 %v1426
      %v1619 = vunpack.c.l.b16 %v1427
      %v1620 = vunpack.c.l.b16 %v1428
      %v1621 = vpack.c.b16 %v1614, %v1613
      %v1622 = vpack.c.b16 %v1616, %v1615
      %v1623 = vpack.c.b16 %v1618, %v1617
      %v1624 = vpack.c.b16 %v1620, %v1619
      %v1629 = vunpack.c.l.b16 %v1450
      %v1630 = vunpack.c.l.b16 %v1464
      %v1631 = vunpack.c.l.b16 %v1478
      %v1632 = vunpack.c.l.b16 %v1492
      %v1633 = vunpack.c.l.b16 %v1506
      %v1634 = vunpack.c.l.b16 %v1520
      %v1635 = vunpack.c.l.b16 %v1534
      %v1636 = vunpack.c.l.b16 %v1548
      %v1637 = vpack.c.b16 %v1630, %v1629
      %v1638 = vpack.c.b16 %v1632, %v1631
      %v1639 = vpack.c.b16 %v1634, %v1633
      %v1640 = vpack.c.b16 %v1636, %v1635
      %v1645 = vunpack.c.l.b16 %v1576
      %v1646 = vunpack.c.l.b16 %v1580
      %v1647 = vunpack.c.l.b16 %v1584
      %v1648 = vunpack.c.l.b16 %v1588
      %v1649 = vunpack.c.l.b16 %v1592
      %v1650 = vunpack.c.l.b16 %v1596
      %v1651 = vunpack.c.l.b16 %v1600
      %v1652 = vunpack.c.l.b16 %v1604
      %v1653 = vpack.c.b16 %v1646, %v1645
      %v1654 = vpack.c.b16 %v1648, %v1647
      %v1655 = vpack.c.b16 %v1650, %v1649
      %v1656 = vpack.c.b16 %v1652, %v1651
      %s1661 = scalar_lea.vmem %s224, 384
      %v1662 = vld [vmem:[%s1661] sm:$0xf]
      %v1663 = vld [vmem:[%s1661 + $0x4] sm:$0xf]
      %v1664 = vld [vmem:[%s1661 + $0x8] sm:$0xf]
      %v1665 = vld [vmem:[%s1661 + $0xc] sm:$0xf]
      %v1666 = vld [vmem:[%s1661 + $0x10] sm:$0xf]
      %v1667 = vld [vmem:[%s1661 + $0x14] sm:$0xf]
      %v1668 = vld [vmem:[%s1661 + $0x18] sm:$0xf]
      %v1669 = vld [vmem:[%s1661 + $0x1c] sm:$0xf]
      %v1670 = vld [vmem:[%s1661 + $0x20] sm:$0xf]
      %v1671 = vld [vmem:[%s1661 + $0x24] sm:$0xf]
      %v1672 = vld [vmem:[%s1661 + $0x28] sm:$0xf]
      %v1673 = vld [vmem:[%s1661 + $0x2c] sm:$0xf]
      %v1674 = vld [vmem:[%s1661 + $0x30] sm:$0xf]
      %v1675 = vld [vmem:[%s1661 + $0x34] sm:$0xf]
      %v1676 = vld [vmem:[%s1661 + $0x38] sm:$0xf]
      %v1677 = vld [vmem:[%s1661 + $0x3c] sm:$0xf]
      %v1678 = vld [vmem:[%s1661 + $0x40] sm:$0xf]
      %v1679 = vld [vmem:[%s1661 + $0x44] sm:$0xf]
      %v1680 = vld [vmem:[%s1661 + $0x48] sm:$0xf]
      %v1681 = vld [vmem:[%s1661 + $0x4c] sm:$0xf]
      %v1682 = vld [vmem:[%s1661 + $0x50] sm:$0xf]
      %v1683 = vld [vmem:[%s1661 + $0x54] sm:$0xf]
      %v1684 = vld [vmem:[%s1661 + $0x58] sm:$0xf]
      %v1685 = vld [vmem:[%s1661 + $0x5c] sm:$0xf]
      %v1686 = vld [vmem:[%s1661 + $0x60] sm:$0xf]
      %v1687 = vld [vmem:[%s1661 + $0x64] sm:$0xf]
      %v1688 = vld [vmem:[%s1661 + $0x68] sm:$0xf]
      %v1689 = vld [vmem:[%s1661 + $0x6c] sm:$0xf]
      %v1690 = vld [vmem:[%s1661 + $0x70] sm:$0xf]
      %v1691 = vld [vmem:[%s1661 + $0x74] sm:$0xf]
      %v1692 = vld [vmem:[%s1661 + $0x78] sm:$0xf]
      %v1693 = vld [vmem:[%s1661 + $0x7c] sm:$0xf]
      %v1694 = vld [vmem:[%s1661 + $0x80] sm:$0xf]
      %v1695 = vld [vmem:[%s1661 + $0x84] sm:$0xf]
      %v1696 = vld [vmem:[%s1661 + $0x88] sm:$0xf]
      %v1697 = vld [vmem:[%s1661 + $0x8c] sm:$0xf]
      %v1698 = vld [vmem:[%s1661 + $0x90] sm:$0xf]
      %v1699 = vld [vmem:[%s1661 + $0x94] sm:$0xf]
      %v1700 = vld [vmem:[%s1661 + $0x98] sm:$0xf]
      %v1701 = vld [vmem:[%s1661 + $0x9c] sm:$0xf]
      %v1702 = vld [vmem:[%s1661 + $0xa0] sm:$0xf]
      %v1703 = vld [vmem:[%s1661 + $0xa4] sm:$0xf]
      %v1704 = vld [vmem:[%s1661 + $0xa8] sm:$0xf]
      %v1705 = vld [vmem:[%s1661 + $0xac] sm:$0xf]
      %v1706 = vld [vmem:[%s1661 + $0xb0] sm:$0xf]
      %v1707 = vld [vmem:[%s1661 + $0xb4] sm:$0xf]
      %v1708 = vld [vmem:[%s1661 + $0xb8] sm:$0xf]
      %v1709 = vld [vmem:[%s1661 + $0xbc] sm:$0xf]
      %v1758 = vunpack.c.l.b16 %v1662
      %v1759 = vunpack.c.l.b16 %v1663
      %v1760 = vunpack.c.l.b16 %v1664
      %v1761 = vunpack.c.l.b16 %v1665
      %v1762 = vunpack.c.l.b16 %v1666
      %v1763 = vunpack.c.l.b16 %v1667
      %v1764 = vunpack.c.l.b16 %v1668
      %v1765 = vunpack.c.l.b16 %v1669
      %v1766 = vunpack.c.l.b16 %v1670
      %v1767 = vunpack.c.l.b16 %v1671
      %v1768 = vunpack.c.l.b16 %v1672
      %v1769 = vunpack.c.l.b16 %v1673
      %v1770 = vunpack.c.l.b16 %v1674
      %v1771 = vunpack.c.l.b16 %v1675
      %v1772 = vunpack.c.l.b16 %v1676
      %v1773 = vunpack.c.l.b16 %v1677
      %v1774 = vunpack.c.l.b16 %v1678
      %v1775 = vunpack.c.l.b16 %v1679
      %v1776 = vunpack.c.l.b16 %v1680
      %v1777 = vunpack.c.l.b16 %v1681
      %v1778 = vunpack.c.l.b16 %v1682
      %v1779 = vunpack.c.l.b16 %v1683
      %v1780 = vunpack.c.l.b16 %v1684
      %v1781 = vunpack.c.l.b16 %v1685
      %v1782 = vunpack.c.l.b16 %v1686
      %v1783 = vunpack.c.l.b16 %v1687
      %v1784 = vunpack.c.l.b16 %v1688
      %v1785 = vunpack.c.l.b16 %v1689
      %v1786 = vunpack.c.l.b16 %v1690
      %v1787 = vunpack.c.l.b16 %v1691
      %v1788 = vunpack.c.l.b16 %v1692
      %v1789 = vunpack.c.l.b16 %v1693
      %v1790 = vunpack.c.l.b16 %v1694
      %v1791 = vunpack.c.l.b16 %v1695
      %v1792 = vunpack.c.l.b16 %v1696
      %v1793 = vunpack.c.l.b16 %v1697
      %v1794 = vunpack.c.l.b16 %v1698
      %v1795 = vunpack.c.l.b16 %v1699
      %v1796 = vunpack.c.l.b16 %v1700
      %v1797 = vunpack.c.l.b16 %v1701
      %v1798 = vunpack.c.l.b16 %v1702
      %v1799 = vunpack.c.l.b16 %v1703
      %v1800 = vunpack.c.l.b16 %v1704
      %v1801 = vunpack.c.l.b16 %v1705
      %v1802 = vunpack.c.l.b16 %v1706
      %v1803 = vunpack.c.l.b16 %v1707
      %v1804 = vunpack.c.l.b16 %v1708
      %v1805 = vunpack.c.l.b16 %v1709
      %v1806 = vpack.c.b16 %v1759, %v1758
      %v1807 = vpack.c.b16 %v1761, %v1760
      %v1808 = vpack.c.b16 %v1763, %v1762
      %v1809 = vpack.c.b16 %v1765, %v1764
      %v1810 = vpack.c.b16 %v1767, %v1766
      %v1811 = vpack.c.b16 %v1769, %v1768
      %v1812 = vpack.c.b16 %v1771, %v1770
      %v1813 = vpack.c.b16 %v1773, %v1772
      %v1814 = vpack.c.b16 %v1775, %v1774
      %v1815 = vpack.c.b16 %v1777, %v1776
      %v1816 = vpack.c.b16 %v1779, %v1778
      %v1817 = vpack.c.b16 %v1781, %v1780
      %v1818 = vpack.c.b16 %v1783, %v1782
      %v1819 = vpack.c.b16 %v1785, %v1784
      %v1820 = vpack.c.b16 %v1787, %v1786
      %v1821 = vpack.c.b16 %v1789, %v1788
      %v1822 = vpack.c.b16 %v1791, %v1790
      %v1823 = vpack.c.b16 %v1793, %v1792
      %v1824 = vpack.c.b16 %v1795, %v1794
      %v1825 = vpack.c.b16 %v1797, %v1796
      %v1826 = vpack.c.b16 %v1799, %v1798
      %v1827 = vpack.c.b16 %v1801, %v1800
      %v1828 = vpack.c.b16 %v1803, %v1802
      %v1829 = vpack.c.b16 %v1805, %v1804
      %1854 = vmatprep.subr.bf16.mxu0 0
      %1855 = vmatpush1.bf16.msra.mxu0 %v1806
      %1856 = vmatprep.subr.bf16.mxu0 0
      %1857 = vmatpush1.bf16.msra.mxu0 %v1807
      %1858 = vmatprep.subr.bf16.mxu0 0
      %1859 = vmatpush1.bf16.msra.mxu0 %v1808
      %1860 = vmatprep.subr.bf16.mxu0 0
      %1861 = vmatpush1.bf16.msra.mxu0 %v1809
      %1862 = vmatprep.subr.bf16.mxu0 0
      %1863 = vmatpush1.bf16.msra.mxu0 %v1810
      %1864 = vmatprep.subr.bf16.mxu0 0
      %1865 = vmatpush1.bf16.msra.mxu0 %v1811
      %1866 = vmatprep.subr.bf16.mxu0 0
      %1867 = vmatpush1.bf16.msra.mxu0 %v1812
      %1868 = vmatprep.subr.bf16.mxu0 0
      %1869 = vmatpush1.bf16.msra.mxu0 %v1813
      %1870 = vmatprep.subr.bf16.mxu0 0
      %1871 = vmatpush1.bf16.msra.mxu0 %v1814
      %1872 = vmatprep.subr.bf16.mxu0 0
      %1873 = vmatpush1.bf16.msra.mxu0 %v1815
      %1874 = vmatprep.subr.bf16.mxu0 0
      %1875 = vmatpush1.bf16.msra.mxu0 %v1816
      %1876 = vmatprep.subr.bf16.mxu0 0
      %1877 = vmatpush1.bf16.msra.mxu0 %v1817
      %1878 = vmatprep.subr.bf16.mxu0 0
      %1879 = vmatpush1.bf16.msra.mxu0 %v1818
      %1880 = vmatprep.subr.bf16.mxu0 0
      %1881 = vmatpush1.bf16.msra.mxu0 %v1819
      %1882 = vmatprep.subr.bf16.mxu0 0
      %1883 = vmatpush1.bf16.msra.mxu0 %v1820
      %1884 = vmatprep.subr.bf16.mxu0 0
      %1885 = vmatpush1.bf16.msra.mxu0 %v1821
      %1886 = vmatprep.mubr.bf16.mxu0 %v1637
      %1887 = vmatmul.mubr.bf16.gmra.mrb[0].mxu0 %v1621
      %v1888 = vpop.f32.mrb[0].mxu0
      %v1889 = vadd.f32 0.0, %v1888
      %v1890 = vpop.f32.mrb[0].mxu0
      %v1891 = vpop.f32.mrb[0].mxu0
      %v1892 = vadd.f32 0.0, %v1891
      %v1893 = vpop.f32.mrb[0].mxu0
      %1894 = vmatprep.mubr.bf16.mxu0 %v1638
      %1895 = vmatmul.mubr.bf16.gmra.mrb[0].mxu0 %v1622
      %v1896 = vpop.f32.mrb[0].mxu0
      %v1897 = vadd.f32 0.0, %v1896
      %v1898 = vpop.f32.mrb[0].mxu0
      %v1899 = vpop.f32.mrb[0].mxu0
      %v1900 = vadd.f32 0.0, %v1899
      %v1901 = vpop.f32.mrb[0].mxu0
      %1902 = vmatprep.mubr.bf16.mxu0 %v1639
      %1903 = vmatmul.mubr.bf16.gmra.mrb[0].mxu0 %v1623
      %v1904 = vpop.f32.mrb[0].mxu0
      %v1905 = vadd.f32 0.0, %v1904
      %v1906 = vpop.f32.mrb[0].mxu0
      %v1907 = vpop.f32.mrb[0].mxu0
      %v1908 = vadd.f32 0.0, %v1907
      %v1909 = vpop.f32.mrb[0].mxu0
      %1910 = vmatprep.mubr.bf16.mxu0 %v1640
      %1911 = vmatmul.mubr.bf16.gmra.mrb[0].mxu0 %v1624
      %v1912 = vpop.f32.mrb[0].mxu0
      %v1913 = vadd.f32 0.0, %v1912
      %v1914 = vpop.f32.mrb[0].mxu0
      %v1915 = vpop.f32.mrb[0].mxu0
      %v1916 = vadd.f32 0.0, %v1915
      %v1917 = vpop.f32.mrb[0].mxu0
      %1918 = vdwg.mxu0
      %1919 = vmatprep.subr.bf16.mxu0 0
      %1920 = vmatpush1.bf16.msra.mxu0 %v1822
      %1921 = vmatprep.subr.bf16.mxu0 0
      %1922 = vmatpush1.bf16.msra.mxu0 %v1823
      %1923 = vmatprep.subr.bf16.mxu0 0
      %1924 = vmatpush1.bf16.msra.mxu0 %v1824
      %1925 = vmatprep.subr.bf16.mxu0 0
      %1926 = vmatpush1.bf16.msra.mxu0 %v1825
      %1927 = vmatprep.subr.bf16.mxu0 0
      %1928 = vmatpush1.bf16.msra.mxu0 %v1826
      %1929 = vmatprep.subr.bf16.mxu0 0
      %1930 = vmatpush1.bf16.msra.mxu0 %v1827
      %1931 = vmatprep.subr.bf16.mxu0 0
      %1932 = vmatpush1.bf16.msra.mxu0 %v1828
      %1933 = vmatprep.subr.bf16.mxu0 0
      %1934 = vmatpush1.bf16.msra.mxu0 %v1829
      %1935 = vmatprep.subr.bf16.mxu0 0
      %1936 = vmatpush1.bf16.msra.mxu0 0
      %1937 = vmatprep.subr.bf16.mxu0 0
      %1938 = vmatpush1.bf16.msra.mxu0 0
      %1939 = vmatprep.subr.bf16.mxu0 0
      %1940 = vmatpush1.bf16.msra.mxu0 0
      %1941 = vmatprep.subr.bf16.mxu0 0
      %1942 = vmatpush1.bf16.msra.mxu0 0
      %1943 = vmatprep.subr.bf16.mxu0 0
      %1944 = vmatpush1.bf16.msra.mxu0 0
      %1945 = vmatprep.subr.bf16.mxu0 0
      %1946 = vmatpush1.bf16.msra.mxu0 0
      %1947 = vmatprep.subr.bf16.mxu0 0
      %1948 = vmatpush1.bf16.msra.mxu0 0
      %1949 = vmatprep.subr.bf16.mxu0 0
      %1950 = vmatpush1.bf16.msra.mxu0 0
      %1951 = vmatprep.mubr.bf16.mxu0 0
      %1952 = vmatmul.mubr.bf16.gmra.mrb[0].mxu0 %v1653
      %v1953 = vpop.f32.mrb[0].mxu0
      %v1954 = vadd.f32 %v1889, %v1953
      %v1955 = vpop.f32.mrb[0].mxu0
      %v1956 = vpop.f32.mrb[0].mxu0
      %v1957 = vadd.f32 %v1892, %v1956
      %v1958 = vpop.f32.mrb[0].mxu0
      %1959 = vmatprep.mubr.bf16.mxu0 0
      %1960 = vmatmul.mubr.bf16.gmra.mrb[0].mxu0 %v1654
      %v1961 = vpop.f32.mrb[0].mxu0
      %v1962 = vadd.f32 %v1897, %v1961
      %v1963 = vpop.f32.mrb[0].mxu0
      %v1964 = vpop.f32.mrb[0].mxu0
      %v1965 = vadd.f32 %v1900, %v1964
      %v1966 = vpop.f32.mrb[0].mxu0
      %1967 = vmatprep.mubr.bf16.mxu0 0
      %1968 = vmatmul.mubr.bf16.gmra.mrb[0].mxu0 %v1655
      %v1969 = vpop.f32.mrb[0].mxu0
      %v1970 = vadd.f32 %v1905, %v1969
      %v1971 = vpop.f32.mrb[0].mxu0
      %v1972 = vpop.f32.mrb[0].mxu0
      %v1973 = vadd.f32 %v1908, %v1972
      %v1974 = vpop.f32.mrb[0].mxu0
      %1975 = vmatprep.mubr.bf16.mxu0 0
      %1976 = vmatmul.mubr.bf16.gmra.mrb[0].mxu0 %v1656
      %v1977 = vpop.f32.mrb[0].mxu0
      %v1978 = vadd.f32 %v1913, %v1977
      %v1979 = vpop.f32.mrb[0].mxu0
      %v1980 = vpop.f32.mrb[0].mxu0
      %v1981 = vadd.f32 %v1916, %v1980
      %v1982 = vpop.f32.mrb[0].mxu0
      %1983 = vdwg.mxu0
      %v1984 = vld [vmem:[#allocation2] sm:$0xff]
      %v1985 = vld [vmem:[#allocation2 + $0x8] sm:$0xff]
      %v1986 = vld [vmem:[#allocation2 + $0x10] sm:$0xff]
      %v1987 = vld [vmem:[#allocation2 + $0x18] sm:$0xff]
      %v1988 = vld [vmem:[#allocation2 + $0x20] sm:$0xff]
      %v1989 = vld [vmem:[#allocation2 + $0x28] sm:$0xff]
      %v1990 = vld [vmem:[#allocation2 + $0x30] sm:$0xff]
      %v1991 = vld [vmem:[#allocation2 + $0x38] sm:$0xff]
      %v1992 = vadd.f32 %v1984, %v1954
      %v1993 = vadd.f32 %v1985, %v1957
      %v1994 = vadd.f32 %v1986, %v1962
      %v1995 = vadd.f32 %v1987, %v1965
      %v1996 = vadd.f32 %v1988, %v1970
      %v1997 = vadd.f32 %v1989, %v1973
      %v1998 = vadd.f32 %v1990, %v1978
      %v1999 = vadd.f32 %v1991, %v1981
      %2000 = vst [vmem:[#allocation2] sm:$0xff] %v1992
      %2001 = vst [vmem:[#allocation2 + $0x8] sm:$0xff] %v1993
      %2002 = vst [vmem:[#allocation2 + $0x10] sm:$0xff] %v1994
      %2003 = vst [vmem:[#allocation2 + $0x18] sm:$0xff] %v1995
      %2004 = vst [vmem:[#allocation2 + $0x20] sm:$0xff] %v1996
      %2005 = vst [vmem:[#allocation2 + $0x28] sm:$0xff] %v1997
      %2006 = vst [vmem:[#allocation2 + $0x30] sm:$0xff] %v1998
      %2007 = vst [vmem:[#allocation2 + $0x38] sm:$0xff] %v1999
      %v2008 = vld [vmem:[#allocation2] sm:$0xff]
      %v2009 = vld [vmem:[#allocation2 + $0x8] sm:$0xff]
      %v2010 = vld [vmem:[#allocation2 + $0x10] sm:$0xff]
      %v2011 = vld [vmem:[#allocation2 + $0x18] sm:$0xff]
      %v2012 = vld [vmem:[#allocation2 + $0x20] sm:$0xff]
      %v2013 = vld [vmem:[#allocation2 + $0x28] sm:$0xff]
      %v2014 = vld [vmem:[#allocation2 + $0x30] sm:$0xff]
      %v2015 = vld [vmem:[#allocation2 + $0x38] sm:$0xff]
      %v2016 = vpack.c.bf16 %v2008, %v2008
      %v2017 = vpack.c.bf16 %v2009, %v2009
      %v2018 = vpack.c.bf16 %v2010, %v2010
      %v2019 = vpack.c.bf16 %v2011, %v2011
      %v2020 = vpack.c.bf16 %v2012, %v2012
      %v2021 = vpack.c.bf16 %v2013, %v2013
      %v2022 = vpack.c.bf16 %v2014, %v2014
      %v2023 = vpack.c.bf16 %v2015, %v2015
      %2024 = vst [vmem:[%s236] sm:$0xf] %v2016
      %2025 = vst [vmem:[%s236 + $0x4] sm:$0xf] %v2017
      %2026 = vst [vmem:[%s236 + $0x8] sm:$0xf] %v2018
      %2027 = vst [vmem:[%s236 + $0xc] sm:$0xf] %v2019
      %2028 = vst [vmem:[%s236 + $0x10] sm:$0xf] %v2020
      %2029 = vst [vmem:[%s236 + $0x14] sm:$0xf] %v2021
      %2030 = vst [vmem:[%s236 + $0x18] sm:$0xf] %v2022
      %2031 = vst [vmem:[%s236 + $0x1c] sm:$0xf] %v2023
      %v2032 = vadd.f32 %v2008, %v2009
      %v2033 = vadd.f32 %v2032, %v2010
      %v2034 = vadd.f32 %v2033, %v2011
      %v2035 = vadd.f32 %v2034, %v2012
      %v2036 = vadd.f32 %v2035, %v2013
      %v2037 = vadd.f32 %v2036, %v2014
      %v2038 = vadd.f32 %v2037, %v2015
      %v2039 = vrot.slane %v2038, 4
      %v2040 = vadd.f32 %v2038, %v2039
      %v2041 = vrot.slane %v2040, 2
      %v2042 = vadd.f32 %v2040, %v2041
      %v2043 = vrot.slane %v2042, 1
      %v2044 = vadd.f32 %v2042, %v2043
      %v2045 = vmul.f32 %v2008, %v2008
      %v2046 = vmul.f32 %v2009, %v2009
      %v2047 = vmul.f32 %v2010, %v2010
      %v2048 = vmul.f32 %v2011, %v2011
      %v2049 = vmul.f32 %v2012, %v2012
      %v2050 = vmul.f32 %v2013, %v2013
      %v2051 = vmul.f32 %v2014, %v2014
      %v2052 = vmul.f32 %v2015, %v2015
      %v2053 = vadd.f32 %v2045, %v2046
      %v2054 = vadd.f32 %v2053, %v2047
      %v2055 = vadd.f32 %v2054, %v2048
      %v2056 = vadd.f32 %v2055, %v2049
      %v2057 = vadd.f32 %v2056, %v2050
      %v2058 = vadd.f32 %v2057, %v2051
      %v2059 = vadd.f32 %v2058, %v2052
      %v2060 = vrot.slane %v2059, 4
      %v2061 = vadd.f32 %v2059, %v2060
      %v2062 = vrot.slane %v2061, 2
      %v2063 = vadd.f32 %v2061, %v2062
      %v2064 = vrot.slane %v2063, 1
      %v2065 = vadd.f32 %v2063, %v2064
      %vm2066 = vcmask 1040384
      %v2067 = vsel %vm2066, %v2044, %v2065
      %p2068 = scmp.eq.s32.totalorder %s22, 0
      // Predicated region
      $region29: #{_lambda_.11} parent=27 // pred_check
        %p2069 = pneg %p2068
      $region30: #{_lambda_.11} parent=27 // pred_check_branch
        %2071 = sbr.rel (%p2069) target = $region32
      $region31: #{_lambda_.11} parent=27 // pred_region
        %2072 = vst [vmem:[%s244] sm:$0x3] %v2067
      $region32: #{_lambda_.11} parent=27 // pred_fallthru
        _
      %p2073 = scmp.ne.s32.totalorder %s22, 0
      // Predicated region
      $region33: #{_lambda_.11} parent=27 // pred_check
        %p2074 = pneg %p2073
      $region34: #{_lambda_.11} parent=27 // pred_check_branch
        %2076 = sbr.rel (%p2074) target = $region36
      $region35: #{_lambda_.11} parent=27 // pred_region
        %v2077 = vld [vmem:[%s244] sm:$0x3]
        %v2078 = vadd.f32 %v2077, %v2067
        %2079 = vst [vmem:[%s244] sm:$0x3] %v2078
      $region36: #{_lambda_.11} parent=27 // pred_fallthru
        _
      %s2080 = smul.u32 8, %s22
      %p2081 = scmp.lt.s32.totalorder %s20, 1
      %s2082 = scalar_select %p2081, %s20, 1
      %p2083 = scmp.lt.s32.totalorder %s2080, 7
      %s2084 = scalar_select %p2083, %s2080, 7
      %p2085 = scmp.lt.s32.totalorder %s21, 0
      %s2086 = scalar_select %p2085, %s21, 0
      %s2087 = sadd.s32 %s2086, %s2084
      %s2088 = smul.addr %s2082, 8
      %s2089 = sadd.s32 %s2087, %s2088
      %s2090 = smul.addr %s2089, 4
      %s2091 = scalar_lea.vmem %s2, %s2090
      %p2092 = scmp.lt.s32.totalorder %s20, 1
      %s2093 = scalar_select %p2092, %s20, 1
      %p2094 = scmp.lt.s32.totalorder %s21, 0
      %s2095 = scalar_select %p2094, %s21, 0
      %s2096 = sadd.s32 %s2095, %s2093
      %s2097 = smul.addr %s2096, 2
      %s2098 = scalar_lea.vmem %s3, %s2097
      // Predicated region
      $region37: #{_lambda_.11} parent=27 // pred_check
        %p2099 = pneg %p108
      $region38: #{_lambda_.11} parent=27 // pred_check_branch
        %2101 = sbr.rel (%p2099) target = $region40
      $region39: #{_lambda_.11} parent=27 // pred_region
        %s2102 = smul.u32 8, %s22
      $region40: #{_lambda_.11} parent=27 // pred_fallthru
        _
      // Predicated region
      $region41: #{_lambda_.11} parent=27 // pred_check
        %p2103 = pneg %p136
      $region42: #{_lambda_.11} parent=27 // pred_check_branch
        %2105 = sbr.rel (%p2103) target = $region44
      $region43: #{_lambda_.11} parent=27 // pred_region
        _
      $region44: #{_lambda_.11} parent=27 // pred_fallthru
        _
    $region28: #{_lambda_.11} parent=5 // pred_fallthru
      _
    %p2106 = scmp.le.s32.totalorder 2, %s10
    // Predicated region
    $region45: #{_lambda_.11} parent=5 // pred_check
      %p2107 = pneg %p2106
    $region46: #{_lambda_.11} parent=5 // pred_check_branch
      %2109 = sbr.rel (%p2107) target = $region48
    $region47: #{_lambda_.11} parent=5 // pred_region
      %s2110 = ssub.s32 %s10, 2
      // Predicated region
      $region49: #{_lambda_.11} parent=47 // pred_check
        %p2111 = pneg %p114
      $region50: #{_lambda_.11} parent=47 // pred_check_branch
        %2113 = sbr.rel (%p2111) target = $region52
      $region51: #{_lambda_.11} parent=47 // pred_region
        %s2114 = smul.u32 8, %s25
        %p2115 = scmp.lt.s32.totalorder %s23, 1
        %s2116 = scalar_select %p2115, %s23, 1
        %p2117 = scmp.lt.s32.totalorder %s2114, 7
        %s2118 = scalar_select %p2117, %s2114, 7
        %p2119 = scmp.lt.s32.totalorder %s24, 0
        %s2120 = scalar_select %p2119, %s24, 0
        %s2121 = sadd.s32 %s2120, %s2118
        %s2122 = smul.addr %s2116, 8
        %s2123 = sadd.s32 %s2121, %s2122
        %s2124 = smul.addr %s2123, 4
        %s2125 = scalar_lea.vmem %s2, %s2124
      $region52: #{_lambda_.11} parent=47 // pred_fallthru
        _
      // Predicated region
      $region53: #{_lambda_.11} parent=47 // pred_check
        %p2126 = pneg %p142
      $region54: #{_lambda_.11} parent=47 // pred_check_branch
        %2128 = sbr.rel (%p2126) target = $region56
      $region55: #{_lambda_.11} parent=47 // pred_region
        %p2129 = scmp.lt.s32.totalorder %s23, 1
        %s2130 = scalar_select %p2129, %s23, 1
        %p2131 = scmp.lt.s32.totalorder %s24, 0
        %s2132 = scalar_select %p2131, %s24, 0
        %s2133 = sadd.s32 %s2132, %s2130
        %s2134 = smul.addr %s2133, 2
        %s2135 = scalar_lea.vmem %s3, %s2134
      $region56: #{_lambda_.11} parent=47 // pred_fallthru
        _
    $region48: #{_lambda_.11} parent=5 // pred_fallthru
      _
  $region6: #{_lambda_.11} parent=0 // loop_footer
    %s14 = sadd.s32 1, %s10
  $region7: #{_lambda_.11} parent=0 // loop_footer_branch
    %9 = sbr.rel target = $region3
  $region8: #{_lambda_.11} parent=0 // loop_exit
    _

</llo_original>
